<compile_context>
chip_gen: v7x
topology: tpu7x:2x2x1
jax: 0.10.0
libtpu: 0.0.40
codegen_flags: <defaults>
</compile_context>

<pallas_src>
import functools

import jax
import jax.numpy as jnp
from jax.experimental import pallas as pl
from jax.experimental.pallas import tpu as pltpu

# Attention() defaults: AxialAttention never forwards dim_head, so dim_head=64 always.
DIM_HEAD = 64
LN_EPS = 1e-5  # nn.LayerNorm default


# ----------------------------------------------------------------------------------
# helpers
# ----------------------------------------------------------------------------------
def _layer_norm(x, gamma, beta):
    mu = jnp.mean(x, axis=-1, keepdims=True)
    var = jnp.mean(jnp.square(x - mu), axis=-1, keepdims=True)
    return (x - mu) * jax.lax.rsqrt(var + LN_EPS) * gamma + beta


def _const_spec(shape):
    """Whole-array block that stays resident across the grid.

    (Weights never change block index; single-buffering them via pl.Buffered(1) is a
    possible further VMEM saving on v7x -- left to Mosaic's default here.)
    """
    zeros = (0,) * len(shape)
    return pl.BlockSpec(shape, lambda *_: zeros)


@functools.lru_cache(maxsize=None)
def _vmem_limit_bytes():
    # Half the physical VMEM, clamped to [32 MiB, 96 MiB]:
    #   v5e/v6e (128 MiB) -> 64 MiB, v7x (64 MiB) -> 32 MiB.
    try:
        cap = int(pltpu.get_tpu_info().vmem_capacity_bytes)
    except Exception:  # pragma: no cover - conservative fallback
        cap = 128 * 1024 * 1024
    return int(min(96 * 1024 * 1024, max(32 * 1024 * 1024, cap // 2)))


def _compiler_params(n_axes):
    return pltpu.CompilerParams(
        dimension_semantics=("parallel",) * n_axes,
        vmem_limit_bytes=_vmem_limit_bytes())


def _pick_bb(fold, n, max_rows=1024):
    """Folded elements per row-kernel step (rows per step = bb * n).

    bb divides fold; block sublane-aligned (bb*n % 8 == 0) unless it covers everything;
    prefer >=2 grid steps (pipelining / dual-TC) and an even step count (v7x balance).
    """
    cands = [bb for bb in range(1, fold + 1)
             if fold % bb == 0 and bb * n <= max_rows
             and ((bb * n) % 8 == 0 or bb == fold)]
    if not cands:
        return fold
    multi = [bb for bb in cands if fold // bb >= 2]
    pool = multi if multi else cands
    even = [bb for bb in pool if (fold // bb) % 2 == 0]
    return max(even) if even else max(pool)


def _pick_bw(b, ww, hh, max_rows=1024):
    """w positions per column-kernel step.  bw % 8 == 0 keeps the in-kernel
    (hh,bw,d)<->(hh*bw,d) reshapes layout-free; prefer an even total step count."""
    cands = [bw for bw in range(1, ww + 1)
             if ww % bw == 0 and bw * hh <= max_rows
             and (bw % 8 == 0 or bw == ww)]
    if not cands:
        return ww
    def steps(bw):
        return b * (ww // bw)
    multi = [bw for bw in cands if steps(bw) >= 2]
    pool = multi if multi else cands
    even = [bw for bw in pool if steps(bw) % 2 == 0]
    return max(even) if even else max(pool)


def _pick_rows(rows, max_rows=512):
    cands = [rt for rt in range(1, rows + 1)
             if rows % rt == 0 and rt <= max_rows and (rt % 8 == 0 or rt == rows)]
    if not cands:
        return rows
    multi = [rt for rt in cands if rows // rt >= 2]
    pool = multi if multi else cands
    even = [rt for rt in pool if (rows // rt) % 2 == 0]
    return max(even) if even else max(pool)


# ----------------------------------------------------------------------------------
# row (tied) axial attention kernel: (M, dim) slab of bb folded elements, M = bb * n
# ----------------------------------------------------------------------------------
def _row_attn_kernel(n, inner, x_ref, lno_g, lno_b, wvg, bvg, wo, bo,
                     lni_g, lni_b, o_ref):
    x = x_ref[...].astype(jnp.float32)                      # (M, d)
    m = x.shape[0]
    bb = m // n
    xn = _layer_norm(x, lno_g[0], lno_b[0])                 # AxialAttention pre-norm

    # fused [V | gating] projection; bf16 operands, f32 accumulation
    f = jnp.dot(xn.astype(jnp.bfloat16), wvg[...],
                preferred_element_type=jnp.float32) + bvg[0]            # (M, 2*inner)
    v, g = f[:, :inner], f[:, inner:]

    # tied=True: uniform softmax => context = per-element mean of V (segment mean)
    ctx = jnp.broadcast_to(
        jnp.mean(v.reshape(bb, n, inner), axis=1, keepdims=True),
        (bb, n, inner)).reshape(m, inner)

    out = ctx * jax.nn.sigmoid(g)
    out = jnp.dot(out.astype(jnp.bfloat16), wo[...],
                  preferred_element_type=jnp.float32) + bo[0]
    out = _layer_norm(xn + out, lni_g[0], lni_b[0])         # Attention: xn + out, LN
    o_ref[...] = (x + out).astype(o_ref.dtype)              # outer residual (raw x)


def _row_attention(x2d, n, bb, p, heads, dim_head):
    rows, d = x2d.shape
    inner = heads * dim_head
    m = bb * n
    grid = (rows // m,)

    # trace-time weight staging: fused [V|G] slab in bf16 (q/k are dead in tied mode)
    wvg = jnp.concatenate([p["wkv"][:, inner:], p["wg"]], axis=1).astype(jnp.bfloat16)
    bvg = jnp.concatenate([jnp.zeros((1, inner), jnp.float32), p["bg"]], axis=1)
    wo = p["wo"].astype(jnp.bfloat16)

    in_specs = [
        pl.BlockSpec((m, d), lambda i: (i, 0)),
        _const_spec((1, d)), _const_spec((1, d)),                    # outer LN
        _const_spec((d, 2 * inner)), _const_spec((1, 2 * inner)),    # fused V|G
        _const_spec((inner, d)), _const_spec((1, d)),                # to_out
        _const_spec((1, d)), _const_spec((1, d)),                    # inner LN
    ]
    return pl.pallas_call(
        functools.partial(_row_attn_kernel, n, inner),
        out_shape=jax.ShapeDtypeStruct((rows, d), x2d.dtype),
        grid_spec=pltpu.PrefetchScalarGridSpec(
            num_scalar_prefetch=0, grid=grid,
            in_specs=in_specs,
            out_specs=pl.BlockSpec((m, d), lambda i: (i, 0))),
        compiler_params=_compiler_params(1),
    )(x2d, p["ln_outer_g"], p["ln_outer_b"], wvg, bvg, wo, p["bo"],
      p["ln_inner_g"], p["ln_inner_b"])


# ----------------------------------------------------------------------------------
# column (untied, multi-head) axial attention kernel: reads the 4-D (b,h,w,d)
# activation directly (no XLA transpose); attention over h, batched over a bw-wide
# slice of w per grid step.
# ----------------------------------------------------------------------------------
def _col_attn_kernel(heads, dim_head, x_ref, lno_g, lno_b, wf, bf, wo, bo,
                     lni_g, lni_b, o_ref):
    x = x_ref[0].astype(jnp.float32)                        # (hh, bw, d)
    hh, bw, d = x.shape
    inner = heads * dim_head
    scale = jnp.float32(dim_head ** -0.5)
    xn = _layer_norm(x, lno_g[0], lno_b[0])

    # fused [Q|K|V|G] projection on the layout-free (hh*bw, d) flat view (bw % 8 == 0)
    fused = jnp.dot(xn.reshape(hh * bw, d).astype(jnp.bfloat16), wf[...],
                    preferred_element_type=jnp.float32) + bf[0]       # (hh*bw, 4*inner)
    fused = fused.reshape(hh, bw, 4 * inner)

    per_head = []
    for h in range(heads):                                  # static unroll over heads
        qh = fused[:, :, h * dim_head:(h + 1) * dim_head]                       # Q_h
        kh = fused[:, :, inner + h * dim_head:inner + (h + 1) * dim_head]       # K_h
        vh = fused[:, :, 2 * inner + h * dim_head:2 * inner + (h + 1) * dim_head]
        gate = jax.nn.sigmoid(
            fused[:, :, 3 * inner + h * dim_head:3 * inner + (h + 1) * dim_head])

        planes = []
        for i in range(hh):     # per query position; only n = hh keys per element
            cols = [jnp.sum(qh[i] * kh[j], axis=-1, keepdims=True)    # (bw, 1)
                    for j in range(hh)]
            lg = jnp.concatenate(cols, axis=-1) * scale               # (bw, hh)
            lg = lg - jnp.max(lg, axis=-1, keepdims=True)
            e = jnp.exp(lg)
            attn = e * pl.reciprocal(jnp.sum(e, axis=-1, keepdims=True),
                                     approx=True)                     # (bw, hh)
            ctx = attn[:, 0:1] * vh[0]
            for j in range(1, hh):
                ctx = ctx + attn[:, j:j + 1] * vh[j]                  # (bw, dh)
            planes.append(ctx * gate[i])
        per_head.append(jnp.concatenate([c[None] for c in planes], axis=0))  # (hh,bw,dh)

    gated = jnp.concatenate(per_head, axis=-1)                        # (hh, bw, inner)
    out = jnp.dot(gated.reshape(hh * bw, inner).astype(jnp.bfloat16), wo[...],
                  preferred_element_type=jnp.float32) + bo[0]         # (hh*bw, d)
    out = out.reshape(hh, bw, d)
    out = _layer_norm(xn + out, lni_g[0], lni_b[0])                   # xn + out, LN
    o_ref[0] = (x + out).astype(o_ref.dtype)                          # outer residual


def _col_attention(x4, bw, p, heads, dim_head):
    b, hh, ww, d = x4.shape
    inner = heads * dim_head
    grid = (b, ww // bw)

    # trace-time fused [Q|K|V|G] weight slab (bf16) and bias (gating bias only)
    wf = jnp.concatenate(
        [p["wq"], p["wkv"][:, :inner], p["wkv"][:, inner:], p["wg"]],
        axis=1).astype(jnp.bfloat16)
    bf = jnp.concatenate([jnp.zeros((1, 3 * inner), jnp.float32), p["bg"]], axis=1)
    wo = p["wo"].astype(jnp.bfloat16)

    in_specs = [
        pl.BlockSpec((1, hh, bw, d), lambda bi, wi: (bi, 0, wi, 0)),
        _const_spec((1, d)), _const_spec((1, d)),                     # outer LN
        _const_spec((d, 4 * inner)), _const_spec((1, 4 * inner)),     # fused QKVG
        _const_spec((inner, d)), _const_spec((1, d)),                 # to_out
        _const_spec((1, d)), _const_spec((1, d)),                     # inner LN
    ]
    return pl.pallas_call(
        functools.partial(_col_attn_kernel, heads, dim_head),
        out_shape=jax.ShapeDtypeStruct(x4.shape, x4.dtype),
        grid_spec=pltpu.PrefetchScalarGridSpec(
            num_scalar_prefetch=0, grid=grid,
            in_specs=in_specs,
            out_specs=pl.BlockSpec((1, hh, bw, d), lambda bi, wi: (bi, 0, wi, 0))),
        compiler_params=_compiler_params(2),
    )(x4, p["ln_outer_g"], p["ln_outer_b"], wf, bf, wo, p["bo"],
      p["ln_inner_g"], p["ln_inner_b"])


# ----------------------------------------------------------------------------------
# MSASelfAttentionBlock = row(tied) pass + residual, then column pass + residual
# ----------------------------------------------------------------------------------
def msa_self_attention_block(x, p_row, p_col, *, heads, dim_head=DIM_HEAD):
    b, hh, ww, d = x.shape

    # row attention: 'b h w d -> (b h) w d', tied=True.  The reshape is a free bitcast
    # on the contiguous layout; residual is folded into the kernel.
    bb = _pick_bb(b * hh, ww)
    x = _row_attention(x.reshape(b * hh * ww, d), ww, bb, p_row,
                       heads, dim_head).reshape(b, hh, ww, d)

    # column attention: 'b h w d -> (b w) h d', tied=False.  No XLA transpose: the
    # kernel reads/writes the 4-D layout directly and relayouts nothing in HBM.
    bw = _pick_bw(b, ww, hh)
    return _col_attention(x, bw, p_col, heads, dim_head)


# ----------------------------------------------------------------------------------
# final fc_sapt / fc_pt heads, row-tiled
# ----------------------------------------------------------------------------------
def _fc_heads_kernel(x_ref, w1, b1, w2r, b2, wpt, bpt, sapt_ref, pt_ref):
    x = x_ref[...].astype(jnp.float32)                                   # (R, d)
    hid = jnp.dot(x, w1[...], preferred_element_type=jnp.float32) + b1[0]
    hid = jnp.maximum(hid, jnp.float32(0.0))                             # ReLU
    sapt = jnp.sum(hid * w2r[...], axis=-1, keepdims=True) + b2[0]       # (R, 1)
    sapt_ref[...] = sapt.astype(sapt_ref.dtype)
    pt = jnp.dot(x, wpt[...], preferred_element_type=jnp.float32) + bpt[0]
    pt_ref[...] = pt.astype(pt_ref.dtype)


def _fc_heads(x2d, fc):
    rows, d = x2d.shape
    hdim = fc["w1"].shape[1]
    ncls = fc["wpt"].shape[1]
    w2r = fc["w2"].reshape(1, hdim)
    rt = _pick_rows(rows)
    grid = (rows // rt,)
    sapt, pt = pl.pallas_call(
        _fc_heads_kernel,
        out_shape=(jax.ShapeDtypeStruct((rows, 1), jnp.float32),
                   jax.ShapeDtypeStruct((rows, ncls), jnp.float32)),
        grid_spec=pltpu.PrefetchScalarGridSpec(
            num_scalar_prefetch=0, grid=grid,
            in_specs=[pl.BlockSpec((rt, d), lambda i: (i, 0)),
                      _const_spec((d, hdim)), _const_spec((1, hdim)),
                      _const_spec((1, hdim)), _const_spec((1, 1)),
                      _const_spec((d, ncls)), _const_spec((1, ncls))],
            out_specs=(pl.BlockSpec((rt, 1), lambda i: (i, 0)),
                       pl.BlockSpec((rt, ncls), lambda i: (i, 0)))),
        compiler_params=_compiler_params(1),
    )(x2d, fc["w1"], fc["b1"], w2r, fc["b2"], fc["wpt"], fc["bpt"])
    return sapt, pt


# ----------------------------------------------------------------------------------
# full PTSAPTModel forward
# ----------------------------------------------------------------------------------
def ptsapt_forward(params, tokens, *, heads, dim_head=DIM_HEAD):
    # embedding gather (padding_idx=0 row is zero) -- plain-JAX gather
    x = jnp.take(params["embedding"], tokens, axis=0)       # (b, num_seq, seq_len, d)
    for lp in params["layers"]:
        x = msa_self_attention_block(x, lp["row"], lp["col"],
                                     heads=heads, dim_head=dim_head)
    x0 = x[:, 0, :, :]                                       # (b, seq_len, d)
    b, w, d = x0.shape
    sapt, pt = _fc_heads(x0.reshape(b * w, d), params["fc"])
    return sapt.reshape(b, w), pt.reshape(b, w, -1)


# ----------------------------------------------------------------------------------
# parameter init (matches the torch module's layer structure / special inits)
# ----------------------------------------------------------------------------------
def init_attention_params(key, dim, heads, dim_head):
    inner = heads * dim_head
    k1, k2, k3, k4 = jax.random.split(key, 4)
    s, f32 = 0.02, jnp.float32
    return dict(
        ln_outer_g=jnp.ones((1, dim), f32), ln_outer_b=jnp.zeros((1, dim), f32),
        wq=(jax.random.normal(k1, (dim, inner), f32) * s),
        wkv=(jax.random.normal(k2, (dim, 2 * inner), f32) * s),
        wg=jnp.zeros((dim, inner), f32),        # nn.init.constant_(gating.weight, 0.)
        bg=jnp.ones((1, inner), f32),           # nn.init.constant_(gating.bias, 1.)
        wo=(jax.random.normal(k3, (inner, dim), f32) * s),
        bo=(jax.random.normal(k4, (1, dim), f32) * s),
        ln_inner_g=jnp.ones((1, dim), f32), ln_inner_b=jnp.zeros((1, dim), f32),
    )


def init_model_params(key, vocab_size, embed_dim, num_heads, num_layers,
                      num_classes_pt=2):
    keys = jax.random.split(key, 2 * num_layers + 4)
    f32 = jnp.float32
    emb = jax.random.normal(keys[0], (vocab_size, embed_dim), f32) * 0.02
    emb = emb.at[0].set(0.0)                                  # padding_idx=0
    layers = []
    for l in range(num_layers):
        layers.append(dict(
            row=init_attention_params(keys[1 + 2 * l], embed_dim, num_heads, DIM_HEAD),
            col=init_attention_params(keys[2 + 2 * l], embed_dim, num_heads, DIM_HEAD)))
    hdim = embed_dim // 2
    fc = dict(
        w1=jax.random.normal(keys[2 * num_layers + 1], (embed_dim, hdim), f32) * 0.05,
        b1=jnp.zeros((1, hdim), f32),
        w2=jax.random.normal(keys[2 * num_layers + 2], (hdim, 1), f32) * 0.05,
        b2=jnp.zeros((1, 1), f32),
        wpt=jax.random.normal(keys[2 * num_layers + 3],
                              (embed_dim, num_classes_pt), f32) * 0.05,
        bpt=jnp.zeros((1, num_classes_pt), f32),
    )
    return dict(embedding=emb, layers=layers, fc=fc)


if __name__ == "__main__":
    key = jax.random.PRNGKey(0)
    k_tok, k_par = jax.random.split(key)

    batch, num_seqs, seq_len = 2, 4, 16
    vocab, embed_dim, num_heads, num_layers = 32, 32, 2, 2

    tokens = jax.random.randint(k_tok, (batch, num_seqs, seq_len), 0, vocab)
    params = init_model_params(k_par, vocab, embed_dim, num_heads, num_layers)

    fwd = jax.jit(functools.partial(ptsapt_forward, heads=num_heads))
    sapt, pt = fwd(params, tokens)
    sapt, pt = jax.block_until_ready((sapt, pt))

    assert sapt.shape == (batch, seq_len)
    assert pt.shape == (batch, seq_len, 2)
    assert bool(jnp.all(jnp.isfinite(sapt))) and bool(jnp.all(jnp.isfinite(pt)))
    print("KERNEL_OK")
</pallas_src>

<mosaic_0001>
module attributes {stable_mosaic.version = 11 : i64} {
  func.func @_row_attn_kernel(%arg0: i32, %arg1: memref<64x32xf32, #tpu.memory_space<vmem>>, %arg2: memref<1x32xf32, #tpu.memory_space<vmem>>, %arg3: memref<1x32xf32, #tpu.memory_space<vmem>>, %arg4: memref<32x256xbf16, #tpu.memory_space<vmem>>, %arg5: memref<1x256xf32, #tpu.memory_space<vmem>>, %arg6: memref<128x32xbf16, #tpu.memory_space<vmem>>, %arg7: memref<1x32xf32, #tpu.memory_space<vmem>>, %arg8: memref<1x32xf32, #tpu.memory_space<vmem>>, %arg9: memref<1x32xf32, #tpu.memory_space<vmem>>, %arg10: memref<64x32xf32, #tpu.memory_space<vmem>>) attributes {dimension_semantics = [#tpu.dimension_semantics<parallel>], iteration_bounds = array<i64: 2>, scalar_prefetch = 0 : i64, scratch_operands = 0 : i64, tpu.core_type = #tpu.core_type<tc>, window_params = [{transform_indices = @transform_0, window_bounds = array<i64: 64, 32>}, {pipeline_mode = #tpu.pipeline_mode<synchronous>, transform_indices = @transform_1, window_bounds = array<i64: 1, 32>}, {pipeline_mode = #tpu.pipeline_mode<synchronous>, transform_indices = @transform_2, window_bounds = array<i64: 1, 32>}, {pipeline_mode = #tpu.pipeline_mode<synchronous>, transform_indices = @transform_3, window_bounds = array<i64: 32, 256>}, {pipeline_mode = #tpu.pipeline_mode<synchronous>, transform_indices = @transform_4, window_bounds = array<i64: 1, 256>}, {pipeline_mode = #tpu.pipeline_mode<synchronous>, transform_indices = @transform_5, window_bounds = array<i64: 128, 32>}, {pipeline_mode = #tpu.pipeline_mode<synchronous>, transform_indices = @transform_6, window_bounds = array<i64: 1, 32>}, {pipeline_mode = #tpu.pipeline_mode<synchronous>, transform_indices = @transform_7, window_bounds = array<i64: 1, 32>}, {pipeline_mode = #tpu.pipeline_mode<synchronous>, transform_indices = @transform_8, window_bounds = array<i64: 1, 32>}, {transform_indices = @transform_9, window_bounds = array<i64: 64, 32>}]} {
    %c0 = arith.constant 0 : index
    %c0_0 = arith.constant 0 : index
    %0 = vector.load %arg1[%c0, %c0_0] : memref<64x32xf32, #tpu.memory_space<vmem>>, vector<64x32xf32>
    %c0_1 = arith.constant 0 : index
    %c0_2 = arith.constant 0 : index
    %1 = vector.load %arg2[%c0_1, %c0_2] : memref<1x32xf32, #tpu.memory_space<vmem>>, vector<1x32xf32>
    %2 = vector.shape_cast %1 : vector<1x32xf32> to vector<32xf32>
    %c0_3 = arith.constant 0 : index
    %c0_4 = arith.constant 0 : index
    %3 = vector.load %arg3[%c0_3, %c0_4] : memref<1x32xf32, #tpu.memory_space<vmem>>, vector<1x32xf32>
    %4 = vector.shape_cast %3 : vector<1x32xf32> to vector<32xf32>
    %cst = arith.constant dense<0.000000e+00> : vector<64xf32>
    %5 = vector.multi_reduction <add>, %0, %cst [1] : vector<64x32xf32> to vector<64xf32>
    %6 = vector.shape_cast %5 : vector<64xf32> to vector<64x1xf32>
    %cst_5 = arith.constant 3.200000e+01 : f32
    %7 = vector.broadcast %cst_5 : f32 to vector<64x1xf32>
    %8 = arith.divf %6, %7 : vector<64x1xf32>
    %9 = vector.broadcast %8 : vector<64x1xf32> to vector<64x32xf32>
    %10 = arith.subf %0, %9 : vector<64x32xf32>
    %11 = arith.mulf %10, %10 : vector<64x32xf32>
    %cst_6 = arith.constant dense<0.000000e+00> : vector<64xf32>
    %12 = vector.multi_reduction <add>, %11, %cst_6 [1] : vector<64x32xf32> to vector<64xf32>
    %13 = vector.shape_cast %12 : vector<64xf32> to vector<64x1xf32>
    %cst_7 = arith.constant 3.200000e+01 : f32
    %14 = vector.broadcast %cst_7 : f32 to vector<64x1xf32>
    %15 = arith.divf %13, %14 : vector<64x1xf32>
    %16 = vector.broadcast %8 : vector<64x1xf32> to vector<64x32xf32>
    %17 = arith.subf %0, %16 : vector<64x32xf32>
    %cst_8 = arith.constant 9.99999974E-6 : f32
    %18 = vector.broadcast %cst_8 : f32 to vector<64x1xf32>
    %19 = arith.addf %15, %18 : vector<64x1xf32>
    %20 = math.rsqrt %19 : vector<64x1xf32>
    %21 = vector.broadcast %20 : vector<64x1xf32> to vector<64x32xf32>
    %22 = arith.mulf %17, %21 : vector<64x32xf32>
    %23 = vector.shape_cast %2 : vector<32xf32> to vector<1x32xf32>
    %24 = vector.broadcast %23 : vector<1x32xf32> to vector<64x32xf32>
    %25 = arith.mulf %22, %24 : vector<64x32xf32>
    %26 = vector.shape_cast %4 : vector<32xf32> to vector<1x32xf32>
    %27 = vector.broadcast %26 : vector<1x32xf32> to vector<64x32xf32>
    %28 = arith.addf %25, %27 : vector<64x32xf32>
    %29 = arith.truncf %28 : vector<64x32xf32> to vector<64x32xbf16>
    %c0_9 = arith.constant 0 : index
    %c0_10 = arith.constant 0 : index
    %30 = vector.load %arg4[%c0_9, %c0_10] : memref<32x256xbf16, #tpu.memory_space<vmem>>, vector<32x256xbf16>
    %cst_11 = arith.constant dense<0.000000e+00> : vector<64x256xf32>
    %31 = tpu.matmul %29, %30, %cst_11 {dimension_numbers = #tpu.dot_dimension_numbers<[1], [0], [0], [1], [0, 0, 1, 1], [], []>} : vector<64x32xbf16>, vector<32x256xbf16>, vector<64x256xf32> -> vector<64x256xf32>
    %c0_12 = arith.constant 0 : index
    %c0_13 = arith.constant 0 : index
    %32 = vector.load %arg5[%c0_12, %c0_13] : memref<1x256xf32, #tpu.memory_space<vmem>>, vector<1x256xf32>
    %33 = vector.shape_cast %32 : vector<1x256xf32> to vector<256xf32>
    %34 = vector.shape_cast %33 : vector<256xf32> to vector<1x256xf32>
    %35 = vector.broadcast %34 : vector<1x256xf32> to vector<64x256xf32>
    %36 = arith.addf %31, %35 : vector<64x256xf32>
    %37 = vector.extract_strided_slice %36 {offsets = [0, 0], sizes = [64, 128], strides = [1, 1]} : vector<64x256xf32> to vector<64x128xf32>
    %38 = vector.extract_strided_slice %36 {offsets = [0, 128], sizes = [64, 128], strides = [1, 1]} : vector<64x256xf32> to vector<64x128xf32>
    %39 = vector.shape_cast %37 : vector<64x128xf32> to vector<4x16x128xf32>
    %cst_14 = arith.constant dense<0.000000e+00> : vector<4x128xf32>
    %40 = vector.multi_reduction <add>, %39, %cst_14 [1] : vector<4x16x128xf32> to vector<4x128xf32>
    %41 = vector.shape_cast %40 : vector<4x128xf32> to vector<4x1x128xf32>
    %cst_15 = arith.constant 1.600000e+01 : f32
    %42 = vector.broadcast %cst_15 : f32 to vector<4x1x128xf32>
    %43 = arith.divf %41, %42 : vector<4x1x128xf32>
    %44 = vector.shape_cast %43 : vector<4x1x128xf32> to vector<4x1x128xf32>
    %45 = vector.broadcast %44 : vector<4x1x128xf32> to vector<4x16x128xf32>
    %46 = vector.shape_cast %45 : vector<4x16x128xf32> to vector<64x128xf32>
    %47 = arith.negf %38 : vector<64x128xf32>
    %48 = math.exp %47 : vector<64x128xf32>
    %cst_16 = arith.constant 1.000000e+00 : f32
    %49 = vector.broadcast %cst_16 : f32 to vector<64x128xf32>
    %50 = arith.addf %49, %48 : vector<64x128xf32>
    %51 = arith.divf %49, %50 : vector<64x128xf32>
    %52 = arith.mulf %46, %51 : vector<64x128xf32>
    %53 = arith.truncf %52 : vector<64x128xf32> to vector<64x128xbf16>
    %c0_17 = arith.constant 0 : index
    %c0_18 = arith.constant 0 : index
    %54 = vector.load %arg6[%c0_17, %c0_18] : memref<128x32xbf16, #tpu.memory_space<vmem>>, vector<128x32xbf16>
    %cst_19 = arith.constant dense<0.000000e+00> : vector<64x32xf32>
    %55 = tpu.matmul %53, %54, %cst_19 {dimension_numbers = #tpu.dot_dimension_numbers<[1], [0], [0], [1], [0, 0, 1, 1], [], []>} : vector<64x128xbf16>, vector<128x32xbf16>, vector<64x32xf32> -> vector<64x32xf32>
    %c0_20 = arith.constant 0 : index
    %c0_21 = arith.constant 0 : index
    %56 = vector.load %arg7[%c0_20, %c0_21] : memref<1x32xf32, #tpu.memory_space<vmem>>, vector<1x32xf32>
    %57 = vector.shape_cast %56 : vector<1x32xf32> to vector<32xf32>
    %58 = vector.shape_cast %57 : vector<32xf32> to vector<1x32xf32>
    %59 = vector.broadcast %58 : vector<1x32xf32> to vector<64x32xf32>
    %60 = arith.addf %55, %59 : vector<64x32xf32>
    %61 = arith.addf %28, %60 : vector<64x32xf32>
    %c0_22 = arith.constant 0 : index
    %c0_23 = arith.constant 0 : index
    %62 = vector.load %arg8[%c0_22, %c0_23] : memref<1x32xf32, #tpu.memory_space<vmem>>, vector<1x32xf32>
    %63 = vector.shape_cast %62 : vector<1x32xf32> to vector<32xf32>
    %c0_24 = arith.constant 0 : index
    %c0_25 = arith.constant 0 : index
    %64 = vector.load %arg9[%c0_24, %c0_25] : memref<1x32xf32, #tpu.memory_space<vmem>>, vector<1x32xf32>
    %65 = vector.shape_cast %64 : vector<1x32xf32> to vector<32xf32>
    %cst_26 = arith.constant dense<0.000000e+00> : vector<64xf32>
    %66 = vector.multi_reduction <add>, %61, %cst_26 [1] : vector<64x32xf32> to vector<64xf32>
    %67 = vector.shape_cast %66 : vector<64xf32> to vector<64x1xf32>
    %cst_27 = arith.constant 3.200000e+01 : f32
    %68 = vector.broadcast %cst_27 : f32 to vector<64x1xf32>
    %69 = arith.divf %67, %68 : vector<64x1xf32>
    %70 = vector.broadcast %69 : vector<64x1xf32> to vector<64x32xf32>
    %71 = arith.subf %61, %70 : vector<64x32xf32>
    %72 = arith.mulf %71, %71 : vector<64x32xf32>
    %cst_28 = arith.constant dense<0.000000e+00> : vector<64xf32>
    %73 = vector.multi_reduction <add>, %72, %cst_28 [1] : vector<64x32xf32> to vector<64xf32>
    %74 = vector.shape_cast %73 : vector<64xf32> to vector<64x1xf32>
    %cst_29 = arith.constant 3.200000e+01 : f32
    %75 = vector.broadcast %cst_29 : f32 to vector<64x1xf32>
    %76 = arith.divf %74, %75 : vector<64x1xf32>
    %77 = vector.broadcast %69 : vector<64x1xf32> to vector<64x32xf32>
    %78 = arith.subf %61, %77 : vector<64x32xf32>
    %cst_30 = arith.constant 9.99999974E-6 : f32
    %79 = vector.broadcast %cst_30 : f32 to vector<64x1xf32>
    %80 = arith.addf %76, %79 : vector<64x1xf32>
    %81 = math.rsqrt %80 : vector<64x1xf32>
    %82 = vector.broadcast %81 : vector<64x1xf32> to vector<64x32xf32>
    %83 = arith.mulf %78, %82 : vector<64x32xf32>
    %84 = vector.shape_cast %63 : vector<32xf32> to vector<1x32xf32>
    %85 = vector.broadcast %84 : vector<1x32xf32> to vector<64x32xf32>
    %86 = arith.mulf %83, %85 : vector<64x32xf32>
    %87 = vector.shape_cast %65 : vector<32xf32> to vector<1x32xf32>
    %88 = vector.broadcast %87 : vector<1x32xf32> to vector<64x32xf32>
    %89 = arith.addf %86, %88 : vector<64x32xf32>
    %90 = arith.addf %0, %89 : vector<64x32xf32>
    %c0_31 = arith.constant 0 : index
    %c0_32 = arith.constant 0 : index
    %91 = vector.load %arg10[%c0_31, %c0_32] : memref<64x32xf32, #tpu.memory_space<vmem>>, vector<64x32xf32>
    tpu.vector_store %arg10[%c0_31, %c0_32], %90 {strides = array<i32>} : memref<64x32xf32, #tpu.memory_space<vmem>>, vector<64x32xf32>,
    return
  }
  func.func @transform_0(%arg0: i32) -> (i32, i32) {
    %c0_i32 = arith.constant 0 : i32
    %c0_i32_0 = arith.constant 0 : i32
    return %arg0, %c0_i32 : i32, i32
  }
  func.func @transform_1(%arg0: i32) -> (i32, i32) {
    %c0_i32 = arith.constant 0 : i32
    %c0_i32_0 = arith.constant 0 : i32
    %c0_i32_1 = arith.constant 0 : i32
    return %c0_i32, %c0_i32_0 : i32, i32
  }
  func.func @transform_2(%arg0: i32) -> (i32, i32) {
    %c0_i32 = arith.constant 0 : i32
    %c0_i32_0 = arith.constant 0 : i32
    %c0_i32_1 = arith.constant 0 : i32
    return %c0_i32, %c0_i32_0 : i32, i32
  }
  func.func @transform_3(%arg0: i32) -> (i32, i32) {
    %c0_i32 = arith.constant 0 : i32
    %c0_i32_0 = arith.constant 0 : i32
    %c0_i32_1 = arith.constant 0 : i32
    return %c0_i32, %c0_i32_0 : i32, i32
  }
  func.func @transform_4(%arg0: i32) -> (i32, i32) {
    %c0_i32 = arith.constant 0 : i32
    %c0_i32_0 = arith.constant 0 : i32
    %c0_i32_1 = arith.constant 0 : i32
    return %c0_i32, %c0_i32_0 : i32, i32
  }
  func.func @transform_5(%arg0: i32) -> (i32, i32) {
    %c0_i32 = arith.constant 0 : i32
    %c0_i32_0 = arith.constant 0 : i32
    %c0_i32_1 = arith.constant 0 : i32
    return %c0_i32, %c0_i32_0 : i32, i32
  }
  func.func @transform_6(%arg0: i32) -> (i32, i32) {
    %c0_i32 = arith.constant 0 : i32
    %c0_i32_0 = arith.constant 0 : i32
    %c0_i32_1 = arith.constant 0 : i32
    return %c0_i32, %c0_i32_0 : i32, i32
  }
  func.func @transform_7(%arg0: i32) -> (i32, i32) {
    %c0_i32 = arith.constant 0 : i32
    %c0_i32_0 = arith.constant 0 : i32
    %c0_i32_1 = arith.constant 0 : i32
    return %c0_i32, %c0_i32_0 : i32, i32
  }
  func.func @transform_8(%arg0: i32) -> (i32, i32) {
    %c0_i32 = arith.constant 0 : i32
    %c0_i32_0 = arith.constant 0 : i32
    %c0_i32_1 = arith.constant 0 : i32
    return %c0_i32, %c0_i32_0 : i32, i32
  }
  func.func @transform_9(%arg0: i32) -> (i32, i32) {
    %c0_i32 = arith.constant 0 : i32
    %c0_i32_0 = arith.constant 0 : i32
    return %arg0, %c0_i32 : i32, i32
  }
}

module attributes {stable_mosaic.version = 11 : i64} {
  func.func @_fc_heads_kernel(%arg0: i32, %arg1: memref<16x32xf32, #tpu.memory_space<vmem>>, %arg2: memref<32x16xf32, #tpu.memory_space<vmem>>, %arg3: memref<1x16xf32, #tpu.memory_space<vmem>>, %arg4: memref<1x16xf32, #tpu.memory_space<vmem>>, %arg5: memref<1x1xf32, #tpu.memory_space<vmem>>, %arg6: memref<32x2xf32, #tpu.memory_space<vmem>>, %arg7: memref<1x2xf32, #tpu.memory_space<vmem>>, %arg8: memref<16x1xf32, #tpu.memory_space<vmem>>, %arg9: memref<16x2xf32, #tpu.memory_space<vmem>>) attributes {dimension_semantics = [#tpu.dimension_semantics<parallel>], iteration_bounds = array<i64: 2>, scalar_prefetch = 0 : i64, scratch_operands = 0 : i64, tpu.core_type = #tpu.core_type<tc>, window_params = [{transform_indices = @transform_0, window_bounds = array<i64: 16, 32>}, {pipeline_mode = #tpu.pipeline_mode<synchronous>, transform_indices = @transform_1, window_bounds = array<i64: 32, 16>}, {pipeline_mode = #tpu.pipeline_mode<synchronous>, transform_indices = @transform_2, window_bounds = array<i64: 1, 16>}, {pipeline_mode = #tpu.pipeline_mode<synchronous>, transform_indices = @transform_3, window_bounds = array<i64: 1, 16>}, {pipeline_mode = #tpu.pipeline_mode<synchronous>, transform_indices = @transform_4, window_bounds = array<i64: 1, 1>}, {pipeline_mode = #tpu.pipeline_mode<synchronous>, transform_indices = @transform_5, window_bounds = array<i64: 32, 2>}, {pipeline_mode = #tpu.pipeline_mode<synchronous>, transform_indices = @transform_6, window_bounds = array<i64: 1, 2>}, {transform_indices = @transform_7, window_bounds = array<i64: 16, 1>}, {transform_indices = @transform_8, window_bounds = array<i64: 16, 2>}]} {
    %c0 = arith.constant 0 : index
    %c0_0 = arith.constant 0 : index
    %0 = vector.load %arg1[%c0, %c0_0] : memref<16x32xf32, #tpu.memory_space<vmem>>, vector<16x32xf32>
    %c0_1 = arith.constant 0 : index
    %c0_2 = arith.constant 0 : index
    %1 = vector.load %arg2[%c0_1, %c0_2] : memref<32x16xf32, #tpu.memory_space<vmem>>, vector<32x16xf32>
    %cst = arith.constant dense<0.000000e+00> : vector<16x16xf32>
    %2 = tpu.matmul %0, %1, %cst {dimension_numbers = #tpu.dot_dimension_numbers<[1], [0], [0], [1], [0, 0, 1, 1], [], []>} : vector<16x32xf32>, vector<32x16xf32>, vector<16x16xf32> -> vector<16x16xf32>
    %c0_3 = arith.constant 0 : index
    %c0_4 = arith.constant 0 : index
    %3 = vector.load %arg3[%c0_3, %c0_4] : memref<1x16xf32, #tpu.memory_space<vmem>>, vector<1x16xf32>
    %4 = vector.shape_cast %3 : vector<1x16xf32> to vector<16xf32>
    %5 = vector.shape_cast %4 : vector<16xf32> to vector<1x16xf32>
    %6 = vector.broadcast %5 : vector<1x16xf32> to vector<16x16xf32>
    %7 = arith.addf %2, %6 : vector<16x16xf32>
    %cst_5 = arith.constant 0.000000e+00 : f32
    %8 = vector.broadcast %cst_5 : f32 to vector<16x16xf32>
    %9 = arith.maximumf %7, %8 : vector<16x16xf32>
    %c0_6 = arith.constant 0 : index
    %c0_7 = arith.constant 0 : index
    %10 = vector.load %arg4[%c0_6, %c0_7] : memref<1x16xf32, #tpu.memory_space<vmem>>, vector<1x16xf32>
    %11 = vector.broadcast %10 : vector<1x16xf32> to vector<16x16xf32>
    %12 = arith.mulf %9, %11 : vector<16x16xf32>
    %cst_8 = arith.constant dense<0.000000e+00> : vector<16xf32>
    %13 = vector.multi_reduction <add>, %12, %cst_8 [1] : vector<16x16xf32> to vector<16xf32>
    %14 = vector.shape_cast %13 : vector<16xf32> to vector<16x1xf32>
    %c0_9 = arith.constant 0 : index
    %c0_10 = arith.constant 0 : index
    %15 = vector.load %arg5[%c0_9, %c0_10] : memref<1x1xf32, #tpu.memory_space<vmem>>, vector<1x1xf32>
    %16 = vector.shape_cast %15 : vector<1x1xf32> to vector<1xf32>
    %17 = vector.shape_cast %16 : vector<1xf32> to vector<1x1xf32>
    %18 = vector.broadcast %17 : vector<1x1xf32> to vector<16x1xf32>
    %19 = arith.addf %14, %18 : vector<16x1xf32>
    %c0_11 = arith.constant 0 : index
    %c0_12 = arith.constant 0 : index
    %20 = vector.load %arg8[%c0_11, %c0_12] : memref<16x1xf32, #tpu.memory_space<vmem>>, vector<16x1xf32>
    tpu.vector_store %arg8[%c0_11, %c0_12], %19 {strides = array<i32>} : memref<16x1xf32, #tpu.memory_space<vmem>>, vector<16x1xf32>,
    %c0_13 = arith.constant 0 : index
    %c0_14 = arith.constant 0 : index
    %21 = vector.load %arg6[%c0_13, %c0_14] : memref<32x2xf32, #tpu.memory_space<vmem>>, vector<32x2xf32>
    %cst_15 = arith.constant dense<0.000000e+00> : vector<16x2xf32>
    %22 = tpu.matmul %0, %21, %cst_15 {dimension_numbers = #tpu.dot_dimension_numbers<[1], [0], [0], [1], [0, 0, 1, 1], [], []>} : vector<16x32xf32>, vector<32x2xf32>, vector<16x2xf32> -> vector<16x2xf32>
    %c0_16 = arith.constant 0 : index
    %c0_17 = arith.constant 0 : index
    %23 = vector.load %arg7[%c0_16, %c0_17] : memref<1x2xf32, #tpu.memory_space<vmem>>, vector<1x2xf32>
    %24 = vector.shape_cast %23 : vector<1x2xf32> to vector<2xf32>
    %25 = vector.shape_cast %24 : vector<2xf32> to vector<1x2xf32>
    %26 = vector.broadcast %25 : vector<1x2xf32> to vector<16x2xf32>
    %27 = arith.addf %22, %26 : vector<16x2xf32>
    %c0_18 = arith.constant 0 : index
    %c0_19 = arith.constant 0 : index
    %28 = vector.load %arg9[%c0_18, %c0_19] : memref<16x2xf32, #tpu.memory_space<vmem>>, vector<16x2xf32>
    tpu.vector_store %arg9[%c0_18, %c0_19], %27 {strides = array<i32>} : memref<16x2xf32, #tpu.memory_space<vmem>>, vector<16x2xf32>,
    return
  }
  func.func @transform_0(%arg0: i32) -> (i32, i32) {
    %c0_i32 = arith.constant 0 : i32
    %c0_i32_0 = arith.constant 0 : i32
    return %arg0, %c0_i32 : i32, i32
  }
  func.func @transform_1(%arg0: i32) -> (i32, i32) {
    %c0_i32 = arith.constant 0 : i32
    %c0_i32_0 = arith.constant 0 : i32
    %c0_i32_1 = arith.constant 0 : i32
    return %c0_i32, %c0_i32_0 : i32, i32
  }
  func.func @transform_2(%arg0: i32) -> (i32, i32) {
    %c0_i32 = arith.constant 0 : i32
    %c0_i32_0 = arith.constant 0 : i32
    %c0_i32_1 = arith.constant 0 : i32
    return %c0_i32, %c0_i32_0 : i32, i32
  }
  func.func @transform_3(%arg0: i32) -> (i32, i32) {
    %c0_i32 = arith.constant 0 : i32
    %c0_i32_0 = arith.constant 0 : i32
    %c0_i32_1 = arith.constant 0 : i32
    return %c0_i32, %c0_i32_0 : i32, i32
  }
  func.func @transform_4(%arg0: i32) -> (i32, i32) {
    %c0_i32 = arith.constant 0 : i32
    %c0_i32_0 = arith.constant 0 : i32
    %c0_i32_1 = arith.constant 0 : i32
    return %c0_i32, %c0_i32_0 : i32, i32
  }
  func.func @transform_5(%arg0: i32) -> (i32, i32) {
    %c0_i32 = arith.constant 0 : i32
    %c0_i32_0 = arith.constant 0 : i32
    %c0_i32_1 = arith.constant 0 : i32
    return %c0_i32, %c0_i32_0 : i32, i32
  }
  func.func @transform_6(%arg0: i32) -> (i32, i32) {
    %c0_i32 = arith.constant 0 : i32
    %c0_i32_0 = arith.constant 0 : i32
    %c0_i32_1 = arith.constant 0 : i32
    return %c0_i32, %c0_i32_0 : i32, i32
  }
  func.func @transform_7(%arg0: i32) -> (i32, i32) {
    %c0_i32 = arith.constant 0 : i32
    %c0_i32_0 = arith.constant 0 : i32
    return %arg0, %c0_i32 : i32, i32
  }
  func.func @transform_8(%arg0: i32) -> (i32, i32) {
    %c0_i32 = arith.constant 0 : i32
    %c0_i32_0 = arith.constant 0 : i32
    return %arg0, %c0_i32 : i32, i32
  }
}

module attributes {stable_mosaic.version = 11 : i64} {
  func.func @_col_attn_kernel(%arg0: i32, %arg1: i32, %arg2: memref<1x4x16x32xf32, #tpu.memory_space<vmem>>, %arg3: memref<1x32xf32, #tpu.memory_space<vmem>>, %arg4: memref<1x32xf32, #tpu.memory_space<vmem>>, %arg5: memref<32x512xbf16, #tpu.memory_space<vmem>>, %arg6: memref<1x512xf32, #tpu.memory_space<vmem>>, %arg7: memref<128x32xbf16, #tpu.memory_space<vmem>>, %arg8: memref<1x32xf32, #tpu.memory_space<vmem>>, %arg9: memref<1x32xf32, #tpu.memory_space<vmem>>, %arg10: memref<1x32xf32, #tpu.memory_space<vmem>>, %arg11: memref<1x4x16x32xf32, #tpu.memory_space<vmem>>) attributes {dimension_semantics = [#tpu.dimension_semantics<parallel>, #tpu.dimension_semantics<parallel>], iteration_bounds = array<i64: 2, 1>, scalar_prefetch = 0 : i64, scratch_operands = 0 : i64, tpu.core_type = #tpu.core_type<tc>, window_params = [{transform_indices = @transform_0, window_bounds = array<i64: 1, 4, 16, 32>}, {pipeline_mode = #tpu.pipeline_mode<synchronous>, transform_indices = @transform_1, window_bounds = array<i64: 1, 32>}, {pipeline_mode = #tpu.pipeline_mode<synchronous>, transform_indices = @transform_2, window_bounds = array<i64: 1, 32>}, {pipeline_mode = #tpu.pipeline_mode<synchronous>, transform_indices = @transform_3, window_bounds = array<i64: 32, 512>}, {pipeline_mode = #tpu.pipeline_mode<synchronous>, transform_indices = @transform_4, window_bounds = array<i64: 1, 512>}, {pipeline_mode = #tpu.pipeline_mode<synchronous>, transform_indices = @transform_5, window_bounds = array<i64: 128, 32>}, {pipeline_mode = #tpu.pipeline_mode<synchronous>, transform_indices = @transform_6, window_bounds = array<i64: 1, 32>}, {pipeline_mode = #tpu.pipeline_mode<synchronous>, transform_indices = @transform_7, window_bounds = array<i64: 1, 32>}, {pipeline_mode = #tpu.pipeline_mode<synchronous>, transform_indices = @transform_8, window_bounds = array<i64: 1, 32>}, {transform_indices = @transform_9, window_bounds = array<i64: 1, 4, 16, 32>}]} {
    %c0 = arith.constant 0 : index
    %c0_0 = arith.constant 0 : index
    %c0_1 = arith.constant 0 : index
    %c0_2 = arith.constant 0 : index
    %0 = vector.load %arg2[%c0, %c0_0, %c0_1, %c0_2] : memref<1x4x16x32xf32, #tpu.memory_space<vmem>>, vector<1x4x16x32xf32>
    %1 = vector.shape_cast %0 : vector<1x4x16x32xf32> to vector<4x16x32xf32>
    %c0_3 = arith.constant 0 : index
    %c0_4 = arith.constant 0 : index
    %2 = vector.load %arg3[%c0_3, %c0_4] : memref<1x32xf32, #tpu.memory_space<vmem>>, vector<1x32xf32>
    %3 = vector.shape_cast %2 : vector<1x32xf32> to vector<32xf32>
    %c0_5 = arith.constant 0 : index
    %c0_6 = arith.constant 0 : index
    %4 = vector.load %arg4[%c0_5, %c0_6] : memref<1x32xf32, #tpu.memory_space<vmem>>, vector<1x32xf32>
    %5 = vector.shape_cast %4 : vector<1x32xf32> to vector<32xf32>
    %cst = arith.constant dense<0.000000e+00> : vector<4x16xf32>
    %6 = vector.multi_reduction <add>, %1, %cst [2] : vector<4x16x32xf32> to vector<4x16xf32>
    %7 = vector.shape_cast %6 : vector<4x16xf32> to vector<4x16x1xf32>
    %cst_7 = arith.constant 3.200000e+01 : f32
    %8 = vector.broadcast %cst_7 : f32 to vector<4x16x1xf32>
    %9 = arith.divf %7, %8 : vector<4x16x1xf32>
    %10 = vector.broadcast %9 : vector<4x16x1xf32> to vector<4x16x32xf32>
    %11 = arith.subf %1, %10 : vector<4x16x32xf32>
    %12 = arith.mulf %11, %11 : vector<4x16x32xf32>
    %cst_8 = arith.constant dense<0.000000e+00> : vector<4x16xf32>
    %13 = vector.multi_reduction <add>, %12, %cst_8 [2] : vector<4x16x32xf32> to vector<4x16xf32>
    %14 = vector.shape_cast %13 : vector<4x16xf32> to vector<4x16x1xf32>
    %cst_9 = arith.constant 3.200000e+01 : f32
    %15 = vector.broadcast %cst_9 : f32 to vector<4x16x1xf32>
    %16 = arith.divf %14, %15 : vector<4x16x1xf32>
    %17 = vector.broadcast %9 : vector<4x16x1xf32> to vector<4x16x32xf32>
    %18 = arith.subf %1, %17 : vector<4x16x32xf32>
    %cst_10 = arith.constant 9.99999974E-6 : f32
    %19 = vector.broadcast %cst_10 : f32 to vector<4x16x1xf32>
    %20 = arith.addf %16, %19 : vector<4x16x1xf32>
    %21 = math.rsqrt %20 : vector<4x16x1xf32>
    %22 = vector.broadcast %21 : vector<4x16x1xf32> to vector<4x16x32xf32>
    %23 = arith.mulf %18, %22 : vector<4x16x32xf32>
    %24 = vector.shape_cast %3 : vector<32xf32> to vector<1x1x32xf32>
    %25 = vector.broadcast %24 : vector<1x1x32xf32> to vector<4x16x32xf32>
    %26 = arith.mulf %23, %25 : vector<4x16x32xf32>
    %27 = vector.shape_cast %5 : vector<32xf32> to vector<1x1x32xf32>
    %28 = vector.broadcast %27 : vector<1x1x32xf32> to vector<4x16x32xf32>
    %29 = arith.addf %26, %28 : vector<4x16x32xf32>
    %30 = vector.shape_cast %29 : vector<4x16x32xf32> to vector<64x32xf32>
    %31 = arith.truncf %30 : vector<64x32xf32> to vector<64x32xbf16>
    %c0_11 = arith.constant 0 : index
    %c0_12 = arith.constant 0 : index
    %32 = vector.load %arg5[%c0_11, %c0_12] : memref<32x512xbf16, #tpu.memory_space<vmem>>, vector<32x512xbf16>
    %cst_13 = arith.constant dense<0.000000e+00> : vector<64x512xf32>
    %33 = tpu.matmul %31, %32, %cst_13 {dimension_numbers = #tpu.dot_dimension_numbers<[1], [0], [0], [1], [0, 0, 1, 1], [], []>} : vector<64x32xbf16>, vector<32x512xbf16>, vector<64x512xf32> -> vector<64x512xf32>
    %c0_14 = arith.constant 0 : index
    %c0_15 = arith.constant 0 : index
    %34 = vector.load %arg6[%c0_14, %c0_15] : memref<1x512xf32, #tpu.memory_space<vmem>>, vector<1x512xf32>
    %35 = vector.shape_cast %34 : vector<1x512xf32> to vector<512xf32>
    %36 = vector.shape_cast %35 : vector<512xf32> to vector<1x512xf32>
    %37 = vector.broadcast %36 : vector<1x512xf32> to vector<64x512xf32>
    %38 = arith.addf %33, %37 : vector<64x512xf32>
    %39 = vector.shape_cast %38 : vector<64x512xf32> to vector<4x16x512xf32>
    %40 = vector.extract_strided_slice %39 {offsets = [0, 0, 0], sizes = [4, 16, 64], strides = [1, 1, 1]} : vector<4x16x512xf32> to vector<4x16x64xf32>
    %41 = vector.extract_strided_slice %39 {offsets = [0, 0, 128], sizes = [4, 16, 64], strides = [1, 1, 1]} : vector<4x16x512xf32> to vector<4x16x64xf32>
    %42 = vector.extract_strided_slice %39 {offsets = [0, 0, 256], sizes = [4, 16, 64], strides = [1, 1, 1]} : vector<4x16x512xf32> to vector<4x16x64xf32>
    %43 = vector.extract_strided_slice %39 {offsets = [0, 0, 384], sizes = [4, 16, 64], strides = [1, 1, 1]} : vector<4x16x512xf32> to vector<4x16x64xf32>
    %44 = arith.negf %43 : vector<4x16x64xf32>
    %45 = math.exp %44 : vector<4x16x64xf32>
    %cst_16 = arith.constant 1.000000e+00 : f32
    %46 = vector.broadcast %cst_16 : f32 to vector<4x16x64xf32>
    %47 = arith.addf %46, %45 : vector<4x16x64xf32>
    %48 = arith.divf %46, %47 : vector<4x16x64xf32>
    %49 = vector.extract_strided_slice %40 {offsets = [0, 0, 0], sizes = [1, 16, 64], strides = [1, 1, 1]} : vector<4x16x64xf32> to vector<1x16x64xf32>
    %50 = vector.shape_cast %49 : vector<1x16x64xf32> to vector<16x64xf32>
    %51 = vector.extract_strided_slice %41 {offsets = [0, 0, 0], sizes = [1, 16, 64], strides = [1, 1, 1]} : vector<4x16x64xf32> to vector<1x16x64xf32>
    %52 = vector.shape_cast %51 : vector<1x16x64xf32> to vector<16x64xf32>
    %53 = arith.mulf %50, %52 : vector<16x64xf32>
    %cst_17 = arith.constant dense<0.000000e+00> : vector<16xf32>
    %54 = vector.multi_reduction <add>, %53, %cst_17 [1] : vector<16x64xf32> to vector<16xf32>
    %55 = vector.shape_cast %54 : vector<16xf32> to vector<16x1xf32>
    %56 = vector.extract_strided_slice %40 {offsets = [0, 0, 0], sizes = [1, 16, 64], strides = [1, 1, 1]} : vector<4x16x64xf32> to vector<1x16x64xf32>
    %57 = vector.shape_cast %56 : vector<1x16x64xf32> to vector<16x64xf32>
    %58 = vector.extract_strided_slice %41 {offsets = [1, 0, 0], sizes = [1, 16, 64], strides = [1, 1, 1]} : vector<4x16x64xf32> to vector<1x16x64xf32>
    %59 = vector.shape_cast %58 : vector<1x16x64xf32> to vector<16x64xf32>
    %60 = arith.mulf %57, %59 : vector<16x64xf32>
    %cst_18 = arith.constant dense<0.000000e+00> : vector<16xf32>
    %61 = vector.multi_reduction <add>, %60, %cst_18 [1] : vector<16x64xf32> to vector<16xf32>
    %62 = vector.shape_cast %61 : vector<16xf32> to vector<16x1xf32>
    %63 = vector.extract_strided_slice %40 {offsets = [0, 0, 0], sizes = [1, 16, 64], strides = [1, 1, 1]} : vector<4x16x64xf32> to vector<1x16x64xf32>
    %64 = vector.shape_cast %63 : vector<1x16x64xf32> to vector<16x64xf32>
    %65 = vector.extract_strided_slice %41 {offsets = [2, 0, 0], sizes = [1, 16, 64], strides = [1, 1, 1]} : vector<4x16x64xf32> to vector<1x16x64xf32>
    %66 = vector.shape_cast %65 : vector<1x16x64xf32> to vector<16x64xf32>
    %67 = arith.mulf %64, %66 : vector<16x64xf32>
    %cst_19 = arith.constant dense<0.000000e+00> : vector<16xf32>
    %68 = vector.multi_reduction <add>, %67, %cst_19 [1] : vector<16x64xf32> to vector<16xf32>
    %69 = vector.shape_cast %68 : vector<16xf32> to vector<16x1xf32>
    %70 = vector.extract_strided_slice %40 {offsets = [0, 0, 0], sizes = [1, 16, 64], strides = [1, 1, 1]} : vector<4x16x64xf32> to vector<1x16x64xf32>
    %71 = vector.shape_cast %70 : vector<1x16x64xf32> to vector<16x64xf32>
    %72 = vector.extract_strided_slice %41 {offsets = [3, 0, 0], sizes = [1, 16, 64], strides = [1, 1, 1]} : vector<4x16x64xf32> to vector<1x16x64xf32>
    %73 = vector.shape_cast %72 : vector<1x16x64xf32> to vector<16x64xf32>
    %74 = arith.mulf %71, %73 : vector<16x64xf32>
    %cst_20 = arith.constant dense<0.000000e+00> : vector<16xf32>
    %75 = vector.multi_reduction <add>, %74, %cst_20 [1] : vector<16x64xf32> to vector<16xf32>
    %76 = vector.shape_cast %75 : vector<16xf32> to vector<16x1xf32>
    %77 = tpu.concatenate %55, %62, %69, %76 in 1 : vector<16x1xf32>, vector<16x1xf32>, vector<16x1xf32>, vector<16x1xf32> -> vector<16x4xf32>
    %cst_21 = arith.constant 1.250000e-01 : f32
    %78 = vector.broadcast %cst_21 : f32 to vector<16x4xf32>
    %79 = arith.mulf %77, %78 : vector<16x4xf32>
    %cst_22 = arith.constant dense<0xFF800000> : vector<16xf32>
    %80 = vector.multi_reduction <maximumf>, %79, %cst_22 [1] : vector<16x4xf32> to vector<16xf32>
    %81 = vector.shape_cast %80 : vector<16xf32> to vector<16x1xf32>
    %82 = vector.broadcast %81 : vector<16x1xf32> to vector<16x4xf32>
    %83 = arith.subf %79, %82 : vector<16x4xf32>
    %84 = math.exp %83 : vector<16x4xf32>
    %cst_23 = arith.constant dense<0.000000e+00> : vector<16xf32>
    %85 = vector.multi_reduction <add>, %84, %cst_23 [1] : vector<16x4xf32> to vector<16xf32>
    %86 = vector.shape_cast %85 : vector<16xf32> to vector<16x1xf32>
    %87 = tpu.reciprocal %86 {approx = true} : vector<16x1xf32> -> vector<16x1xf32>
    %88 = vector.broadcast %87 : vector<16x1xf32> to vector<16x4xf32>
    %89 = arith.mulf %84, %88 : vector<16x4xf32>
    %90 = vector.extract_strided_slice %89 {offsets = [0, 0], sizes = [16, 1], strides = [1, 1]} : vector<16x4xf32> to vector<16x1xf32>
    %91 = vector.extract_strided_slice %42 {offsets = [0, 0, 0], sizes = [1, 16, 64], strides = [1, 1, 1]} : vector<4x16x64xf32> to vector<1x16x64xf32>
    %92 = vector.shape_cast %91 : vector<1x16x64xf32> to vector<16x64xf32>
    %93 = vector.broadcast %90 : vector<16x1xf32> to vector<16x64xf32>
    %94 = arith.mulf %93, %92 : vector<16x64xf32>
    %95 = vector.extract_strided_slice %89 {offsets = [0, 1], sizes = [16, 1], strides = [1, 1]} : vector<16x4xf32> to vector<16x1xf32>
    %96 = vector.extract_strided_slice %42 {offsets = [1, 0, 0], sizes = [1, 16, 64], strides = [1, 1, 1]} : vector<4x16x64xf32> to vector<1x16x64xf32>
    %97 = vector.shape_cast %96 : vector<1x16x64xf32> to vector<16x64xf32>
    %98 = vector.broadcast %95 : vector<16x1xf32> to vector<16x64xf32>
    %99 = arith.mulf %98, %97 : vector<16x64xf32>
    %100 = arith.addf %94, %99 : vector<16x64xf32>
    %101 = vector.extract_strided_slice %89 {offsets = [0, 2], sizes = [16, 1], strides = [1, 1]} : vector<16x4xf32> to vector<16x1xf32>
    %102 = vector.extract_strided_slice %42 {offsets = [2, 0, 0], sizes = [1, 16, 64], strides = [1, 1, 1]} : vector<4x16x64xf32> to vector<1x16x64xf32>
    %103 = vector.shape_cast %102 : vector<1x16x64xf32> to vector<16x64xf32>
    %104 = vector.broadcast %101 : vector<16x1xf32> to vector<16x64xf32>
    %105 = arith.mulf %104, %103 : vector<16x64xf32>
    %106 = arith.addf %100, %105 : vector<16x64xf32>
    %107 = vector.extract_strided_slice %89 {offsets = [0, 3], sizes = [16, 1], strides = [1, 1]} : vector<16x4xf32> to vector<16x1xf32>
    %108 = vector.extract_strided_slice %42 {offsets = [3, 0, 0], sizes = [1, 16, 64], strides = [1, 1, 1]} : vector<4x16x64xf32> to vector<1x16x64xf32>
    %109 = vector.shape_cast %108 : vector<1x16x64xf32> to vector<16x64xf32>
    %110 = vector.broadcast %107 : vector<16x1xf32> to vector<16x64xf32>
    %111 = arith.mulf %110, %109 : vector<16x64xf32>
    %112 = arith.addf %106, %111 : vector<16x64xf32>
    %113 = vector.extract_strided_slice %48 {offsets = [0, 0, 0], sizes = [1, 16, 64], strides = [1, 1, 1]} : vector<4x16x64xf32> to vector<1x16x64xf32>
    %114 = vector.shape_cast %113 : vector<1x16x64xf32> to vector<16x64xf32>
    %115 = arith.mulf %112, %114 : vector<16x64xf32>
    %116 = vector.extract_strided_slice %40 {offsets = [1, 0, 0], sizes = [1, 16, 64], strides = [1, 1, 1]} : vector<4x16x64xf32> to vector<1x16x64xf32>
    %117 = vector.shape_cast %116 : vector<1x16x64xf32> to vector<16x64xf32>
    %118 = vector.extract_strided_slice %41 {offsets = [0, 0, 0], sizes = [1, 16, 64], strides = [1, 1, 1]} : vector<4x16x64xf32> to vector<1x16x64xf32>
    %119 = vector.shape_cast %118 : vector<1x16x64xf32> to vector<16x64xf32>
    %120 = arith.mulf %117, %119 : vector<16x64xf32>
    %cst_24 = arith.constant dense<0.000000e+00> : vector<16xf32>
    %121 = vector.multi_reduction <add>, %120, %cst_24 [1] : vector<16x64xf32> to vector<16xf32>
    %122 = vector.shape_cast %121 : vector<16xf32> to vector<16x1xf32>
    %123 = vector.extract_strided_slice %40 {offsets = [1, 0, 0], sizes = [1, 16, 64], strides = [1, 1, 1]} : vector<4x16x64xf32> to vector<1x16x64xf32>
    %124 = vector.shape_cast %123 : vector<1x16x64xf32> to vector<16x64xf32>
    %125 = vector.extract_strided_slice %41 {offsets = [1, 0, 0], sizes = [1, 16, 64], strides = [1, 1, 1]} : vector<4x16x64xf32> to vector<1x16x64xf32>
    %126 = vector.shape_cast %125 : vector<1x16x64xf32> to vector<16x64xf32>
    %127 = arith.mulf %124, %126 : vector<16x64xf32>
    %cst_25 = arith.constant dense<0.000000e+00> : vector<16xf32>
    %128 = vector.multi_reduction <add>, %127, %cst_25 [1] : vector<16x64xf32> to vector<16xf32>
    %129 = vector.shape_cast %128 : vector<16xf32> to vector<16x1xf32>
    %130 = vector.extract_strided_slice %40 {offsets = [1, 0, 0], sizes = [1, 16, 64], strides = [1, 1, 1]} : vector<4x16x64xf32> to vector<1x16x64xf32>
    %131 = vector.shape_cast %130 : vector<1x16x64xf32> to vector<16x64xf32>
    %132 = vector.extract_strided_slice %41 {offsets = [2, 0, 0], sizes = [1, 16, 64], strides = [1, 1, 1]} : vector<4x16x64xf32> to vector<1x16x64xf32>
    %133 = vector.shape_cast %132 : vector<1x16x64xf32> to vector<16x64xf32>
    %134 = arith.mulf %131, %133 : vector<16x64xf32>
    %cst_26 = arith.constant dense<0.000000e+00> : vector<16xf32>
    %135 = vector.multi_reduction <add>, %134, %cst_26 [1] : vector<16x64xf32> to vector<16xf32>
    %136 = vector.shape_cast %135 : vector<16xf32> to vector<16x1xf32>
    %137 = vector.extract_strided_slice %40 {offsets = [1, 0, 0], sizes = [1, 16, 64], strides = [1, 1, 1]} : vector<4x16x64xf32> to vector<1x16x64xf32>
    %138 = vector.shape_cast %137 : vector<1x16x64xf32> to vector<16x64xf32>
    %139 = vector.extract_strided_slice %41 {offsets = [3, 0, 0], sizes = [1, 16, 64], strides = [1, 1, 1]} : vector<4x16x64xf32> to vector<1x16x64xf32>
    %140 = vector.shape_cast %139 : vector<1x16x64xf32> to vector<16x64xf32>
    %141 = arith.mulf %138, %140 : vector<16x64xf32>
    %cst_27 = arith.constant dense<0.000000e+00> : vector<16xf32>
    %142 = vector.multi_reduction <add>, %141, %cst_27 [1] : vector<16x64xf32> to vector<16xf32>
    %143 = vector.shape_cast %142 : vector<16xf32> to vector<16x1xf32>
    %144 = tpu.concatenate %122, %129, %136, %143 in 1 : vector<16x1xf32>, vector<16x1xf32>, vector<16x1xf32>, vector<16x1xf32> -> vector<16x4xf32>
    %cst_28 = arith.constant 1.250000e-01 : f32
    %145 = vector.broadcast %cst_28 : f32 to vector<16x4xf32>
    %146 = arith.mulf %144, %145 : vector<16x4xf32>
    %cst_29 = arith.constant dense<0xFF800000> : vector<16xf32>
    %147 = vector.multi_reduction <maximumf>, %146, %cst_29 [1] : vector<16x4xf32> to vector<16xf32>
    %148 = vector.shape_cast %147 : vector<16xf32> to vector<16x1xf32>
    %149 = vector.broadcast %148 : vector<16x1xf32> to vector<16x4xf32>
    %150 = arith.subf %146, %149 : vector<16x4xf32>
    %151 = math.exp %150 : vector<16x4xf32>
    %cst_30 = arith.constant dense<0.000000e+00> : vector<16xf32>
    %152 = vector.multi_reduction <add>, %151, %cst_30 [1] : vector<16x4xf32> to vector<16xf32>
    %153 = vector.shape_cast %152 : vector<16xf32> to vector<16x1xf32>
    %154 = tpu.reciprocal %153 {approx = true} : vector<16x1xf32> -> vector<16x1xf32>
    %155 = vector.broadcast %154 : vector<16x1xf32> to vector<16x4xf32>
    %156 = arith.mulf %151, %155 : vector<16x4xf32>
    %157 = vector.extract_strided_slice %156 {offsets = [0, 0], sizes = [16, 1], strides = [1, 1]} : vector<16x4xf32> to vector<16x1xf32>
    %158 = vector.extract_strided_slice %42 {offsets = [0, 0, 0], sizes = [1, 16, 64], strides = [1, 1, 1]} : vector<4x16x64xf32> to vector<1x16x64xf32>
    %159 = vector.shape_cast %158 : vector<1x16x64xf32> to vector<16x64xf32>
    %160 = vector.broadcast %157 : vector<16x1xf32> to vector<16x64xf32>
    %161 = arith.mulf %160, %159 : vector<16x64xf32>
    %162 = vector.extract_strided_slice %156 {offsets = [0, 1], sizes = [16, 1], strides = [1, 1]} : vector<16x4xf32> to vector<16x1xf32>
    %163 = vector.extract_strided_slice %42 {offsets = [1, 0, 0], sizes = [1, 16, 64], strides = [1, 1, 1]} : vector<4x16x64xf32> to vector<1x16x64xf32>
    %164 = vector.shape_cast %163 : vector<1x16x64xf32> to vector<16x64xf32>
    %165 = vector.broadcast %162 : vector<16x1xf32> to vector<16x64xf32>
    %166 = arith.mulf %165, %164 : vector<16x64xf32>
    %167 = arith.addf %161, %166 : vector<16x64xf32>
    %168 = vector.extract_strided_slice %156 {offsets = [0, 2], sizes = [16, 1], strides = [1, 1]} : vector<16x4xf32> to vector<16x1xf32>
    %169 = vector.extract_strided_slice %42 {offsets = [2, 0, 0], sizes = [1, 16, 64], strides = [1, 1, 1]} : vector<4x16x64xf32> to vector<1x16x64xf32>
    %170 = vector.shape_cast %169 : vector<1x16x64xf32> to vector<16x64xf32>
    %171 = vector.broadcast %168 : vector<16x1xf32> to vector<16x64xf32>
    %172 = arith.mulf %171, %170 : vector<16x64xf32>
    %173 = arith.addf %167, %172 : vector<16x64xf32>
    %174 = vector.extract_strided_slice %156 {offsets = [0, 3], sizes = [16, 1], strides = [1, 1]} : vector<16x4xf32> to vector<16x1xf32>
    %175 = vector.extract_strided_slice %42 {offsets = [3, 0, 0], sizes = [1, 16, 64], strides = [1, 1, 1]} : vector<4x16x64xf32> to vector<1x16x64xf32>
    %176 = vector.shape_cast %175 : vector<1x16x64xf32> to vector<16x64xf32>
    %177 = vector.broadcast %174 : vector<16x1xf32> to vector<16x64xf32>
    %178 = arith.mulf %177, %176 : vector<16x64xf32>
    %179 = arith.addf %173, %178 : vector<16x64xf32>
    %180 = vector.extract_strided_slice %48 {offsets = [1, 0, 0], sizes = [1, 16, 64], strides = [1, 1, 1]} : vector<4x16x64xf32> to vector<1x16x64xf32>
    %181 = vector.shape_cast %180 : vector<1x16x64xf32> to vector<16x64xf32>
    %182 = arith.mulf %179, %181 : vector<16x64xf32>
    %183 = vector.extract_strided_slice %40 {offsets = [2, 0, 0], sizes = [1, 16, 64], strides = [1, 1, 1]} : vector<4x16x64xf32> to vector<1x16x64xf32>
    %184 = vector.shape_cast %183 : vector<1x16x64xf32> to vector<16x64xf32>
    %185 = vector.extract_strided_slice %41 {offsets = [0, 0, 0], sizes = [1, 16, 64], strides = [1, 1, 1]} : vector<4x16x64xf32> to vector<1x16x64xf32>
    %186 = vector.shape_cast %185 : vector<1x16x64xf32> to vector<16x64xf32>
    %187 = arith.mulf %184, %186 : vector<16x64xf32>
    %cst_31 = arith.constant dense<0.000000e+00> : vector<16xf32>
    %188 = vector.multi_reduction <add>, %187, %cst_31 [1] : vector<16x64xf32> to vector<16xf32>
    %189 = vector.shape_cast %188 : vector<16xf32> to vector<16x1xf32>
    %190 = vector.extract_strided_slice %40 {offsets = [2, 0, 0], sizes = [1, 16, 64], strides = [1, 1, 1]} : vector<4x16x64xf32> to vector<1x16x64xf32>
    %191 = vector.shape_cast %190 : vector<1x16x64xf32> to vector<16x64xf32>
    %192 = vector.extract_strided_slice %41 {offsets = [1, 0, 0], sizes = [1, 16, 64], strides = [1, 1, 1]} : vector<4x16x64xf32> to vector<1x16x64xf32>
    %193 = vector.shape_cast %192 : vector<1x16x64xf32> to vector<16x64xf32>
    %194 = arith.mulf %191, %193 : vector<16x64xf32>
    %cst_32 = arith.constant dense<0.000000e+00> : vector<16xf32>
    %195 = vector.multi_reduction <add>, %194, %cst_32 [1] : vector<16x64xf32> to vector<16xf32>
    %196 = vector.shape_cast %195 : vector<16xf32> to vector<16x1xf32>
    %197 = vector.extract_strided_slice %40 {offsets = [2, 0, 0], sizes = [1, 16, 64], strides = [1, 1, 1]} : vector<4x16x64xf32> to vector<1x16x64xf32>
    %198 = vector.shape_cast %197 : vector<1x16x64xf32> to vector<16x64xf32>
    %199 = vector.extract_strided_slice %41 {offsets = [2, 0, 0], sizes = [1, 16, 64], strides = [1, 1, 1]} : vector<4x16x64xf32> to vector<1x16x64xf32>
    %200 = vector.shape_cast %199 : vector<1x16x64xf32> to vector<16x64xf32>
    %201 = arith.mulf %198, %200 : vector<16x64xf32>
    %cst_33 = arith.constant dense<0.000000e+00> : vector<16xf32>
    %202 = vector.multi_reduction <add>, %201, %cst_33 [1] : vector<16x64xf32> to vector<16xf32>
    %203 = vector.shape_cast %202 : vector<16xf32> to vector<16x1xf32>
    %204 = vector.extract_strided_slice %40 {offsets = [2, 0, 0], sizes = [1, 16, 64], strides = [1, 1, 1]} : vector<4x16x64xf32> to vector<1x16x64xf32>
    %205 = vector.shape_cast %204 : vector<1x16x64xf32> to vector<16x64xf32>
    %206 = vector.extract_strided_slice %41 {offsets = [3, 0, 0], sizes = [1, 16, 64], strides = [1, 1, 1]} : vector<4x16x64xf32> to vector<1x16x64xf32>
    %207 = vector.shape_cast %206 : vector<1x16x64xf32> to vector<16x64xf32>
    %208 = arith.mulf %205, %207 : vector<16x64xf32>
    %cst_34 = arith.constant dense<0.000000e+00> : vector<16xf32>
    %209 = vector.multi_reduction <add>, %208, %cst_34 [1] : vector<16x64xf32> to vector<16xf32>
    %210 = vector.shape_cast %209 : vector<16xf32> to vector<16x1xf32>
    %211 = tpu.concatenate %189, %196, %203, %210 in 1 : vector<16x1xf32>, vector<16x1xf32>, vector<16x1xf32>, vector<16x1xf32> -> vector<16x4xf32>
    %cst_35 = arith.constant 1.250000e-01 : f32
    %212 = vector.broadcast %cst_35 : f32 to vector<16x4xf32>
    %213 = arith.mulf %211, %212 : vector<16x4xf32>
    %cst_36 = arith.constant dense<0xFF800000> : vector<16xf32>
    %214 = vector.multi_reduction <maximumf>, %213, %cst_36 [1] : vector<16x4xf32> to vector<16xf32>
    %215 = vector.shape_cast %214 : vector<16xf32> to vector<16x1xf32>
    %216 = vector.broadcast %215 : vector<16x1xf32> to vector<16x4xf32>
    %217 = arith.subf %213, %216 : vector<16x4xf32>
    %218 = math.exp %217 : vector<16x4xf32>
    %cst_37 = arith.constant dense<0.000000e+00> : vector<16xf32>
    %219 = vector.multi_reduction <add>, %218, %cst_37 [1] : vector<16x4xf32> to vector<16xf32>
    %220 = vector.shape_cast %219 : vector<16xf32> to vector<16x1xf32>
    %221 = tpu.reciprocal %220 {approx = true} : vector<16x1xf32> -> vector<16x1xf32>
    %222 = vector.broadcast %221 : vector<16x1xf32> to vector<16x4xf32>
    %223 = arith.mulf %218, %222 : vector<16x4xf32>
    %224 = vector.extract_strided_slice %223 {offsets = [0, 0], sizes = [16, 1], strides = [1, 1]} : vector<16x4xf32> to vector<16x1xf32>
    %225 = vector.extract_strided_slice %42 {offsets = [0, 0, 0], sizes = [1, 16, 64], strides = [1, 1, 1]} : vector<4x16x64xf32> to vector<1x16x64xf32>
    %226 = vector.shape_cast %225 : vector<1x16x64xf32> to vector<16x64xf32>
    %227 = vector.broadcast %224 : vector<16x1xf32> to vector<16x64xf32>
    %228 = arith.mulf %227, %226 : vector<16x64xf32>
    %229 = vector.extract_strided_slice %223 {offsets = [0, 1], sizes = [16, 1], strides = [1, 1]} : vector<16x4xf32> to vector<16x1xf32>
    %230 = vector.extract_strided_slice %42 {offsets = [1, 0, 0], sizes = [1, 16, 64], strides = [1, 1, 1]} : vector<4x16x64xf32> to vector<1x16x64xf32>
    %231 = vector.shape_cast %230 : vector<1x16x64xf32> to vector<16x64xf32>
    %232 = vector.broadcast %229 : vector<16x1xf32> to vector<16x64xf32>
    %233 = arith.mulf %232, %231 : vector<16x64xf32>
    %234 = arith.addf %228, %233 : vector<16x64xf32>
    %235 = vector.extract_strided_slice %223 {offsets = [0, 2], sizes = [16, 1], strides = [1, 1]} : vector<16x4xf32> to vector<16x1xf32>
    %236 = vector.extract_strided_slice %42 {offsets = [2, 0, 0], sizes = [1, 16, 64], strides = [1, 1, 1]} : vector<4x16x64xf32> to vector<1x16x64xf32>
    %237 = vector.shape_cast %236 : vector<1x16x64xf32> to vector<16x64xf32>
    %238 = vector.broadcast %235 : vector<16x1xf32> to vector<16x64xf32>
    %239 = arith.mulf %238, %237 : vector<16x64xf32>
    %240 = arith.addf %234, %239 : vector<16x64xf32>
    %241 = vector.extract_strided_slice %223 {offsets = [0, 3], sizes = [16, 1], strides = [1, 1]} : vector<16x4xf32> to vector<16x1xf32>
    %242 = vector.extract_strided_slice %42 {offsets = [3, 0, 0], sizes = [1, 16, 64], strides = [1, 1, 1]} : vector<4x16x64xf32> to vector<1x16x64xf32>
    %243 = vector.shape_cast %242 : vector<1x16x64xf32> to vector<16x64xf32>
    %244 = vector.broadcast %241 : vector<16x1xf32> to vector<16x64xf32>
    %245 = arith.mulf %244, %243 : vector<16x64xf32>
    %246 = arith.addf %240, %245 : vector<16x64xf32>
    %247 = vector.extract_strided_slice %48 {offsets = [2, 0, 0], sizes = [1, 16, 64], strides = [1, 1, 1]} : vector<4x16x64xf32> to vector<1x16x64xf32>
    %248 = vector.shape_cast %247 : vector<1x16x64xf32> to vector<16x64xf32>
    %249 = arith.mulf %246, %248 : vector<16x64xf32>
    %250 = vector.extract_strided_slice %40 {offsets = [3, 0, 0], sizes = [1, 16, 64], strides = [1, 1, 1]} : vector<4x16x64xf32> to vector<1x16x64xf32>
    %251 = vector.shape_cast %250 : vector<1x16x64xf32> to vector<16x64xf32>
    %252 = vector.extract_strided_slice %41 {offsets = [0, 0, 0], sizes = [1, 16, 64], strides = [1, 1, 1]} : vector<4x16x64xf32> to vector<1x16x64xf32>
    %253 = vector.shape_cast %252 : vector<1x16x64xf32> to vector<16x64xf32>
    %254 = arith.mulf %251, %253 : vector<16x64xf32>
    %cst_38 = arith.constant dense<0.000000e+00> : vector<16xf32>
    %255 = vector.multi_reduction <add>, %254, %cst_38 [1] : vector<16x64xf32> to vector<16xf32>
    %256 = vector.shape_cast %255 : vector<16xf32> to vector<16x1xf32>
    %257 = vector.extract_strided_slice %40 {offsets = [3, 0, 0], sizes = [1, 16, 64], strides = [1, 1, 1]} : vector<4x16x64xf32> to vector<1x16x64xf32>
    %258 = vector.shape_cast %257 : vector<1x16x64xf32> to vector<16x64xf32>
    %259 = vector.extract_strided_slice %41 {offsets = [1, 0, 0], sizes = [1, 16, 64], strides = [1, 1, 1]} : vector<4x16x64xf32> to vector<1x16x64xf32>
    %260 = vector.shape_cast %259 : vector<1x16x64xf32> to vector<16x64xf32>
    %261 = arith.mulf %258, %260 : vector<16x64xf32>
    %cst_39 = arith.constant dense<0.000000e+00> : vector<16xf32>
    %262 = vector.multi_reduction <add>, %261, %cst_39 [1] : vector<16x64xf32> to vector<16xf32>
    %263 = vector.shape_cast %262 : vector<16xf32> to vector<16x1xf32>
    %264 = vector.extract_strided_slice %40 {offsets = [3, 0, 0], sizes = [1, 16, 64], strides = [1, 1, 1]} : vector<4x16x64xf32> to vector<1x16x64xf32>
    %265 = vector.shape_cast %264 : vector<1x16x64xf32> to vector<16x64xf32>
    %266 = vector.extract_strided_slice %41 {offsets = [2, 0, 0], sizes = [1, 16, 64], strides = [1, 1, 1]} : vector<4x16x64xf32> to vector<1x16x64xf32>
    %267 = vector.shape_cast %266 : vector<1x16x64xf32> to vector<16x64xf32>
    %268 = arith.mulf %265, %267 : vector<16x64xf32>
    %cst_40 = arith.constant dense<0.000000e+00> : vector<16xf32>
    %269 = vector.multi_reduction <add>, %268, %cst_40 [1] : vector<16x64xf32> to vector<16xf32>
    %270 = vector.shape_cast %269 : vector<16xf32> to vector<16x1xf32>
    %271 = vector.extract_strided_slice %40 {offsets = [3, 0, 0], sizes = [1, 16, 64], strides = [1, 1, 1]} : vector<4x16x64xf32> to vector<1x16x64xf32>
    %272 = vector.shape_cast %271 : vector<1x16x64xf32> to vector<16x64xf32>
    %273 = vector.extract_strided_slice %41 {offsets = [3, 0, 0], sizes = [1, 16, 64], strides = [1, 1, 1]} : vector<4x16x64xf32> to vector<1x16x64xf32>
    %274 = vector.shape_cast %273 : vector<1x16x64xf32> to vector<16x64xf32>
    %275 = arith.mulf %272, %274 : vector<16x64xf32>
    %cst_41 = arith.constant dense<0.000000e+00> : vector<16xf32>
    %276 = vector.multi_reduction <add>, %275, %cst_41 [1] : vector<16x64xf32> to vector<16xf32>
    %277 = vector.shape_cast %276 : vector<16xf32> to vector<16x1xf32>
    %278 = tpu.concatenate %256, %263, %270, %277 in 1 : vector<16x1xf32>, vector<16x1xf32>, vector<16x1xf32>, vector<16x1xf32> -> vector<16x4xf32>
    %cst_42 = arith.constant 1.250000e-01 : f32
    %279 = vector.broadcast %cst_42 : f32 to vector<16x4xf32>
    %280 = arith.mulf %278, %279 : vector<16x4xf32>
    %cst_43 = arith.constant dense<0xFF800000> : vector<16xf32>
    %281 = vector.multi_reduction <maximumf>, %280, %cst_43 [1] : vector<16x4xf32> to vector<16xf32>
    %282 = vector.shape_cast %281 : vector<16xf32> to vector<16x1xf32>
    %283 = vector.broadcast %282 : vector<16x1xf32> to vector<16x4xf32>
    %284 = arith.subf %280, %283 : vector<16x4xf32>
    %285 = math.exp %284 : vector<16x4xf32>
    %cst_44 = arith.constant dense<0.000000e+00> : vector<16xf32>
    %286 = vector.multi_reduction <add>, %285, %cst_44 [1] : vector<16x4xf32> to vector<16xf32>
    %287 = vector.shape_cast %286 : vector<16xf32> to vector<16x1xf32>
    %288 = tpu.reciprocal %287 {approx = true} : vector<16x1xf32> -> vector<16x1xf32>
    %289 = vector.broadcast %288 : vector<16x1xf32> to vector<16x4xf32>
    %290 = arith.mulf %285, %289 : vector<16x4xf32>
    %291 = vector.extract_strided_slice %290 {offsets = [0, 0], sizes = [16, 1], strides = [1, 1]} : vector<16x4xf32> to vector<16x1xf32>
    %292 = vector.extract_strided_slice %42 {offsets = [0, 0, 0], sizes = [1, 16, 64], strides = [1, 1, 1]} : vector<4x16x64xf32> to vector<1x16x64xf32>
    %293 = vector.shape_cast %292 : vector<1x16x64xf32> to vector<16x64xf32>
    %294 = vector.broadcast %291 : vector<16x1xf32> to vector<16x64xf32>
    %295 = arith.mulf %294, %293 : vector<16x64xf32>
    %296 = vector.extract_strided_slice %290 {offsets = [0, 1], sizes = [16, 1], strides = [1, 1]} : vector<16x4xf32> to vector<16x1xf32>
    %297 = vector.extract_strided_slice %42 {offsets = [1, 0, 0], sizes = [1, 16, 64], strides = [1, 1, 1]} : vector<4x16x64xf32> to vector<1x16x64xf32>
    %298 = vector.shape_cast %297 : vector<1x16x64xf32> to vector<16x64xf32>
    %299 = vector.broadcast %296 : vector<16x1xf32> to vector<16x64xf32>
    %300 = arith.mulf %299, %298 : vector<16x64xf32>
    %301 = arith.addf %295, %300 : vector<16x64xf32>
    %302 = vector.extract_strided_slice %290 {offsets = [0, 2], sizes = [16, 1], strides = [1, 1]} : vector<16x4xf32> to vector<16x1xf32>
    %303 = vector.extract_strided_slice %42 {offsets = [2, 0, 0], sizes = [1, 16, 64], strides = [1, 1, 1]} : vector<4x16x64xf32> to vector<1x16x64xf32>
    %304 = vector.shape_cast %303 : vector<1x16x64xf32> to vector<16x64xf32>
    %305 = vector.broadcast %302 : vector<16x1xf32> to vector<16x64xf32>
    %306 = arith.mulf %305, %304 : vector<16x64xf32>
    %307 = arith.addf %301, %306 : vector<16x64xf32>
    %308 = vector.extract_strided_slice %290 {offsets = [0, 3], sizes = [16, 1], strides = [1, 1]} : vector<16x4xf32> to vector<16x1xf32>
    %309 = vector.extract_strided_slice %42 {offsets = [3, 0, 0], sizes = [1, 16, 64], strides = [1, 1, 1]} : vector<4x16x64xf32> to vector<1x16x64xf32>
    %310 = vector.shape_cast %309 : vector<1x16x64xf32> to vector<16x64xf32>
    %311 = vector.broadcast %308 : vector<16x1xf32> to vector<16x64xf32>
    %312 = arith.mulf %311, %310 : vector<16x64xf32>
    %313 = arith.addf %307, %312 : vector<16x64xf32>
    %314 = vector.extract_strided_slice %48 {offsets = [3, 0, 0], sizes = [1, 16, 64], strides = [1, 1, 1]} : vector<4x16x64xf32> to vector<1x16x64xf32>
    %315 = vector.shape_cast %314 : vector<1x16x64xf32> to vector<16x64xf32>
    %316 = arith.mulf %313, %315 : vector<16x64xf32>
    %317 = vector.shape_cast %115 : vector<16x64xf32> to vector<1x16x64xf32>
    %318 = vector.shape_cast %182 : vector<16x64xf32> to vector<1x16x64xf32>
    %319 = vector.shape_cast %249 : vector<16x64xf32> to vector<1x16x64xf32>
    %320 = vector.shape_cast %316 : vector<16x64xf32> to vector<1x16x64xf32>
    %321 = tpu.concatenate %317, %318, %319, %320 in 0 : vector<1x16x64xf32>, vector<1x16x64xf32>, vector<1x16x64xf32>, vector<1x16x64xf32> -> vector<4x16x64xf32>
    %322 = vector.extract_strided_slice %39 {offsets = [0, 0, 64], sizes = [4, 16, 64], strides = [1, 1, 1]} : vector<4x16x512xf32> to vector<4x16x64xf32>
    %323 = vector.extract_strided_slice %39 {offsets = [0, 0, 192], sizes = [4, 16, 64], strides = [1, 1, 1]} : vector<4x16x512xf32> to vector<4x16x64xf32>
    %324 = vector.extract_strided_slice %39 {offsets = [0, 0, 320], sizes = [4, 16, 64], strides = [1, 1, 1]} : vector<4x16x512xf32> to vector<4x16x64xf32>
    %325 = vector.extract_strided_slice %39 {offsets = [0, 0, 448], sizes = [4, 16, 64], strides = [1, 1, 1]} : vector<4x16x512xf32> to vector<4x16x64xf32>
    %326 = arith.negf %325 : vector<4x16x64xf32>
    %327 = math.exp %326 : vector<4x16x64xf32>
    %cst_45 = arith.constant 1.000000e+00 : f32
    %328 = vector.broadcast %cst_45 : f32 to vector<4x16x64xf32>
    %329 = arith.addf %328, %327 : vector<4x16x64xf32>
    %330 = arith.divf %328, %329 : vector<4x16x64xf32>
    %331 = vector.extract_strided_slice %322 {offsets = [0, 0, 0], sizes = [1, 16, 64], strides = [1, 1, 1]} : vector<4x16x64xf32> to vector<1x16x64xf32>
    %332 = vector.shape_cast %331 : vector<1x16x64xf32> to vector<16x64xf32>
    %333 = vector.extract_strided_slice %323 {offsets = [0, 0, 0], sizes = [1, 16, 64], strides = [1, 1, 1]} : vector<4x16x64xf32> to vector<1x16x64xf32>
    %334 = vector.shape_cast %333 : vector<1x16x64xf32> to vector<16x64xf32>
    %335 = arith.mulf %332, %334 : vector<16x64xf32>
    %cst_46 = arith.constant dense<0.000000e+00> : vector<16xf32>
    %336 = vector.multi_reduction <add>, %335, %cst_46 [1] : vector<16x64xf32> to vector<16xf32>
    %337 = vector.shape_cast %336 : vector<16xf32> to vector<16x1xf32>
    %338 = vector.extract_strided_slice %322 {offsets = [0, 0, 0], sizes = [1, 16, 64], strides = [1, 1, 1]} : vector<4x16x64xf32> to vector<1x16x64xf32>
    %339 = vector.shape_cast %338 : vector<1x16x64xf32> to vector<16x64xf32>
    %340 = vector.extract_strided_slice %323 {offsets = [1, 0, 0], sizes = [1, 16, 64], strides = [1, 1, 1]} : vector<4x16x64xf32> to vector<1x16x64xf32>
    %341 = vector.shape_cast %340 : vector<1x16x64xf32> to vector<16x64xf32>
    %342 = arith.mulf %339, %341 : vector<16x64xf32>
    %cst_47 = arith.constant dense<0.000000e+00> : vector<16xf32>
    %343 = vector.multi_reduction <add>, %342, %cst_47 [1] : vector<16x64xf32> to vector<16xf32>
    %344 = vector.shape_cast %343 : vector<16xf32> to vector<16x1xf32>
    %345 = vector.extract_strided_slice %322 {offsets = [0, 0, 0], sizes = [1, 16, 64], strides = [1, 1, 1]} : vector<4x16x64xf32> to vector<1x16x64xf32>
    %346 = vector.shape_cast %345 : vector<1x16x64xf32> to vector<16x64xf32>
    %347 = vector.extract_strided_slice %323 {offsets = [2, 0, 0], sizes = [1, 16, 64], strides = [1, 1, 1]} : vector<4x16x64xf32> to vector<1x16x64xf32>
    %348 = vector.shape_cast %347 : vector<1x16x64xf32> to vector<16x64xf32>
    %349 = arith.mulf %346, %348 : vector<16x64xf32>
    %cst_48 = arith.constant dense<0.000000e+00> : vector<16xf32>
    %350 = vector.multi_reduction <add>, %349, %cst_48 [1] : vector<16x64xf32> to vector<16xf32>
    %351 = vector.shape_cast %350 : vector<16xf32> to vector<16x1xf32>
    %352 = vector.extract_strided_slice %322 {offsets = [0, 0, 0], sizes = [1, 16, 64], strides = [1, 1, 1]} : vector<4x16x64xf32> to vector<1x16x64xf32>
    %353 = vector.shape_cast %352 : vector<1x16x64xf32> to vector<16x64xf32>
    %354 = vector.extract_strided_slice %323 {offsets = [3, 0, 0], sizes = [1, 16, 64], strides = [1, 1, 1]} : vector<4x16x64xf32> to vector<1x16x64xf32>
    %355 = vector.shape_cast %354 : vector<1x16x64xf32> to vector<16x64xf32>
    %356 = arith.mulf %353, %355 : vector<16x64xf32>
    %cst_49 = arith.constant dense<0.000000e+00> : vector<16xf32>
    %357 = vector.multi_reduction <add>, %356, %cst_49 [1] : vector<16x64xf32> to vector<16xf32>
    %358 = vector.shape_cast %357 : vector<16xf32> to vector<16x1xf32>
    %359 = tpu.concatenate %337, %344, %351, %358 in 1 : vector<16x1xf32>, vector<16x1xf32>, vector<16x1xf32>, vector<16x1xf32> -> vector<16x4xf32>
    %cst_50 = arith.constant 1.250000e-01 : f32
    %360 = vector.broadcast %cst_50 : f32 to vector<16x4xf32>
    %361 = arith.mulf %359, %360 : vector<16x4xf32>
    %cst_51 = arith.constant dense<0xFF800000> : vector<16xf32>
    %362 = vector.multi_reduction <maximumf>, %361, %cst_51 [1] : vector<16x4xf32> to vector<16xf32>
    %363 = vector.shape_cast %362 : vector<16xf32> to vector<16x1xf32>
    %364 = vector.broadcast %363 : vector<16x1xf32> to vector<16x4xf32>
    %365 = arith.subf %361, %364 : vector<16x4xf32>
    %366 = math.exp %365 : vector<16x4xf32>
    %cst_52 = arith.constant dense<0.000000e+00> : vector<16xf32>
    %367 = vector.multi_reduction <add>, %366, %cst_52 [1] : vector<16x4xf32> to vector<16xf32>
    %368 = vector.shape_cast %367 : vector<16xf32> to vector<16x1xf32>
    %369 = tpu.reciprocal %368 {approx = true} : vector<16x1xf32> -> vector<16x1xf32>
    %370 = vector.broadcast %369 : vector<16x1xf32> to vector<16x4xf32>
    %371 = arith.mulf %366, %370 : vector<16x4xf32>
    %372 = vector.extract_strided_slice %371 {offsets = [0, 0], sizes = [16, 1], strides = [1, 1]} : vector<16x4xf32> to vector<16x1xf32>
    %373 = vector.extract_strided_slice %324 {offsets = [0, 0, 0], sizes = [1, 16, 64], strides = [1, 1, 1]} : vector<4x16x64xf32> to vector<1x16x64xf32>
    %374 = vector.shape_cast %373 : vector<1x16x64xf32> to vector<16x64xf32>
    %375 = vector.broadcast %372 : vector<16x1xf32> to vector<16x64xf32>
    %376 = arith.mulf %375, %374 : vector<16x64xf32>
    %377 = vector.extract_strided_slice %371 {offsets = [0, 1], sizes = [16, 1], strides = [1, 1]} : vector<16x4xf32> to vector<16x1xf32>
    %378 = vector.extract_strided_slice %324 {offsets = [1, 0, 0], sizes = [1, 16, 64], strides = [1, 1, 1]} : vector<4x16x64xf32> to vector<1x16x64xf32>
    %379 = vector.shape_cast %378 : vector<1x16x64xf32> to vector<16x64xf32>
    %380 = vector.broadcast %377 : vector<16x1xf32> to vector<16x64xf32>
    %381 = arith.mulf %380, %379 : vector<16x64xf32>
    %382 = arith.addf %376, %381 : vector<16x64xf32>
    %383 = vector.extract_strided_slice %371 {offsets = [0, 2], sizes = [16, 1], strides = [1, 1]} : vector<16x4xf32> to vector<16x1xf32>
    %384 = vector.extract_strided_slice %324 {offsets = [2, 0, 0], sizes = [1, 16, 64], strides = [1, 1, 1]} : vector<4x16x64xf32> to vector<1x16x64xf32>
    %385 = vector.shape_cast %384 : vector<1x16x64xf32> to vector<16x64xf32>
    %386 = vector.broadcast %383 : vector<16x1xf32> to vector<16x64xf32>
    %387 = arith.mulf %386, %385 : vector<16x64xf32>
    %388 = arith.addf %382, %387 : vector<16x64xf32>
    %389 = vector.extract_strided_slice %371 {offsets = [0, 3], sizes = [16, 1], strides = [1, 1]} : vector<16x4xf32> to vector<16x1xf32>
    %390 = vector.extract_strided_slice %324 {offsets = [3, 0, 0], sizes = [1, 16, 64], strides = [1, 1, 1]} : vector<4x16x64xf32> to vector<1x16x64xf32>
    %391 = vector.shape_cast %390 : vector<1x16x64xf32> to vector<16x64xf32>
    %392 = vector.broadcast %389 : vector<16x1xf32> to vector<16x64xf32>
    %393 = arith.mulf %392, %391 : vector<16x64xf32>
    %394 = arith.addf %388, %393 : vector<16x64xf32>
    %395 = vector.extract_strided_slice %330 {offsets = [0, 0, 0], sizes = [1, 16, 64], strides = [1, 1, 1]} : vector<4x16x64xf32> to vector<1x16x64xf32>
    %396 = vector.shape_cast %395 : vector<1x16x64xf32> to vector<16x64xf32>
    %397 = arith.mulf %394, %396 : vector<16x64xf32>
    %398 = vector.extract_strided_slice %322 {offsets = [1, 0, 0], sizes = [1, 16, 64], strides = [1, 1, 1]} : vector<4x16x64xf32> to vector<1x16x64xf32>
    %399 = vector.shape_cast %398 : vector<1x16x64xf32> to vector<16x64xf32>
    %400 = vector.extract_strided_slice %323 {offsets = [0, 0, 0], sizes = [1, 16, 64], strides = [1, 1, 1]} : vector<4x16x64xf32> to vector<1x16x64xf32>
    %401 = vector.shape_cast %400 : vector<1x16x64xf32> to vector<16x64xf32>
    %402 = arith.mulf %399, %401 : vector<16x64xf32>
    %cst_53 = arith.constant dense<0.000000e+00> : vector<16xf32>
    %403 = vector.multi_reduction <add>, %402, %cst_53 [1] : vector<16x64xf32> to vector<16xf32>
    %404 = vector.shape_cast %403 : vector<16xf32> to vector<16x1xf32>
    %405 = vector.extract_strided_slice %322 {offsets = [1, 0, 0], sizes = [1, 16, 64], strides = [1, 1, 1]} : vector<4x16x64xf32> to vector<1x16x64xf32>
    %406 = vector.shape_cast %405 : vector<1x16x64xf32> to vector<16x64xf32>
    %407 = vector.extract_strided_slice %323 {offsets = [1, 0, 0], sizes = [1, 16, 64], strides = [1, 1, 1]} : vector<4x16x64xf32> to vector<1x16x64xf32>
    %408 = vector.shape_cast %407 : vector<1x16x64xf32> to vector<16x64xf32>
    %409 = arith.mulf %406, %408 : vector<16x64xf32>
    %cst_54 = arith.constant dense<0.000000e+00> : vector<16xf32>
    %410 = vector.multi_reduction <add>, %409, %cst_54 [1] : vector<16x64xf32> to vector<16xf32>
    %411 = vector.shape_cast %410 : vector<16xf32> to vector<16x1xf32>
    %412 = vector.extract_strided_slice %322 {offsets = [1, 0, 0], sizes = [1, 16, 64], strides = [1, 1, 1]} : vector<4x16x64xf32> to vector<1x16x64xf32>
    %413 = vector.shape_cast %412 : vector<1x16x64xf32> to vector<16x64xf32>
    %414 = vector.extract_strided_slice %323 {offsets = [2, 0, 0], sizes = [1, 16, 64], strides = [1, 1, 1]} : vector<4x16x64xf32> to vector<1x16x64xf32>
    %415 = vector.shape_cast %414 : vector<1x16x64xf32> to vector<16x64xf32>
    %416 = arith.mulf %413, %415 : vector<16x64xf32>
    %cst_55 = arith.constant dense<0.000000e+00> : vector<16xf32>
    %417 = vector.multi_reduction <add>, %416, %cst_55 [1] : vector<16x64xf32> to vector<16xf32>
    %418 = vector.shape_cast %417 : vector<16xf32> to vector<16x1xf32>
    %419 = vector.extract_strided_slice %322 {offsets = [1, 0, 0], sizes = [1, 16, 64], strides = [1, 1, 1]} : vector<4x16x64xf32> to vector<1x16x64xf32>
    %420 = vector.shape_cast %419 : vector<1x16x64xf32> to vector<16x64xf32>
    %421 = vector.extract_strided_slice %323 {offsets = [3, 0, 0], sizes = [1, 16, 64], strides = [1, 1, 1]} : vector<4x16x64xf32> to vector<1x16x64xf32>
    %422 = vector.shape_cast %421 : vector<1x16x64xf32> to vector<16x64xf32>
    %423 = arith.mulf %420, %422 : vector<16x64xf32>
    %cst_56 = arith.constant dense<0.000000e+00> : vector<16xf32>
    %424 = vector.multi_reduction <add>, %423, %cst_56 [1] : vector<16x64xf32> to vector<16xf32>
    %425 = vector.shape_cast %424 : vector<16xf32> to vector<16x1xf32>
    %426 = tpu.concatenate %404, %411, %418, %425 in 1 : vector<16x1xf32>, vector<16x1xf32>, vector<16x1xf32>, vector<16x1xf32> -> vector<16x4xf32>
    %cst_57 = arith.constant 1.250000e-01 : f32
    %427 = vector.broadcast %cst_57 : f32 to vector<16x4xf32>
    %428 = arith.mulf %426, %427 : vector<16x4xf32>
    %cst_58 = arith.constant dense<0xFF800000> : vector<16xf32>
    %429 = vector.multi_reduction <maximumf>, %428, %cst_58 [1] : vector<16x4xf32> to vector<16xf32>
    %430 = vector.shape_cast %429 : vector<16xf32> to vector<16x1xf32>
    %431 = vector.broadcast %430 : vector<16x1xf32> to vector<16x4xf32>
    %432 = arith.subf %428, %431 : vector<16x4xf32>
    %433 = math.exp %432 : vector<16x4xf32>
    %cst_59 = arith.constant dense<0.000000e+00> : vector<16xf32>
    %434 = vector.multi_reduction <add>, %433, %cst_59 [1] : vector<16x4xf32> to vector<16xf32>
    %435 = vector.shape_cast %434 : vector<16xf32> to vector<16x1xf32>
    %436 = tpu.reciprocal %435 {approx = true} : vector<16x1xf32> -> vector<16x1xf32>
    %437 = vector.broadcast %436 : vector<16x1xf32> to vector<16x4xf32>
    %438 = arith.mulf %433, %437 : vector<16x4xf32>
    %439 = vector.extract_strided_slice %438 {offsets = [0, 0], sizes = [16, 1], strides = [1, 1]} : vector<16x4xf32> to vector<16x1xf32>
    %440 = vector.extract_strided_slice %324 {offsets = [0, 0, 0], sizes = [1, 16, 64], strides = [1, 1, 1]} : vector<4x16x64xf32> to vector<1x16x64xf32>
    %441 = vector.shape_cast %440 : vector<1x16x64xf32> to vector<16x64xf32>
    %442 = vector.broadcast %439 : vector<16x1xf32> to vector<16x64xf32>
    %443 = arith.mulf %442, %441 : vector<16x64xf32>
    %444 = vector.extract_strided_slice %438 {offsets = [0, 1], sizes = [16, 1], strides = [1, 1]} : vector<16x4xf32> to vector<16x1xf32>
    %445 = vector.extract_strided_slice %324 {offsets = [1, 0, 0], sizes = [1, 16, 64], strides = [1, 1, 1]} : vector<4x16x64xf32> to vector<1x16x64xf32>
    %446 = vector.shape_cast %445 : vector<1x16x64xf32> to vector<16x64xf32>
    %447 = vector.broadcast %444 : vector<16x1xf32> to vector<16x64xf32>
    %448 = arith.mulf %447, %446 : vector<16x64xf32>
    %449 = arith.addf %443, %448 : vector<16x64xf32>
    %450 = vector.extract_strided_slice %438 {offsets = [0, 2], sizes = [16, 1], strides = [1, 1]} : vector<16x4xf32> to vector<16x1xf32>
    %451 = vector.extract_strided_slice %324 {offsets = [2, 0, 0], sizes = [1, 16, 64], strides = [1, 1, 1]} : vector<4x16x64xf32> to vector<1x16x64xf32>
    %452 = vector.shape_cast %451 : vector<1x16x64xf32> to vector<16x64xf32>
    %453 = vector.broadcast %450 : vector<16x1xf32> to vector<16x64xf32>
    %454 = arith.mulf %453, %452 : vector<16x64xf32>
    %455 = arith.addf %449, %454 : vector<16x64xf32>
    %456 = vector.extract_strided_slice %438 {offsets = [0, 3], sizes = [16, 1], strides = [1, 1]} : vector<16x4xf32> to vector<16x1xf32>
    %457 = vector.extract_strided_slice %324 {offsets = [3, 0, 0], sizes = [1, 16, 64], strides = [1, 1, 1]} : vector<4x16x64xf32> to vector<1x16x64xf32>
    %458 = vector.shape_cast %457 : vector<1x16x64xf32> to vector<16x64xf32>
    %459 = vector.broadcast %456 : vector<16x1xf32> to vector<16x64xf32>
    %460 = arith.mulf %459, %458 : vector<16x64xf32>
    %461 = arith.addf %455, %460 : vector<16x64xf32>
    %462 = vector.extract_strided_slice %330 {offsets = [1, 0, 0], sizes = [1, 16, 64], strides = [1, 1, 1]} : vector<4x16x64xf32> to vector<1x16x64xf32>
    %463 = vector.shape_cast %462 : vector<1x16x64xf32> to vector<16x64xf32>
    %464 = arith.mulf %461, %463 : vector<16x64xf32>
    %465 = vector.extract_strided_slice %322 {offsets = [2, 0, 0], sizes = [1, 16, 64], strides = [1, 1, 1]} : vector<4x16x64xf32> to vector<1x16x64xf32>
    %466 = vector.shape_cast %465 : vector<1x16x64xf32> to vector<16x64xf32>
    %467 = vector.extract_strided_slice %323 {offsets = [0, 0, 0], sizes = [1, 16, 64], strides = [1, 1, 1]} : vector<4x16x64xf32> to vector<1x16x64xf32>
    %468 = vector.shape_cast %467 : vector<1x16x64xf32> to vector<16x64xf32>
    %469 = arith.mulf %466, %468 : vector<16x64xf32>
    %cst_60 = arith.constant dense<0.000000e+00> : vector<16xf32>
    %470 = vector.multi_reduction <add>, %469, %cst_60 [1] : vector<16x64xf32> to vector<16xf32>
    %471 = vector.shape_cast %470 : vector<16xf32> to vector<16x1xf32>
    %472 = vector.extract_strided_slice %322 {offsets = [2, 0, 0], sizes = [1, 16, 64], strides = [1, 1, 1]} : vector<4x16x64xf32> to vector<1x16x64xf32>
    %473 = vector.shape_cast %472 : vector<1x16x64xf32> to vector<16x64xf32>
    %474 = vector.extract_strided_slice %323 {offsets = [1, 0, 0], sizes = [1, 16, 64], strides = [1, 1, 1]} : vector<4x16x64xf32> to vector<1x16x64xf32>
    %475 = vector.shape_cast %474 : vector<1x16x64xf32> to vector<16x64xf32>
    %476 = arith.mulf %473, %475 : vector<16x64xf32>
    %cst_61 = arith.constant dense<0.000000e+00> : vector<16xf32>
    %477 = vector.multi_reduction <add>, %476, %cst_61 [1] : vector<16x64xf32> to vector<16xf32>
    %478 = vector.shape_cast %477 : vector<16xf32> to vector<16x1xf32>
    %479 = vector.extract_strided_slice %322 {offsets = [2, 0, 0], sizes = [1, 16, 64], strides = [1, 1, 1]} : vector<4x16x64xf32> to vector<1x16x64xf32>
    %480 = vector.shape_cast %479 : vector<1x16x64xf32> to vector<16x64xf32>
    %481 = vector.extract_strided_slice %323 {offsets = [2, 0, 0], sizes = [1, 16, 64], strides = [1, 1, 1]} : vector<4x16x64xf32> to vector<1x16x64xf32>
    %482 = vector.shape_cast %481 : vector<1x16x64xf32> to vector<16x64xf32>
    %483 = arith.mulf %480, %482 : vector<16x64xf32>
    %cst_62 = arith.constant dense<0.000000e+00> : vector<16xf32>
    %484 = vector.multi_reduction <add>, %483, %cst_62 [1] : vector<16x64xf32> to vector<16xf32>
    %485 = vector.shape_cast %484 : vector<16xf32> to vector<16x1xf32>
    %486 = vector.extract_strided_slice %322 {offsets = [2, 0, 0], sizes = [1, 16, 64], strides = [1, 1, 1]} : vector<4x16x64xf32> to vector<1x16x64xf32>
    %487 = vector.shape_cast %486 : vector<1x16x64xf32> to vector<16x64xf32>
    %488 = vector.extract_strided_slice %323 {offsets = [3, 0, 0], sizes = [1, 16, 64], strides = [1, 1, 1]} : vector<4x16x64xf32> to vector<1x16x64xf32>
    %489 = vector.shape_cast %488 : vector<1x16x64xf32> to vector<16x64xf32>
    %490 = arith.mulf %487, %489 : vector<16x64xf32>
    %cst_63 = arith.constant dense<0.000000e+00> : vector<16xf32>
    %491 = vector.multi_reduction <add>, %490, %cst_63 [1] : vector<16x64xf32> to vector<16xf32>
    %492 = vector.shape_cast %491 : vector<16xf32> to vector<16x1xf32>
    %493 = tpu.concatenate %471, %478, %485, %492 in 1 : vector<16x1xf32>, vector<16x1xf32>, vector<16x1xf32>, vector<16x1xf32> -> vector<16x4xf32>
    %cst_64 = arith.constant 1.250000e-01 : f32
    %494 = vector.broadcast %cst_64 : f32 to vector<16x4xf32>
    %495 = arith.mulf %493, %494 : vector<16x4xf32>
    %cst_65 = arith.constant dense<0xFF800000> : vector<16xf32>
    %496 = vector.multi_reduction <maximumf>, %495, %cst_65 [1] : vector<16x4xf32> to vector<16xf32>
    %497 = vector.shape_cast %496 : vector<16xf32> to vector<16x1xf32>
    %498 = vector.broadcast %497 : vector<16x1xf32> to vector<16x4xf32>
    %499 = arith.subf %495, %498 : vector<16x4xf32>
    %500 = math.exp %499 : vector<16x4xf32>
    %cst_66 = arith.constant dense<0.000000e+00> : vector<16xf32>
    %501 = vector.multi_reduction <add>, %500, %cst_66 [1] : vector<16x4xf32> to vector<16xf32>
    %502 = vector.shape_cast %501 : vector<16xf32> to vector<16x1xf32>
    %503 = tpu.reciprocal %502 {approx = true} : vector<16x1xf32> -> vector<16x1xf32>
    %504 = vector.broadcast %503 : vector<16x1xf32> to vector<16x4xf32>
    %505 = arith.mulf %500, %504 : vector<16x4xf32>
    %506 = vector.extract_strided_slice %505 {offsets = [0, 0], sizes = [16, 1], strides = [1, 1]} : vector<16x4xf32> to vector<16x1xf32>
    %507 = vector.extract_strided_slice %324 {offsets = [0, 0, 0], sizes = [1, 16, 64], strides = [1, 1, 1]} : vector<4x16x64xf32> to vector<1x16x64xf32>
    %508 = vector.shape_cast %507 : vector<1x16x64xf32> to vector<16x64xf32>
    %509 = vector.broadcast %506 : vector<16x1xf32> to vector<16x64xf32>
    %510 = arith.mulf %509, %508 : vector<16x64xf32>
    %511 = vector.extract_strided_slice %505 {offsets = [0, 1], sizes = [16, 1], strides = [1, 1]} : vector<16x4xf32> to vector<16x1xf32>
    %512 = vector.extract_strided_slice %324 {offsets = [1, 0, 0], sizes = [1, 16, 64], strides = [1, 1, 1]} : vector<4x16x64xf32> to vector<1x16x64xf32>
    %513 = vector.shape_cast %512 : vector<1x16x64xf32> to vector<16x64xf32>
    %514 = vector.broadcast %511 : vector<16x1xf32> to vector<16x64xf32>
    %515 = arith.mulf %514, %513 : vector<16x64xf32>
    %516 = arith.addf %510, %515 : vector<16x64xf32>
    %517 = vector.extract_strided_slice %505 {offsets = [0, 2], sizes = [16, 1], strides = [1, 1]} : vector<16x4xf32> to vector<16x1xf32>
    %518 = vector.extract_strided_slice %324 {offsets = [2, 0, 0], sizes = [1, 16, 64], strides = [1, 1, 1]} : vector<4x16x64xf32> to vector<1x16x64xf32>
    %519 = vector.shape_cast %518 : vector<1x16x64xf32> to vector<16x64xf32>
    %520 = vector.broadcast %517 : vector<16x1xf32> to vector<16x64xf32>
    %521 = arith.mulf %520, %519 : vector<16x64xf32>
    %522 = arith.addf %516, %521 : vector<16x64xf32>
    %523 = vector.extract_strided_slice %505 {offsets = [0, 3], sizes = [16, 1], strides = [1, 1]} : vector<16x4xf32> to vector<16x1xf32>
    %524 = vector.extract_strided_slice %324 {offsets = [3, 0, 0], sizes = [1, 16, 64], strides = [1, 1, 1]} : vector<4x16x64xf32> to vector<1x16x64xf32>
    %525 = vector.shape_cast %524 : vector<1x16x64xf32> to vector<16x64xf32>
    %526 = vector.broadcast %523 : vector<16x1xf32> to vector<16x64xf32>
    %527 = arith.mulf %526, %525 : vector<16x64xf32>
    %528 = arith.addf %522, %527 : vector<16x64xf32>
    %529 = vector.extract_strided_slice %330 {offsets = [2, 0, 0], sizes = [1, 16, 64], strides = [1, 1, 1]} : vector<4x16x64xf32> to vector<1x16x64xf32>
    %530 = vector.shape_cast %529 : vector<1x16x64xf32> to vector<16x64xf32>
    %531 = arith.mulf %528, %530 : vector<16x64xf32>
    %532 = vector.extract_strided_slice %322 {offsets = [3, 0, 0], sizes = [1, 16, 64], strides = [1, 1, 1]} : vector<4x16x64xf32> to vector<1x16x64xf32>
    %533 = vector.shape_cast %532 : vector<1x16x64xf32> to vector<16x64xf32>
    %534 = vector.extract_strided_slice %323 {offsets = [0, 0, 0], sizes = [1, 16, 64], strides = [1, 1, 1]} : vector<4x16x64xf32> to vector<1x16x64xf32>
    %535 = vector.shape_cast %534 : vector<1x16x64xf32> to vector<16x64xf32>
    %536 = arith.mulf %533, %535 : vector<16x64xf32>
    %cst_67 = arith.constant dense<0.000000e+00> : vector<16xf32>
    %537 = vector.multi_reduction <add>, %536, %cst_67 [1] : vector<16x64xf32> to vector<16xf32>
    %538 = vector.shape_cast %537 : vector<16xf32> to vector<16x1xf32>
    %539 = vector.extract_strided_slice %322 {offsets = [3, 0, 0], sizes = [1, 16, 64], strides = [1, 1, 1]} : vector<4x16x64xf32> to vector<1x16x64xf32>
    %540 = vector.shape_cast %539 : vector<1x16x64xf32> to vector<16x64xf32>
    %541 = vector.extract_strided_slice %323 {offsets = [1, 0, 0], sizes = [1, 16, 64], strides = [1, 1, 1]} : vector<4x16x64xf32> to vector<1x16x64xf32>
    %542 = vector.shape_cast %541 : vector<1x16x64xf32> to vector<16x64xf32>
    %543 = arith.mulf %540, %542 : vector<16x64xf32>
    %cst_68 = arith.constant dense<0.000000e+00> : vector<16xf32>
    %544 = vector.multi_reduction <add>, %543, %cst_68 [1] : vector<16x64xf32> to vector<16xf32>
    %545 = vector.shape_cast %544 : vector<16xf32> to vector<16x1xf32>
    %546 = vector.extract_strided_slice %322 {offsets = [3, 0, 0], sizes = [1, 16, 64], strides = [1, 1, 1]} : vector<4x16x64xf32> to vector<1x16x64xf32>
    %547 = vector.shape_cast %546 : vector<1x16x64xf32> to vector<16x64xf32>
    %548 = vector.extract_strided_slice %323 {offsets = [2, 0, 0], sizes = [1, 16, 64], strides = [1, 1, 1]} : vector<4x16x64xf32> to vector<1x16x64xf32>
    %549 = vector.shape_cast %548 : vector<1x16x64xf32> to vector<16x64xf32>
    %550 = arith.mulf %547, %549 : vector<16x64xf32>
    %cst_69 = arith.constant dense<0.000000e+00> : vector<16xf32>
    %551 = vector.multi_reduction <add>, %550, %cst_69 [1] : vector<16x64xf32> to vector<16xf32>
    %552 = vector.shape_cast %551 : vector<16xf32> to vector<16x1xf32>
    %553 = vector.extract_strided_slice %322 {offsets = [3, 0, 0], sizes = [1, 16, 64], strides = [1, 1, 1]} : vector<4x16x64xf32> to vector<1x16x64xf32>
    %554 = vector.shape_cast %553 : vector<1x16x64xf32> to vector<16x64xf32>
    %555 = vector.extract_strided_slice %323 {offsets = [3, 0, 0], sizes = [1, 16, 64], strides = [1, 1, 1]} : vector<4x16x64xf32> to vector<1x16x64xf32>
    %556 = vector.shape_cast %555 : vector<1x16x64xf32> to vector<16x64xf32>
    %557 = arith.mulf %554, %556 : vector<16x64xf32>
    %cst_70 = arith.constant dense<0.000000e+00> : vector<16xf32>
    %558 = vector.multi_reduction <add>, %557, %cst_70 [1] : vector<16x64xf32> to vector<16xf32>
    %559 = vector.shape_cast %558 : vector<16xf32> to vector<16x1xf32>
    %560 = tpu.concatenate %538, %545, %552, %559 in 1 : vector<16x1xf32>, vector<16x1xf32>, vector<16x1xf32>, vector<16x1xf32> -> vector<16x4xf32>
    %cst_71 = arith.constant 1.250000e-01 : f32
    %561 = vector.broadcast %cst_71 : f32 to vector<16x4xf32>
    %562 = arith.mulf %560, %561 : vector<16x4xf32>
    %cst_72 = arith.constant dense<0xFF800000> : vector<16xf32>
    %563 = vector.multi_reduction <maximumf>, %562, %cst_72 [1] : vector<16x4xf32> to vector<16xf32>
    %564 = vector.shape_cast %563 : vector<16xf32> to vector<16x1xf32>
    %565 = vector.broadcast %564 : vector<16x1xf32> to vector<16x4xf32>
    %566 = arith.subf %562, %565 : vector<16x4xf32>
    %567 = math.exp %566 : vector<16x4xf32>
    %cst_73 = arith.constant dense<0.000000e+00> : vector<16xf32>
    %568 = vector.multi_reduction <add>, %567, %cst_73 [1] : vector<16x4xf32> to vector<16xf32>
    %569 = vector.shape_cast %568 : vector<16xf32> to vector<16x1xf32>
    %570 = tpu.reciprocal %569 {approx = true} : vector<16x1xf32> -> vector<16x1xf32>
    %571 = vector.broadcast %570 : vector<16x1xf32> to vector<16x4xf32>
    %572 = arith.mulf %567, %571 : vector<16x4xf32>
    %573 = vector.extract_strided_slice %572 {offsets = [0, 0], sizes = [16, 1], strides = [1, 1]} : vector<16x4xf32> to vector<16x1xf32>
    %574 = vector.extract_strided_slice %324 {offsets = [0, 0, 0], sizes = [1, 16, 64], strides = [1, 1, 1]} : vector<4x16x64xf32> to vector<1x16x64xf32>
    %575 = vector.shape_cast %574 : vector<1x16x64xf32> to vector<16x64xf32>
    %576 = vector.broadcast %573 : vector<16x1xf32> to vector<16x64xf32>
    %577 = arith.mulf %576, %575 : vector<16x64xf32>
    %578 = vector.extract_strided_slice %572 {offsets = [0, 1], sizes = [16, 1], strides = [1, 1]} : vector<16x4xf32> to vector<16x1xf32>
    %579 = vector.extract_strided_slice %324 {offsets = [1, 0, 0], sizes = [1, 16, 64], strides = [1, 1, 1]} : vector<4x16x64xf32> to vector<1x16x64xf32>
    %580 = vector.shape_cast %579 : vector<1x16x64xf32> to vector<16x64xf32>
    %581 = vector.broadcast %578 : vector<16x1xf32> to vector<16x64xf32>
    %582 = arith.mulf %581, %580 : vector<16x64xf32>
    %583 = arith.addf %577, %582 : vector<16x64xf32>
    %584 = vector.extract_strided_slice %572 {offsets = [0, 2], sizes = [16, 1], strides = [1, 1]} : vector<16x4xf32> to vector<16x1xf32>
    %585 = vector.extract_strided_slice %324 {offsets = [2, 0, 0], sizes = [1, 16, 64], strides = [1, 1, 1]} : vector<4x16x64xf32> to vector<1x16x64xf32>
    %586 = vector.shape_cast %585 : vector<1x16x64xf32> to vector<16x64xf32>
    %587 = vector.broadcast %584 : vector<16x1xf32> to vector<16x64xf32>
    %588 = arith.mulf %587, %586 : vector<16x64xf32>
    %589 = arith.addf %583, %588 : vector<16x64xf32>
    %590 = vector.extract_strided_slice %572 {offsets = [0, 3], sizes = [16, 1], strides = [1, 1]} : vector<16x4xf32> to vector<16x1xf32>
    %591 = vector.extract_strided_slice %324 {offsets = [3, 0, 0], sizes = [1, 16, 64], strides = [1, 1, 1]} : vector<4x16x64xf32> to vector<1x16x64xf32>
    %592 = vector.shape_cast %591 : vector<1x16x64xf32> to vector<16x64xf32>
    %593 = vector.broadcast %590 : vector<16x1xf32> to vector<16x64xf32>
    %594 = arith.mulf %593, %592 : vector<16x64xf32>
    %595 = arith.addf %589, %594 : vector<16x64xf32>
    %596 = vector.extract_strided_slice %330 {offsets = [3, 0, 0], sizes = [1, 16, 64], strides = [1, 1, 1]} : vector<4x16x64xf32> to vector<1x16x64xf32>
    %597 = vector.shape_cast %596 : vector<1x16x64xf32> to vector<16x64xf32>
    %598 = arith.mulf %595, %597 : vector<16x64xf32>
    %599 = vector.shape_cast %397 : vector<16x64xf32> to vector<1x16x64xf32>
    %600 = vector.shape_cast %464 : vector<16x64xf32> to vector<1x16x64xf32>
    %601 = vector.shape_cast %531 : vector<16x64xf32> to vector<1x16x64xf32>
    %602 = vector.shape_cast %598 : vector<16x64xf32> to vector<1x16x64xf32>
    %603 = tpu.concatenate %599, %600, %601, %602 in 0 : vector<1x16x64xf32>, vector<1x16x64xf32>, vector<1x16x64xf32>, vector<1x16x64xf32> -> vector<4x16x64xf32>
    %604 = tpu.concatenate %321, %603 in 2 : vector<4x16x64xf32>, vector<4x16x64xf32> -> vector<4x16x128xf32>
    %605 = vector.shape_cast %604 : vector<4x16x128xf32> to vector<64x128xf32>
    %606 = arith.truncf %605 : vector<64x128xf32> to vector<64x128xbf16>
    %c0_74 = arith.constant 0 : index
    %c0_75 = arith.constant 0 : index
    %607 = vector.load %arg7[%c0_74, %c0_75] : memref<128x32xbf16, #tpu.memory_space<vmem>>, vector<128x32xbf16>
    %cst_76 = arith.constant dense<0.000000e+00> : vector<64x32xf32>
    %608 = tpu.matmul %606, %607, %cst_76 {dimension_numbers = #tpu.dot_dimension_numbers<[1], [0], [0], [1], [0, 0, 1, 1], [], []>} : vector<64x128xbf16>, vector<128x32xbf16>, vector<64x32xf32> -> vector<64x32xf32>
    %c0_77 = arith.constant 0 : index
    %c0_78 = arith.constant 0 : index
    %609 = vector.load %arg8[%c0_77, %c0_78] : memref<1x32xf32, #tpu.memory_space<vmem>>, vector<1x32xf32>
    %610 = vector.shape_cast %609 : vector<1x32xf32> to vector<32xf32>
    %611 = vector.shape_cast %610 : vector<32xf32> to vector<1x32xf32>
    %612 = vector.broadcast %611 : vector<1x32xf32> to vector<64x32xf32>
    %613 = arith.addf %608, %612 : vector<64x32xf32>
    %614 = vector.shape_cast %613 : vector<64x32xf32> to vector<4x16x32xf32>
    %615 = arith.addf %29, %614 : vector<4x16x32xf32>
    %c0_79 = arith.constant 0 : index
    %c0_80 = arith.constant 0 : index
    %616 = vector.load %arg9[%c0_79, %c0_80] : memref<1x32xf32, #tpu.memory_space<vmem>>, vector<1x32xf32>
    %617 = vector.shape_cast %616 : vector<1x32xf32> to vector<32xf32>
    %c0_81 = arith.constant 0 : index
    %c0_82 = arith.constant 0 : index
    %618 = vector.load %arg10[%c0_81, %c0_82] : memref<1x32xf32, #tpu.memory_space<vmem>>, vector<1x32xf32>
    %619 = vector.shape_cast %618 : vector<1x32xf32> to vector<32xf32>
    %cst_83 = arith.constant dense<0.000000e+00> : vector<4x16xf32>
    %620 = vector.multi_reduction <add>, %615, %cst_83 [2] : vector<4x16x32xf32> to vector<4x16xf32>
    %621 = vector.shape_cast %620 : vector<4x16xf32> to vector<4x16x1xf32>
    %cst_84 = arith.constant 3.200000e+01 : f32
    %622 = vector.broadcast %cst_84 : f32 to vector<4x16x1xf32>
    %623 = arith.divf %621, %622 : vector<4x16x1xf32>
    %624 = vector.broadcast %623 : vector<4x16x1xf32> to vector<4x16x32xf32>
    %625 = arith.subf %615, %624 : vector<4x16x32xf32>
    %626 = arith.mulf %625, %625 : vector<4x16x32xf32>
    %cst_85 = arith.constant dense<0.000000e+00> : vector<4x16xf32>
    %627 = vector.multi_reduction <add>, %626, %cst_85 [2] : vector<4x16x32xf32> to vector<4x16xf32>
    %628 = vector.shape_cast %627 : vector<4x16xf32> to vector<4x16x1xf32>
    %cst_86 = arith.constant 3.200000e+01 : f32
    %629 = vector.broadcast %cst_86 : f32 to vector<4x16x1xf32>
    %630 = arith.divf %628, %629 : vector<4x16x1xf32>
    %631 = vector.broadcast %623 : vector<4x16x1xf32> to vector<4x16x32xf32>
    %632 = arith.subf %615, %631 : vector<4x16x32xf32>
    %cst_87 = arith.constant 9.99999974E-6 : f32
    %633 = vector.broadcast %cst_87 : f32 to vector<4x16x1xf32>
    %634 = arith.addf %630, %633 : vector<4x16x1xf32>
    %635 = math.rsqrt %634 : vector<4x16x1xf32>
    %636 = vector.broadcast %635 : vector<4x16x1xf32> to vector<4x16x32xf32>
    %637 = arith.mulf %632, %636 : vector<4x16x32xf32>
    %638 = vector.shape_cast %617 : vector<32xf32> to vector<1x1x32xf32>
    %639 = vector.broadcast %638 : vector<1x1x32xf32> to vector<4x16x32xf32>
    %640 = arith.mulf %637, %639 : vector<4x16x32xf32>
    %641 = vector.shape_cast %619 : vector<32xf32> to vector<1x1x32xf32>
    %642 = vector.broadcast %641 : vector<1x1x32xf32> to vector<4x16x32xf32>
    %643 = arith.addf %640, %642 : vector<4x16x32xf32>
    %644 = arith.addf %1, %643 : vector<4x16x32xf32>
    %c0_88 = arith.constant 0 : index
    %c0_89 = arith.constant 0 : index
    %c0_90 = arith.constant 0 : index
    %c0_91 = arith.constant 0 : index
    %645 = vector.load %arg11[%c0_88, %c0_89, %c0_90, %c0_91] : memref<1x4x16x32xf32, #tpu.memory_space<vmem>>, vector<1x4x16x32xf32>
    %646 = vector.shape_cast %645 : vector<1x4x16x32xf32> to vector<4x16x32xf32>
    %647 = vector.shape_cast %644 : vector<4x16x32xf32> to vector<1x4x16x32xf32>
    tpu.vector_store %arg11[%c0_88, %c0_89, %c0_90, %c0_91], %647 {strides = array<i32>} : memref<1x4x16x32xf32, #tpu.memory_space<vmem>>, vector<1x4x16x32xf32>,
    return
  }
  func.func @transform_0(%arg0: i32, %arg1: i32) -> (i32, i32, i32, i32) {
    %c0_i32 = arith.constant 0 : i32
    %c0_i32_0 = arith.constant 0 : i32
    %c0_i32_1 = arith.constant 0 : i32
    return %arg0, %c0_i32, %arg1, %c0_i32_0 : i32, i32, i32, i32
  }
  func.func @transform_1(%arg0: i32, %arg1: i32) -> (i32, i32) {
    %c0_i32 = arith.constant 0 : i32
    %c0_i32_0 = arith.constant 0 : i32
    %c0_i32_1 = arith.constant 0 : i32
    return %c0_i32, %c0_i32_0 : i32, i32
  }
  func.func @transform_2(%arg0: i32, %arg1: i32) -> (i32, i32) {
    %c0_i32 = arith.constant 0 : i32
    %c0_i32_0 = arith.constant 0 : i32
    %c0_i32_1 = arith.constant 0 : i32
    return %c0_i32, %c0_i32_0 : i32, i32
  }
  func.func @transform_3(%arg0: i32, %arg1: i32) -> (i32, i32) {
    %c0_i32 = arith.constant 0 : i32
    %c0_i32_0 = arith.constant 0 : i32
    %c0_i32_1 = arith.constant 0 : i32
    return %c0_i32, %c0_i32_0 : i32, i32
  }
  func.func @transform_4(%arg0: i32, %arg1: i32) -> (i32, i32) {
    %c0_i32 = arith.constant 0 : i32
    %c0_i32_0 = arith.constant 0 : i32
    %c0_i32_1 = arith.constant 0 : i32
    return %c0_i32, %c0_i32_0 : i32, i32
  }
  func.func @transform_5(%arg0: i32, %arg1: i32) -> (i32, i32) {
    %c0_i32 = arith.constant 0 : i32
    %c0_i32_0 = arith.constant 0 : i32
    %c0_i32_1 = arith.constant 0 : i32
    return %c0_i32, %c0_i32_0 : i32, i32
  }
  func.func @transform_6(%arg0: i32, %arg1: i32) -> (i32, i32) {
    %c0_i32 = arith.constant 0 : i32
    %c0_i32_0 = arith.constant 0 : i32
    %c0_i32_1 = arith.constant 0 : i32
    return %c0_i32, %c0_i32_0 : i32, i32
  }
  func.func @transform_7(%arg0: i32, %arg1: i32) -> (i32, i32) {
    %c0_i32 = arith.constant 0 : i32
    %c0_i32_0 = arith.constant 0 : i32
    %c0_i32_1 = arith.constant 0 : i32
    return %c0_i32, %c0_i32_0 : i32, i32
  }
  func.func @transform_8(%arg0: i32, %arg1: i32) -> (i32, i32) {
    %c0_i32 = arith.constant 0 : i32
    %c0_i32_0 = arith.constant 0 : i32
    %c0_i32_1 = arith.constant 0 : i32
    return %c0_i32, %c0_i32_0 : i32, i32
  }
  func.func @transform_9(%arg0: i32, %arg1: i32) -> (i32, i32, i32, i32) {
    %c0_i32 = arith.constant 0 : i32
    %c0_i32_0 = arith.constant 0 : i32
    %c0_i32_1 = arith.constant 0 : i32
    return %arg0, %c0_i32, %arg1, %c0_i32_0 : i32, i32, i32, i32
  }
}

</mosaic_0001>

<llo_original>
// kernel: ptsapt_forward.9
$region0: #{ptsapt_forward.9}
  #allocation0 [shape = 'u32[]', space=smem, size = 0x4, offset = 0x4, fixed_abs, tag = 'smem constant byte address 0x4 - core index']
  #allocation1 [shape = 'u32[144,128]{1,0:T(1,128)}', space=vmem, size = 0x12000, scoped, tag = 'internal scratch']
  #allocation2 [shape = 'f32[1,1]{1,0:T(1,128)S(1)}', space=vmem, size = 0x200, scoped, tag = 'scoped memory for ptsapt_forward.9']
  %s0 = inlined_call_operand.hbm [shape: f32[32,32], index: 0, kind: input, shape index: {}]
  %s1 = inlined_call_operand.hbm [shape: f32[32,16], index: 1, kind: input, shape index: {}]
  %s2 = inlined_call_operand.hbm [shape: f32[1,16], index: 2, kind: input, shape index: {}]
  %s3 = inlined_call_operand.hbm [shape: f32[1,16], index: 3, kind: input, shape index: {}]
  %s4 = inlined_call_operand.<no memory space> [shape: f32[1,1], index: 4, kind: input, shape index: {}]
  %s5 = inlined_call_operand.hbm [shape: f32[32,2], index: 5, kind: input, shape index: {}]
  %s6 = inlined_call_operand.hbm [shape: f32[1,2], index: 6, kind: input, shape index: {}]
  %s7 = inlined_call_operand.hbm [shape: f32[32,1], index: 7, kind: output, shape index: {0}]
  %s8 = inlined_call_operand.hbm [shape: f32[32,2], index: 8, kind: output, shape index: {1}]
  %9 = xla_tuple %s7, %s8
  %s10 = sld [smem:[#allocation0]]
  $region93: #{ptsapt_forward.9} parent=0
    _
  %s12 = ssub.s32 1, %s10
  %s13 = scalar_select 0, %s12, %s10
  %v14 = vstv %s4
  %15 = vst [vmem:[#allocation2] sm:$0x1] %v14
  $region1: #{ptsapt_forward.9} parent=0
    #allocation3 [shape = 'u8[16384]{0}', space=vmem, size = 0x4000, scoped, tag = 'input window, operand 0']
    #allocation4 [shape = 's32[2]{0}', space=sflag, size = 0x8, scoped, tag = 'scoped memory for ptsapt_forward.9']
    #allocation5 [shape = 's32[2]{0}', space=sflag, size = 0x8, scoped, tag = 'scoped memory for ptsapt_forward.9']
    #allocation6 [shape = 'u8[16384]{0}', space=vmem, size = 0x4000, scoped, tag = 'input window, operand 1, single buffered']
    #allocation7 [shape = 's32[1]{0}', space=sflag, size = 0x4, scoped, tag = 'scoped memory for ptsapt_forward.9']
    #allocation8 [shape = 'u8[512]{0}', space=vmem, size = 0x400, scoped, tag = 'input window, operand 2, single buffered']
    #allocation9 [shape = 'u8[512]{0}', space=vmem, size = 0x400, scoped, tag = 'input window, operand 3, single buffered']
    #allocation10 [shape = 's32[1]{0}', space=sflag, size = 0x4, scoped, tag = 'scoped memory for ptsapt_forward.9']
    #allocation11 [shape = 'u8[16384]{0}', space=vmem, size = 0x4000, scoped, tag = 'input window, operand 5, single buffered']
    #allocation12 [shape = 'u8[512]{0}', space=vmem, size = 0x400, scoped, tag = 'input window, operand 6, single buffered']
    #allocation13 [shape = 's32[1]{0}', space=sflag, size = 0x4, scoped, tag = 'scoped memory for ptsapt_forward.9']
    #allocation14 [shape = 'u8[16384]{0}', space=vmem, size = 0x4000, scoped, tag = 'output window, operand 0']
    #allocation15 [shape = 'u8[16384]{0}', space=vmem, size = 0x4000, scoped, tag = 'output window, operand 1']
    #allocation16 [shape = 's32[2]{0}', space=sflag, size = 0x8, scoped, tag = 'scoped memory for ptsapt_forward.9']
    %16 = vsyncpa [#allocation4], 0
    %s17 = scalar_lea.sflag [#allocation4], 1
    %18 = vsyncpa %s17, 0
    %19 = vsyncpa [#allocation7], 0
    %20 = vsyncpa [#allocation10], 0
    %21 = vsyncpa [#allocation13], 0
    %22 = vsyncpa [#allocation5], 0
    %s23 = scalar_lea.sflag [#allocation5], 1
    %24 = vsyncpa %s23, 0
    %25 = vsyncpa [#allocation16], 0
    %s26 = scalar_lea.sflag [#allocation16], 1
    %27 = vsyncpa %s26, 0
    loop: start=0, step=1, limit=4
    $region2: #{ptsapt_forward.9} parent=1 // loop_pre_header
      _
    $region3: #{ptsapt_forward.9} parent=1 // loop_header
      %s29 = sphi 0, %s33
      %p30 = scmp.ge.s32.totalorder %s29, 4
      %s39 = sphi 0, %s41
      %s42 = sphi 0, %s39
      %s43 = sphi 0, %s42
      %s59 = sphi 0, %s43
      %s63 = sphi 0, %s63
      %s65 = sphi 0, %s63
      %s66 = sphi 0, %s65
      %s80 = sphi 0, %s66
      %s84 = sphi 0, %s84
      %s86 = sphi 0, %s84
      %s87 = sphi 0, %s86
      %s101 = sphi 0, %s87
      %s105 = sphi 0, %s105
      %s107 = sphi 0, %s105
      %s108 = sphi 0, %s107
      %s122 = sphi 0, %s108
      %s126 = sphi 0, %s126
      %s128 = sphi 0, %s126
      %s129 = sphi 0, %s128
      %s143 = sphi 0, %s129
      %s147 = sphi 0, %s147
      %s149 = sphi 0, %s147
      %s150 = sphi 0, %s149
      %s164 = sphi 0, %s150
      %s168 = sphi 0, %s168
      %s170 = sphi 0, %s168
      %s171 = sphi 0, %s170
      %s185 = sphi 0, %s171
      %s191 = sphi 0, %s193
      %s194 = sphi 0, %s191
      %s195 = sphi 0, %s194
      %s211 = sphi 0, %s195
      %s217 = sphi 0, %s219
      %s220 = sphi 0, %s217
      %s221 = sphi 0, %s220
      %s237 = sphi 0, %s221
    $region4: #{ptsapt_forward.9} parent=1 // loop_header_branch
      %32 = sbr.rel (%p30) target = $region8
    $region5: #{ptsapt_forward.9} parent=1 // loop_body
      %s34 = ssub.s32 %s29, 1
      %s35 = ssub.s32 %s29, 2
      %s36 = sadd.s32 %s29, 1
      %s37 = ssub.s32 %s29, %s36
      %p38 = scmp.eq.s32.totalorder %s37, 0
      %s40 = sadd.s32 %s39, 1
      %s41 = scalar_select %p38, %s39, %s40
      %p44 = pneg %p38
      %p45 = scmp.eq.s32.totalorder %s29, 1
      %p46 = por %p44, %p45
      %p47 = scmp.ne.s32.totalorder %s39, %s42
      %p48 = scmp.eq.s32.totalorder %s29, 0
      %p49 = por %p47, %p48
      %p50 = scmp.ne.s32.totalorder %s39, %s42
      %p51 = scmp.eq.s32.totalorder %s34, 1
      %p52 = por %p50, %p51
      %p53 = scmp.ne.s32.totalorder %s42, %s43
      %p54 = scmp.eq.s32.totalorder %s34, 0
      %p55 = por %p53, %p54
      %p56 = scmp.ne.s32.totalorder %s42, %s43
      %p57 = scmp.eq.s32.totalorder %s35, 1
      %p58 = por %p56, %p57
      %p60 = scmp.ne.s32.totalorder %s43, %s59
      %p61 = scmp.eq.s32.totalorder %s35, 0
      %p62 = por %p60, %p61
      %s64 = sadd.s32 %s63, 1
      %p67 = scmp.eq.s32.totalorder %s29, 1
      %p68 = scmp.ne.s32.totalorder %s63, %s65
      %p69 = scmp.eq.s32.totalorder %s29, 0
      %p70 = por %p68, %p69
      %p71 = scmp.ne.s32.totalorder %s63, %s65
      %p72 = scmp.eq.s32.totalorder %s34, 1
      %p73 = por %p71, %p72
      %p74 = scmp.ne.s32.totalorder %s65, %s66
      %p75 = scmp.eq.s32.totalorder %s34, 0
      %p76 = por %p74, %p75
      %p77 = scmp.ne.s32.totalorder %s65, %s66
      %p78 = scmp.eq.s32.totalorder %s35, 1
      %p79 = por %p77, %p78
      %p81 = scmp.ne.s32.totalorder %s66, %s80
      %p82 = scmp.eq.s32.totalorder %s35, 0
      %p83 = por %p81, %p82
      %s85 = sadd.s32 %s84, 1
      %p88 = scmp.eq.s32.totalorder %s29, 1
      %p89 = scmp.ne.s32.totalorder %s84, %s86
      %p90 = scmp.eq.s32.totalorder %s29, 0
      %p91 = por %p89, %p90
      %p92 = scmp.ne.s32.totalorder %s84, %s86
      %p93 = scmp.eq.s32.totalorder %s34, 1
      %p94 = por %p92, %p93
      %p95 = scmp.ne.s32.totalorder %s86, %s87
      %p96 = scmp.eq.s32.totalorder %s34, 0
      %p97 = por %p95, %p96
      %p98 = scmp.ne.s32.totalorder %s86, %s87
      %p99 = scmp.eq.s32.totalorder %s35, 1
      %p100 = por %p98, %p99
      %p102 = scmp.ne.s32.totalorder %s87, %s101
      %p103 = scmp.eq.s32.totalorder %s35, 0
      %p104 = por %p102, %p103
      %s106 = sadd.s32 %s105, 1
      %p109 = scmp.eq.s32.totalorder %s29, 1
      %p110 = scmp.ne.s32.totalorder %s105, %s107
      %p111 = scmp.eq.s32.totalorder %s29, 0
      %p112 = por %p110, %p111
      %p113 = scmp.ne.s32.totalorder %s105, %s107
      %p114 = scmp.eq.s32.totalorder %s34, 1
      %p115 = por %p113, %p114
      %p116 = scmp.ne.s32.totalorder %s107, %s108
      %p117 = scmp.eq.s32.totalorder %s34, 0
      %p118 = por %p116, %p117
      %p119 = scmp.ne.s32.totalorder %s107, %s108
      %p120 = scmp.eq.s32.totalorder %s35, 1
      %p121 = por %p119, %p120
      %p123 = scmp.ne.s32.totalorder %s108, %s122
      %p124 = scmp.eq.s32.totalorder %s35, 0
      %p125 = por %p123, %p124
      %s127 = sadd.s32 %s126, 1
      %p130 = scmp.eq.s32.totalorder %s29, 1
      %p131 = scmp.ne.s32.totalorder %s126, %s128
      %p132 = scmp.eq.s32.totalorder %s29, 0
      %p133 = por %p131, %p132
      %p134 = scmp.ne.s32.totalorder %s126, %s128
      %p135 = scmp.eq.s32.totalorder %s34, 1
      %p136 = por %p134, %p135
      %p137 = scmp.ne.s32.totalorder %s128, %s129
      %p138 = scmp.eq.s32.totalorder %s34, 0
      %p139 = por %p137, %p138
      %p140 = scmp.ne.s32.totalorder %s128, %s129
      %p141 = scmp.eq.s32.totalorder %s35, 1
      %p142 = por %p140, %p141
      %p144 = scmp.ne.s32.totalorder %s129, %s143
      %p145 = scmp.eq.s32.totalorder %s35, 0
      %p146 = por %p144, %p145
      %s148 = sadd.s32 %s147, 1
      %p151 = scmp.eq.s32.totalorder %s29, 1
      %p152 = scmp.ne.s32.totalorder %s147, %s149
      %p153 = scmp.eq.s32.totalorder %s29, 0
      %p154 = por %p152, %p153
      %p155 = scmp.ne.s32.totalorder %s147, %s149
      %p156 = scmp.eq.s32.totalorder %s34, 1
      %p157 = por %p155, %p156
      %p158 = scmp.ne.s32.totalorder %s149, %s150
      %p159 = scmp.eq.s32.totalorder %s34, 0
      %p160 = por %p158, %p159
      %p161 = scmp.ne.s32.totalorder %s149, %s150
      %p162 = scmp.eq.s32.totalorder %s35, 1
      %p163 = por %p161, %p162
      %p165 = scmp.ne.s32.totalorder %s150, %s164
      %p166 = scmp.eq.s32.totalorder %s35, 0
      %p167 = por %p165, %p166
      %s169 = sadd.s32 %s168, 1
      %p172 = scmp.eq.s32.totalorder %s29, 1
      %p173 = scmp.ne.s32.totalorder %s168, %s170
      %p174 = scmp.eq.s32.totalorder %s29, 0
      %p175 = por %p173, %p174
      %p176 = scmp.ne.s32.totalorder %s168, %s170
      %p177 = scmp.eq.s32.totalorder %s34, 1
      %p178 = por %p176, %p177
      %p179 = scmp.ne.s32.totalorder %s170, %s171
      %p180 = scmp.eq.s32.totalorder %s34, 0
      %p181 = por %p179, %p180
      %p182 = scmp.ne.s32.totalorder %s170, %s171
      %p183 = scmp.eq.s32.totalorder %s35, 1
      %p184 = por %p182, %p183
      %p186 = scmp.ne.s32.totalorder %s171, %s185
      %p187 = scmp.eq.s32.totalorder %s35, 0
      %p188 = por %p186, %p187
      %s189 = ssub.s32 %s29, %s36
      %p190 = scmp.eq.s32.totalorder %s189, 0
      %s192 = sadd.s32 %s191, 1
      %s193 = scalar_select %p190, %s191, %s192
      %p196 = pneg %p190
      %p197 = scmp.eq.s32.totalorder %s29, 1
      %p198 = por %p196, %p197
      %p199 = scmp.ne.s32.totalorder %s191, %s194
      %p200 = scmp.eq.s32.totalorder %s29, 0
      %p201 = por %p199, %p200
      %p202 = scmp.ne.s32.totalorder %s191, %s194
      %p203 = scmp.eq.s32.totalorder %s34, 1
      %p204 = por %p202, %p203
      %p205 = scmp.ne.s32.totalorder %s194, %s195
      %p206 = scmp.eq.s32.totalorder %s34, 0
      %p207 = por %p205, %p206
      %p208 = scmp.ne.s32.totalorder %s194, %s195
      %p209 = scmp.eq.s32.totalorder %s35, 1
      %p210 = por %p208, %p209
      %p212 = scmp.ne.s32.totalorder %s195, %s211
      %p213 = scmp.eq.s32.totalorder %s35, 0
      %p214 = por %p212, %p213
      %s215 = ssub.s32 %s29, %s36
      %p216 = scmp.eq.s32.totalorder %s215, 0
      %s218 = sadd.s32 %s217, 1
      %s219 = scalar_select %p216, %s217, %s218
      %p222 = pneg %p216
      %p223 = scmp.eq.s32.totalorder %s29, 1
      %p224 = por %p222, %p223
      %p225 = scmp.ne.s32.totalorder %s217, %s220
      %p226 = scmp.eq.s32.totalorder %s29, 0
      %p227 = por %p225, %p226
      %p228 = scmp.ne.s32.totalorder %s217, %s220
      %p229 = scmp.eq.s32.totalorder %s34, 1
      %p230 = por %p228, %p229
      %p231 = scmp.ne.s32.totalorder %s220, %s221
      %p232 = scmp.eq.s32.totalorder %s34, 0
      %p233 = por %p231, %p232
      %p234 = scmp.ne.s32.totalorder %s220, %s221
      %p235 = scmp.eq.s32.totalorder %s35, 1
      %p236 = por %p234, %p235
      %p238 = scmp.ne.s32.totalorder %s221, %s237
      %p239 = scmp.eq.s32.totalorder %s35, 0
      %p240 = por %p238, %p239
      %p241 = scmp.le.s32.totalorder 1, %s29
      %p242 = scmp.lt.s32.totalorder %s29, 3
      %p243 = pnand %p241, %p242
      %p244 = pneg %p243
      // Predicated region
      $region9: #{ptsapt_forward.9} parent=5 // pred_check
        _
      $region10: #{ptsapt_forward.9} parent=5 // pred_check_branch
        %246 = sbr.rel (%p243) target = $region12
      $region11: #{ptsapt_forward.9} parent=5 // pred_region
        %s247 = ssub.s32 %s29, 1
        // Predicated region
        $region13: #{ptsapt_forward.9} parent=11 // pred_check
          %p248 = pneg %p76
        $region14: #{ptsapt_forward.9} parent=11 // pred_check_branch
          %250 = sbr.rel (%p248) target = $region16
        $region15: #{ptsapt_forward.9} parent=11 // pred_region
          %s252 = ssub.s32 512, 512
          %253 = vsyncadd [#allocation7], %s252
          %s254 = sshll.u32 [#allocation6], 4
          %s255 = int_to_ptr.vmem [resolvable:$true] %s254
          %260 = dma.hbm_to_vmem [thread:$0]  %s1, 512, %s255, [#allocation7], 128, 128, 8
        $region16: #{ptsapt_forward.9} parent=11 // pred_fallthru
          _
        // Predicated region
        $region17: #{ptsapt_forward.9} parent=11 // pred_check
          %p261 = pneg %p97
        $region18: #{ptsapt_forward.9} parent=11 // pred_check_branch
          %263 = sbr.rel (%p261) target = $region20
        $region19: #{ptsapt_forward.9} parent=11 // pred_region
          %s265 = ssub.s32 16, 16
          %266 = vsyncadd [#allocation7], %s265
          %s268 = sshll.u32 [#allocation8], 4
          %s269 = int_to_ptr.vmem [resolvable:$true] %s268
          %271 = dma.hbm_to_vmem [thread:$0]  %s2, 16, %s269, [#allocation7]
        $region20: #{ptsapt_forward.9} parent=11 // pred_fallthru
          _
        // Predicated region
        $region21: #{ptsapt_forward.9} parent=11 // pred_check
          %p272 = pneg %p118
        $region22: #{ptsapt_forward.9} parent=11 // pred_check_branch
          %274 = sbr.rel (%p272) target = $region24
        $region23: #{ptsapt_forward.9} parent=11 // pred_region
          %s276 = ssub.s32 16, 16
          %277 = vsyncadd [#allocation10], %s276
          %s279 = sshll.u32 [#allocation9], 4
          %s280 = int_to_ptr.vmem [resolvable:$true] %s279
          %282 = dma.hbm_to_vmem [thread:$0]  %s3, 16, %s280, [#allocation10]
        $region24: #{ptsapt_forward.9} parent=11 // pred_fallthru
          _
        // Predicated region
        $region25: #{ptsapt_forward.9} parent=11 // pred_check
          %p283 = pneg %p139
        $region26: #{ptsapt_forward.9} parent=11 // pred_check_branch
          %285 = sbr.rel (%p283) target = $region28
        $region27: #{ptsapt_forward.9} parent=11 // pred_region
          _
        $region28: #{ptsapt_forward.9} parent=11 // pred_fallthru
          _
        // Predicated region
        $region29: #{ptsapt_forward.9} parent=11 // pred_check
          %p286 = pneg %p160
        $region30: #{ptsapt_forward.9} parent=11 // pred_check_branch
          %288 = sbr.rel (%p286) target = $region32
        $region31: #{ptsapt_forward.9} parent=11 // pred_region
          %s290 = ssub.s32 512, 512
          %291 = vsyncadd [#allocation10], %s290
          %s292 = sshll.u32 [#allocation11], 4
          %s293 = int_to_ptr.vmem [resolvable:$true] %s292
          %298 = dma.hbm_to_vmem [thread:$0]  %s5, 512, %s293, [#allocation10], 128, 128, 8
        $region32: #{ptsapt_forward.9} parent=11 // pred_fallthru
          _
        // Predicated region
        $region33: #{ptsapt_forward.9} parent=11 // pred_check
          %p299 = pneg %p181
        $region34: #{ptsapt_forward.9} parent=11 // pred_check_branch
          %301 = sbr.rel (%p299) target = $region36
        $region35: #{ptsapt_forward.9} parent=11 // pred_region
          %s303 = ssub.s32 16, 16
          %304 = vsyncadd [#allocation13], %s303
          %s306 = sshll.u32 [#allocation12], 4
          %s307 = int_to_ptr.vmem [resolvable:$true] %s306
          %309 = dma.hbm_to_vmem [thread:$0]  %s6, 16, %s307, [#allocation13]
        $region36: #{ptsapt_forward.9} parent=11 // pred_fallthru
          _
      $region12: #{ptsapt_forward.9} parent=5 // pred_fallthru
        _
      %p310 = scmp.lt.s32.totalorder %s29, 2
      // Predicated region
      $region37: #{ptsapt_forward.9} parent=5 // pred_check
        %p311 = pneg %p310
      $region38: #{ptsapt_forward.9} parent=5 // pred_check_branch
        %313 = sbr.rel (%p311) target = $region40
      $region39: #{ptsapt_forward.9} parent=5 // pred_region
        // Predicated region
        $region41: #{ptsapt_forward.9} parent=39 // pred_check
          %p314 = pneg %p49
        $region42: #{ptsapt_forward.9} parent=39 // pred_check_branch
          %316 = sbr.rel (%p314) target = $region44
        $region43: #{ptsapt_forward.9} parent=39 // pred_region
          %s317 = sand.u32 %s39, 1
          %s318 = scalar_lea.sflag [#allocation4], %s317
          %s319 = sand.u32 %s39, 1
          %s320 = smul.addr %s319, 16
          %s321 = scalar_lea.vmem [#allocation3], %s320
          %s322 = smul.u32 2, %s29
          %s324 = ssub.s32 256, 256
          %325 = vsyncadd %s318, %s324
          %s326 = smul.addr %s322, 128
          %s327 = scalar_lea.hbm %s0, %s326
          %s328 = sshll.u32 %s321, 4
          %s329 = int_to_ptr.vmem [resolvable:$true] %s328
          %334 = dma.hbm_to_vmem [thread:$0]  %s327, 256, %s329, %s318, 128, 128, 8
        $region44: #{ptsapt_forward.9} parent=39 // pred_fallthru
          _
      $region40: #{ptsapt_forward.9} parent=5 // pred_fallthru
        _
      %p335 = scmp.le.s32.totalorder 1, %s29
      %p336 = scmp.lt.s32.totalorder %s29, 3
      %p337 = pnand %p335, %p336
      %p338 = pneg %p337
      // Predicated region
      $region45: #{ptsapt_forward.9} parent=5 // pred_check
        _
      $region46: #{ptsapt_forward.9} parent=5 // pred_check_branch
        %340 = sbr.rel (%p337) target = $region48
      $region47: #{ptsapt_forward.9} parent=5 // pred_region
        %s341 = ssub.s32 %s29, 1
        %s342 = sand.u32 %s42, 1
        %s343 = scalar_lea.sflag [#allocation4], %s342
        %s344 = sand.u32 %s42, 1
        %s345 = smul.addr %s344, 16
        %s346 = scalar_lea.vmem [#allocation3], %s345
        // Predicated region
        $region49: #{ptsapt_forward.9} parent=47 // pred_check
          %p347 = pneg %p55
        $region50: #{ptsapt_forward.9} parent=47 // pred_check_branch
          %349 = sbr.rel (%p347) target = $region52
        $region51: #{ptsapt_forward.9} parent=47 // pred_region
          %350 = dma.done %s343, 256
        $region52: #{ptsapt_forward.9} parent=47 // pred_fallthru
          _
        // Predicated region
        $region53: #{ptsapt_forward.9} parent=47 // pred_check
          %p351 = pneg %p76
        $region54: #{ptsapt_forward.9} parent=47 // pred_check_branch
          %353 = sbr.rel (%p351) target = $region56
        $region55: #{ptsapt_forward.9} parent=47 // pred_region
          %354 = dma.done [#allocation7], 512
        $region56: #{ptsapt_forward.9} parent=47 // pred_fallthru
          _
        // Predicated region
        $region57: #{ptsapt_forward.9} parent=47 // pred_check
          %p355 = pneg %p97
        $region58: #{ptsapt_forward.9} parent=47 // pred_check_branch
          %357 = sbr.rel (%p355) target = $region60
        $region59: #{ptsapt_forward.9} parent=47 // pred_region
          %358 = dma.done [#allocation7], 16
        $region60: #{ptsapt_forward.9} parent=47 // pred_fallthru
          _
        // Predicated region
        $region61: #{ptsapt_forward.9} parent=47 // pred_check
          %p359 = pneg %p118
        $region62: #{ptsapt_forward.9} parent=47 // pred_check_branch
          %361 = sbr.rel (%p359) target = $region64
        $region63: #{ptsapt_forward.9} parent=47 // pred_region
          %362 = dma.done [#allocation10], 16
        $region64: #{ptsapt_forward.9} parent=47 // pred_fallthru
          _
        // Predicated region
        $region65: #{ptsapt_forward.9} parent=47 // pred_check
          %p363 = pneg %p160
        $region66: #{ptsapt_forward.9} parent=47 // pred_check_branch
          %365 = sbr.rel (%p363) target = $region68
        $region67: #{ptsapt_forward.9} parent=47 // pred_region
          %366 = dma.done [#allocation10], 512
        $region68: #{ptsapt_forward.9} parent=47 // pred_fallthru
          _
        // Predicated region
        $region69: #{ptsapt_forward.9} parent=47 // pred_check
          %p367 = pneg %p181
        $region70: #{ptsapt_forward.9} parent=47 // pred_check_branch
          %369 = sbr.rel (%p367) target = $region72
        $region71: #{ptsapt_forward.9} parent=47 // pred_region
          %370 = dma.done [#allocation13], 16
        $region72: #{ptsapt_forward.9} parent=47 // pred_fallthru
          _
        %s371 = sand.u32 %s42, 1
        %s372 = scalar_lea.sflag [#allocation4], %s371
        %s373 = sand.u32 %s42, 1
        %s374 = smul.addr %s373, 16
        %s375 = scalar_lea.vmem [#allocation3], %s374
        %p376 = pneg %p55
        %p377 = pneg %p52
        %p378 = pneg %p76
        %p379 = pneg %p73
        %p380 = pneg %p97
        %p381 = pneg %p94
        %p382 = pneg %p118
        %p383 = pneg %p115
        %p384 = pneg %p139
        %p385 = pneg %p136
        %p386 = pneg %p160
        %p387 = pneg %p157
        %p388 = pneg %p181
        %p389 = pneg %p178
        %p390 = pneg %p207
        %p391 = pneg %p204
        %s392 = sand.u32 %s194, 1
        %s393 = scalar_lea.sflag [#allocation5], %s392
        %s394 = sand.u32 %s194, 1
        %s395 = smul.addr %s394, 16
        %s396 = scalar_lea.vmem [#allocation14], %s395
        %p397 = pneg %p233
        %p398 = pneg %p230
        %s399 = sand.u32 %s220, 1
        %s400 = scalar_lea.sflag [#allocation16], %s399
        %s401 = sand.u32 %s220, 1
        %s402 = smul.addr %s401, 16
        %s403 = scalar_lea.vmem [#allocation15], %s402
        %s404 = smul.u32 2, %s34
        %s405 = smul.u32 2, %s34
        %s406 = smul.u32 2, %s34
        %v407 = vld [vmem:[%s346] sm:$0xff]
        %v408 = vld [vmem:[%s346 + $0x8] sm:$0xff]
        %v409 = vld [vmem:[#allocation6] sm:$0xff]
        %v410 = vld [vmem:[#allocation6 + $0x8] sm:$0xff]
        %v411 = vld [vmem:[#allocation6 + $0x10] sm:$0xff]
        %v412 = vld [vmem:[#allocation6 + $0x18] sm:$0xff]
        %v413 = vld [vmem:[#allocation8] sm:$0x1]
        %v415 = vlaneseq
        %v416 = vshrl.u32 %v415, 7
        %v417 = vsub.s32 0, %v416
        %v418 = vrot.slane %v413, %v417
        %vm420 = vcmask 261120
        %v422 = vsel %vm420, %v407, 0
        %v425 = vsel %vm420, %v408, 0
        %427 = vmatprep.subr.mxu0 0.0
        %428 = vmatpush1.msra.mxu0 %v409
        %429 = vmatprep.subr.mxu0 0.0
        %430 = vmatpush1.msra.mxu0 %v410
        %431 = vmatprep.subr.mxu0 0.0
        %432 = vmatpush1.msra.mxu0 %v411
        %433 = vmatprep.subr.mxu0 0.0
        %434 = vmatpush1.msra.mxu0 %v412
        %435 = vmatprep.subr.mxu0 0.0
        %436 = vmatpush1.msra.mxu0 0.0
        %437 = vmatprep.subr.mxu0 0.0
        %438 = vmatpush1.msra.mxu0 0.0
        %439 = vmatprep.subr.mxu0 0.0
        %440 = vmatpush1.msra.mxu0 0.0
        %441 = vmatprep.subr.mxu0 0.0
        %442 = vmatpush1.msra.mxu0 0.0
        %443 = vmatprep.subr.mxu0 0.0
        %444 = vmatpush1.msra.mxu0 0.0
        %445 = vmatprep.subr.mxu0 0.0
        %446 = vmatpush1.msra.mxu0 0.0
        %447 = vmatprep.subr.mxu0 0.0
        %448 = vmatpush1.msra.mxu0 0.0
        %449 = vmatprep.subr.mxu0 0.0
        %450 = vmatpush1.msra.mxu0 0.0
        %451 = vmatprep.subr.mxu0 0.0
        %452 = vmatpush1.msra.mxu0 0.0
        %453 = vmatprep.subr.mxu0 0.0
        %454 = vmatpush1.msra.mxu0 0.0
        %455 = vmatprep.subr.mxu0 0.0
        %456 = vmatpush1.msra.mxu0 0.0
        %457 = vmatprep.subr.mxu0 0.0
        %458 = vmatpush1.msra.mxu0 0.0
        %459 = vmatprep.subr.mxu0 0.0
        %460 = vmatpush1.msra.mxu0 0.0
        %461 = vmatprep.subr.mxu0 0.0
        %462 = vmatpush1.msra.mxu0 0.0
        %463 = vmatprep.subr.mxu0 0.0
        %464 = vmatpush1.msra.mxu0 0.0
        %465 = vmatprep.subr.mxu0 0.0
        %466 = vmatpush1.msra.mxu0 0.0
        %467 = vmatprep.subr.mxu0 0.0
        %468 = vmatpush1.msra.mxu0 0.0
        %469 = vmatprep.subr.mxu0 0.0
        %470 = vmatpush1.msra.mxu0 0.0
        %471 = vmatprep.subr.mxu0 0.0
        %472 = vmatpush1.msra.mxu0 0.0
        %473 = vmatprep.subr.mxu0 0.0
        %474 = vmatpush1.msra.mxu0 0.0
        %475 = vmatprep.subr.mxu0 0.0
        %476 = vmatpush1.msra.mxu0 0.0
        %477 = vmatprep.subr.mxu0 0.0
        %478 = vmatpush1.msra.mxu0 0.0
        %479 = vmatprep.subr.mxu0 0.0
        %480 = vmatpush1.msra.mxu0 0.0
        %481 = vmatprep.subr.mxu0 0.0
        %482 = vmatpush1.msra.mxu0 0.0
        %483 = vmatprep.subr.mxu0 0.0
        %484 = vmatpush1.msra.mxu0 0.0
        %485 = vmatprep.subr.mxu0 0.0
        %486 = vmatpush1.msra.mxu0 0.0
        %487 = vmatprep.subr.mxu0 0.0
        %488 = vmatpush1.msra.mxu0 0.0
        %489 = vmatprep.subr.mxu0 0.0
        %490 = vmatpush1.msra.mxu0 0.0
        %491 = vmatprep.mubr.f32.mxu0 0.0
        %492 = vmatmul.mubr.f32.gmra.mrb[0].mxu0 %v422
        %v493 = vpop.f32.mrb[0].mxu0
        %v494 = vadd.f32 %v418, %v493
        %v495 = vpop.f32.mrb[0].mxu0
        %496 = vmatprep.mubr.f32.mxu0 0.0
        %497 = vmatmul.mubr.f32.gmra.mrb[0].mxu0 %v425
        %v498 = vpop.f32.mrb[0].mxu0
        %v499 = vadd.f32 %v418, %v498
        %v500 = vpop.f32.mrb[0].mxu0
        %501 = vdwg.mxu0
        %v502 = vmax.f32 %v494, 0.0
        %v503 = vmax.f32 %v499, 0.0
        %v504 = vld [vmem:[#allocation9] sm:$0x1]
        %v506 = vlaneseq
        %v507 = vshrl.u32 %v506, 7
        %v508 = vsub.s32 0, %v507
        %v509 = vrot.slane %v504, %v508
        %v511 = vmul.f32 %v502, %v509
        %v512 = vmul.f32 %v503, %v509
        %vm513 = vcmask 130048
        %v514 = vsel %vm513, %v511, 0.0
        %515 = vadd.xlane.f32.xlu0 %v514
        %v516 = vpop.xlane.xlu0 %515
        %v517 = vsel %vm513, %v512, 0.0
        %518 = vadd.xlane.f32.xlu0 %v517
        %v519 = vpop.xlane.xlu0 %518
        %v520 = vld [vmem:[#allocation2] sm:$0x1]
        %v522 = vlaneseq
        %v523 = vshrl.u32 %v522, 7
        %v524 = vsub.s32 0, %v523
        %v525 = vrot.slane %v520, %v524
        %v527 = vadd.f32 %v516, %v525
        %v528 = vadd.f32 %v519, %v525
        %vm529 = vcmask 7168
        %530 = vst.msk [vmem:[%s396] sm:$0xff] %vm529, %v527
        %531 = vst.msk [vmem:[%s396 + $0x8] sm:$0xff] %vm529, %v528
        %v532 = vld [vmem:[#allocation11] sm:$0xff]
        %v533 = vld [vmem:[#allocation11 + $0x8] sm:$0xff]
        %v534 = vld [vmem:[#allocation11 + $0x10] sm:$0xff]
        %v535 = vld [vmem:[#allocation11 + $0x18] sm:$0xff]
        %v536 = vld [vmem:[#allocation12] sm:$0x1]
        %v538 = vlaneseq
        %v539 = vshrl.u32 %v538, 7
        %v540 = vsub.s32 0, %v539
        %v541 = vrot.slane %v536, %v540
        %543 = vmatprep.subr.mxu0 0.0
        %544 = vmatpush1.msra.mxu0 %v532
        %545 = vmatprep.subr.mxu0 0.0
        %546 = vmatpush1.msra.mxu0 %v533
        %547 = vmatprep.subr.mxu0 0.0
        %548 = vmatpush1.msra.mxu0 %v534
        %549 = vmatprep.subr.mxu0 0.0
        %550 = vmatpush1.msra.mxu0 %v535
        %551 = vmatprep.subr.mxu0 0.0
        %552 = vmatpush1.msra.mxu0 0.0
        %553 = vmatprep.subr.mxu0 0.0
        %554 = vmatpush1.msra.mxu0 0.0
        %555 = vmatprep.subr.mxu0 0.0
        %556 = vmatpush1.msra.mxu0 0.0
        %557 = vmatprep.subr.mxu0 0.0
        %558 = vmatpush1.msra.mxu0 0.0
        %559 = vmatprep.subr.mxu0 0.0
        %560 = vmatpush1.msra.mxu0 0.0
        %561 = vmatprep.subr.mxu0 0.0
        %562 = vmatpush1.msra.mxu0 0.0
        %563 = vmatprep.subr.mxu0 0.0
        %564 = vmatpush1.msra.mxu0 0.0
        %565 = vmatprep.subr.mxu0 0.0
        %566 = vmatpush1.msra.mxu0 0.0
        %567 = vmatprep.subr.mxu0 0.0
        %568 = vmatpush1.msra.mxu0 0.0
        %569 = vmatprep.subr.mxu0 0.0
        %570 = vmatpush1.msra.mxu0 0.0
        %571 = vmatprep.subr.mxu0 0.0
        %572 = vmatpush1.msra.mxu0 0.0
        %573 = vmatprep.subr.mxu0 0.0
        %574 = vmatpush1.msra.mxu0 0.0
        %575 = vmatprep.subr.mxu0 0.0
        %576 = vmatpush1.msra.mxu0 0.0
        %577 = vmatprep.subr.mxu0 0.0
        %578 = vmatpush1.msra.mxu0 0.0
        %579 = vmatprep.subr.mxu0 0.0
        %580 = vmatpush1.msra.mxu0 0.0
        %581 = vmatprep.subr.mxu0 0.0
        %582 = vmatpush1.msra.mxu0 0.0
        %583 = vmatprep.subr.mxu0 0.0
        %584 = vmatpush1.msra.mxu0 0.0
        %585 = vmatprep.subr.mxu0 0.0
        %586 = vmatpush1.msra.mxu0 0.0
        %587 = vmatprep.subr.mxu0 0.0
        %588 = vmatpush1.msra.mxu0 0.0
        %589 = vmatprep.subr.mxu0 0.0
        %590 = vmatpush1.msra.mxu0 0.0
        %591 = vmatprep.subr.mxu0 0.0
        %592 = vmatpush1.msra.mxu0 0.0
        %593 = vmatprep.subr.mxu0 0.0
        %594 = vmatpush1.msra.mxu0 0.0
        %595 = vmatprep.subr.mxu0 0.0
        %596 = vmatpush1.msra.mxu0 0.0
        %597 = vmatprep.subr.mxu0 0.0
        %598 = vmatpush1.msra.mxu0 0.0
        %599 = vmatprep.subr.mxu0 0.0
        %600 = vmatpush1.msra.mxu0 0.0
        %601 = vmatprep.subr.mxu0 0.0
        %602 = vmatpush1.msra.mxu0 0.0
        %603 = vmatprep.subr.mxu0 0.0
        %604 = vmatpush1.msra.mxu0 0.0
        %605 = vmatprep.subr.mxu0 0.0
        %606 = vmatpush1.msra.mxu0 0.0
        %607 = vmatprep.mubr.f32.mxu0 0.0
        %608 = vmatmul.mubr.f32.gmra.mrb[0].mxu0 %v422
        %v609 = vpop.f32.mrb[0].mxu0
        %v610 = vadd.f32 %v541, %v609
        %v611 = vpop.f32.mrb[0].mxu0
        %612 = vmatprep.mubr.f32.mxu0 0.0
        %613 = vmatmul.mubr.f32.gmra.mrb[0].mxu0 %v425
        %v614 = vpop.f32.mrb[0].mxu0
        %v615 = vadd.f32 %v541, %v614
        %v616 = vpop.f32.mrb[0].mxu0
        %617 = vdwg.mxu0
        %vm618 = vcmask 15360
        %619 = vst.msk [vmem:[%s403] sm:$0xff] %vm618, %v610
        %620 = vst.msk [vmem:[%s403 + $0x8] sm:$0xff] %vm618, %v615
        %s621 = sand.u32 %s194, 1
        %s622 = scalar_lea.sflag [#allocation5], %s621
        %s623 = sand.u32 %s194, 1
        %s624 = smul.addr %s623, 16
        %s625 = scalar_lea.vmem [#allocation14], %s624
        %s626 = sand.u32 %s220, 1
        %s627 = scalar_lea.sflag [#allocation16], %s626
        %s628 = sand.u32 %s220, 1
        %s629 = smul.addr %s628, 16
        %s630 = scalar_lea.vmem [#allocation15], %s629
        // Predicated region
        $region73: #{ptsapt_forward.9} parent=47 // pred_check
          %p631 = pneg %p204
        $region74: #{ptsapt_forward.9} parent=47 // pred_check_branch
          %633 = sbr.rel (%p631) target = $region76
        $region75: #{ptsapt_forward.9} parent=47 // pred_region
          %s634 = smul.u32 2, %s34
          %s636 = ssub.s32 256, 256
          %637 = vsyncadd %s622, %s636
          %s638 = smul.addr %s634, 128
          %s639 = scalar_lea.hbm %s7, %s638
          %s640 = sshll.u32 %s625, 4
          %s641 = int_to_ptr.vmem [resolvable:$true] %s640
          %646 = dma.vmem_to_hbm [thread:$0]  %s641, 256, %s639, %s622, 128, 128, 8
        $region76: #{ptsapt_forward.9} parent=47 // pred_fallthru
          _
        // Predicated region
        $region77: #{ptsapt_forward.9} parent=47 // pred_check
          %p647 = pneg %p230
        $region78: #{ptsapt_forward.9} parent=47 // pred_check_branch
          %649 = sbr.rel (%p647) target = $region80
        $region79: #{ptsapt_forward.9} parent=47 // pred_region
          %s650 = smul.u32 2, %s34
          %s652 = ssub.s32 256, 256
          %653 = vsyncadd %s627, %s652
          %s654 = smul.addr %s650, 128
          %s655 = scalar_lea.hbm %s8, %s654
          %s656 = sshll.u32 %s630, 4
          %s657 = int_to_ptr.vmem [resolvable:$true] %s656
          %662 = dma.vmem_to_hbm [thread:$0]  %s657, 256, %s655, %s627, 128, 128, 8
        $region80: #{ptsapt_forward.9} parent=47 // pred_fallthru
          _
      $region48: #{ptsapt_forward.9} parent=5 // pred_fallthru
        _
      %p663 = scmp.le.s32.totalorder 2, %s29
      // Predicated region
      $region81: #{ptsapt_forward.9} parent=5 // pred_check
        %p664 = pneg %p663
      $region82: #{ptsapt_forward.9} parent=5 // pred_check_branch
        %666 = sbr.rel (%p664) target = $region84
      $region83: #{ptsapt_forward.9} parent=5 // pred_region
        %s667 = ssub.s32 %s29, 2
        // Predicated region
        $region85: #{ptsapt_forward.9} parent=83 // pred_check
          %p668 = pneg %p210
        $region86: #{ptsapt_forward.9} parent=83 // pred_check_branch
          %670 = sbr.rel (%p668) target = $region88
        $region87: #{ptsapt_forward.9} parent=83 // pred_region
          %s671 = sand.u32 %s195, 1
          %s672 = scalar_lea.sflag [#allocation5], %s671
          %s673 = sand.u32 %s195, 1
          %s674 = smul.addr %s673, 16
          %s675 = scalar_lea.vmem [#allocation14], %s674
          %676 = dma.done %s672, 256
        $region88: #{ptsapt_forward.9} parent=83 // pred_fallthru
          _
        // Predicated region
        $region89: #{ptsapt_forward.9} parent=83 // pred_check
          %p677 = pneg %p236
        $region90: #{ptsapt_forward.9} parent=83 // pred_check_branch
          %679 = sbr.rel (%p677) target = $region92
        $region91: #{ptsapt_forward.9} parent=83 // pred_region
          %s680 = sand.u32 %s221, 1
          %s681 = scalar_lea.sflag [#allocation16], %s680
          %s682 = sand.u32 %s221, 1
          %s683 = smul.addr %s682, 16
          %s684 = scalar_lea.vmem [#allocation15], %s683
          %685 = dma.done %s681, 256
        $region92: #{ptsapt_forward.9} parent=83 // pred_fallthru
          _
      $region84: #{ptsapt_forward.9} parent=5 // pred_fallthru
        _
    $region6: #{ptsapt_forward.9} parent=1 // loop_footer
      %s33 = sadd.s32 1, %s29
    $region7: #{ptsapt_forward.9} parent=1 // loop_footer_branch
      %28 = sbr.rel target = $region3
    $region8: #{ptsapt_forward.9} parent=1 // loop_exit
      _
    %686 = vsyncpa [#allocation4], 1
    %s687 = scalar_lea.sflag [#allocation4], 1
    %688 = vsyncpa %s687, 1
    %689 = vsyncpa [#allocation7], 1
    %690 = vsyncpa [#allocation10], 1
    %691 = vsyncpa [#allocation13], 1
    %692 = vsyncpa [#allocation5], 1
    %s693 = scalar_lea.sflag [#allocation5], 1
    %694 = vsyncpa %s693, 1
    %695 = vsyncpa [#allocation16], 1
    %s696 = scalar_lea.sflag [#allocation16], 1
    %697 = vsyncpa %s696, 1

// kernel: ptsapt_forward.5
$region0: #{ptsapt_forward.5}
  #allocation0 [shape = 'u32[]', space=smem, size = 0x4, offset = 0x4, fixed_abs, tag = 'smem constant byte address 0x4 - core index']
  #allocation1 [shape = 'u32[144,128]{1,0:T(1,128)}', space=vmem, size = 0x12000, scoped, tag = 'internal scratch']
  %s0 = inlined_call_operand.hbm [shape: f32[128,32], index: 0, kind: input, shape index: {}]
  %s1 = inlined_call_operand.hbm [shape: f32[1,32], index: 1, kind: input, shape index: {}]
  %s2 = inlined_call_operand.hbm [shape: f32[1,32], index: 2, kind: input, shape index: {}]
  %s3 = inlined_call_operand.hbm [shape: bf16[32,256], index: 3, kind: input, shape index: {}]
  %s4 = inlined_call_operand.hbm [shape: f32[1,256], index: 4, kind: input, shape index: {}]
  %s5 = inlined_call_operand.hbm [shape: bf16[128,32], index: 5, kind: input, shape index: {}]
  %s6 = inlined_call_operand.hbm [shape: f32[1,32], index: 6, kind: input, shape index: {}]
  %s7 = inlined_call_operand.hbm [shape: f32[1,32], index: 7, kind: input, shape index: {}]
  %s8 = inlined_call_operand.hbm [shape: f32[1,32], index: 8, kind: input, shape index: {}]
  %s9 = inlined_call_operand.hbm [shape: f32[128,32], index: 9, kind: output, shape index: {}]
  %s10 = sld [smem:[#allocation0]]
  $region105: #{ptsapt_forward.5} parent=0
    _
  %s12 = ssub.s32 1, %s10
  %s13 = scalar_select 0, %s12, %s10
  $region1: #{ptsapt_forward.5} parent=0
    #allocation2 [shape = 'u8[65536]{0}', space=vmem, size = 0x10000, scoped, tag = 'input window, operand 0']
    #allocation3 [shape = 's32[2]{0}', space=sflag, size = 0x8, scoped, tag = 'scoped memory for ptsapt_forward.5']
    #allocation4 [shape = 's32[2]{0}', space=sflag, size = 0x8, scoped, tag = 'scoped memory for ptsapt_forward.5']
    #allocation5 [shape = 'u8[512]{0}', space=vmem, size = 0x400, scoped, tag = 'input window, operand 1, single buffered']
    #allocation6 [shape = 's32[1]{0}', space=sflag, size = 0x4, scoped, tag = 'scoped memory for ptsapt_forward.5']
    #allocation7 [shape = 'u8[512]{0}', space=vmem, size = 0x400, scoped, tag = 'input window, operand 2, single buffered']
    #allocation8 [shape = 'u8[16384]{0}', space=vmem, size = 0x4000, scoped, tag = 'input window, operand 3, single buffered']
    #allocation9 [shape = 's32[1]{0}', space=sflag, size = 0x4, scoped, tag = 'scoped memory for ptsapt_forward.5']
    #allocation10 [shape = 'u8[1024]{0}', space=vmem, size = 0x400, scoped, tag = 'input window, operand 4, single buffered']
    #allocation11 [shape = 'u8[32768]{0}', space=vmem, size = 0x8000, scoped, tag = 'input window, operand 5, single buffered']
    #allocation12 [shape = 's32[1]{0}', space=sflag, size = 0x4, scoped, tag = 'scoped memory for ptsapt_forward.5']
    #allocation13 [shape = 'u8[512]{0}', space=vmem, size = 0x400, scoped, tag = 'input window, operand 6, single buffered']
    #allocation14 [shape = 'u8[512]{0}', space=vmem, size = 0x400, scoped, tag = 'input window, operand 7, single buffered']
    #allocation15 [shape = 's32[1]{0}', space=sflag, size = 0x4, scoped, tag = 'scoped memory for ptsapt_forward.5']
    #allocation16 [shape = 'u8[512]{0}', space=vmem, size = 0x400, scoped, tag = 'input window, operand 8, single buffered']
    #allocation17 [shape = 'u8[65536]{0}', space=vmem, size = 0x10000, scoped, tag = 'output window, operand 0']
    %14 = vsyncpa [#allocation3], 0
    %s15 = scalar_lea.sflag [#allocation3], 1
    %16 = vsyncpa %s15, 0
    %17 = vsyncpa [#allocation6], 0
    %18 = vsyncpa [#allocation9], 0
    %19 = vsyncpa [#allocation12], 0
    %20 = vsyncpa [#allocation15], 0
    %21 = vsyncpa [#allocation4], 0
    %s22 = scalar_lea.sflag [#allocation4], 1
    %23 = vsyncpa %s22, 0
    loop: start=0, step=1, limit=4
    $region2: #{ptsapt_forward.5} parent=1 // loop_pre_header
      _
    $region3: #{ptsapt_forward.5} parent=1 // loop_header
      %s25 = sphi 0, %s29
      %p26 = scmp.ge.s32.totalorder %s25, 4
      %s35 = sphi 0, %s37
      %s38 = sphi 0, %s35
      %s39 = sphi 0, %s38
      %s55 = sphi 0, %s39
      %s59 = sphi 0, %s59
      %s61 = sphi 0, %s59
      %s62 = sphi 0, %s61
      %s76 = sphi 0, %s62
      %s80 = sphi 0, %s80
      %s82 = sphi 0, %s80
      %s83 = sphi 0, %s82
      %s97 = sphi 0, %s83
      %s101 = sphi 0, %s101
      %s103 = sphi 0, %s101
      %s104 = sphi 0, %s103
      %s118 = sphi 0, %s104
      %s122 = sphi 0, %s122
      %s124 = sphi 0, %s122
      %s125 = sphi 0, %s124
      %s139 = sphi 0, %s125
      %s143 = sphi 0, %s143
      %s145 = sphi 0, %s143
      %s146 = sphi 0, %s145
      %s160 = sphi 0, %s146
      %s164 = sphi 0, %s164
      %s166 = sphi 0, %s164
      %s167 = sphi 0, %s166
      %s181 = sphi 0, %s167
      %s185 = sphi 0, %s185
      %s187 = sphi 0, %s185
      %s188 = sphi 0, %s187
      %s202 = sphi 0, %s188
      %s206 = sphi 0, %s206
      %s208 = sphi 0, %s206
      %s209 = sphi 0, %s208
      %s223 = sphi 0, %s209
      %s229 = sphi 0, %s231
      %s232 = sphi 0, %s229
      %s233 = sphi 0, %s232
      %s249 = sphi 0, %s233
    $region4: #{ptsapt_forward.5} parent=1 // loop_header_branch
      %28 = sbr.rel (%p26) target = $region8
    $region5: #{ptsapt_forward.5} parent=1 // loop_body
      %s30 = ssub.s32 %s25, 1
      %s31 = ssub.s32 %s25, 2
      %s32 = sadd.s32 %s25, 1
      %s33 = ssub.s32 %s25, %s32
      %p34 = scmp.eq.s32.totalorder %s33, 0
      %s36 = sadd.s32 %s35, 1
      %s37 = scalar_select %p34, %s35, %s36
      %p40 = pneg %p34
      %p41 = scmp.eq.s32.totalorder %s25, 1
      %p42 = por %p40, %p41
      %p43 = scmp.ne.s32.totalorder %s35, %s38
      %p44 = scmp.eq.s32.totalorder %s25, 0
      %p45 = por %p43, %p44
      %p46 = scmp.ne.s32.totalorder %s35, %s38
      %p47 = scmp.eq.s32.totalorder %s30, 1
      %p48 = por %p46, %p47
      %p49 = scmp.ne.s32.totalorder %s38, %s39
      %p50 = scmp.eq.s32.totalorder %s30, 0
      %p51 = por %p49, %p50
      %p52 = scmp.ne.s32.totalorder %s38, %s39
      %p53 = scmp.eq.s32.totalorder %s31, 1
      %p54 = por %p52, %p53
      %p56 = scmp.ne.s32.totalorder %s39, %s55
      %p57 = scmp.eq.s32.totalorder %s31, 0
      %p58 = por %p56, %p57
      %s60 = sadd.s32 %s59, 1
      %p63 = scmp.eq.s32.totalorder %s25, 1
      %p64 = scmp.ne.s32.totalorder %s59, %s61
      %p65 = scmp.eq.s32.totalorder %s25, 0
      %p66 = por %p64, %p65
      %p67 = scmp.ne.s32.totalorder %s59, %s61
      %p68 = scmp.eq.s32.totalorder %s30, 1
      %p69 = por %p67, %p68
      %p70 = scmp.ne.s32.totalorder %s61, %s62
      %p71 = scmp.eq.s32.totalorder %s30, 0
      %p72 = por %p70, %p71
      %p73 = scmp.ne.s32.totalorder %s61, %s62
      %p74 = scmp.eq.s32.totalorder %s31, 1
      %p75 = por %p73, %p74
      %p77 = scmp.ne.s32.totalorder %s62, %s76
      %p78 = scmp.eq.s32.totalorder %s31, 0
      %p79 = por %p77, %p78
      %s81 = sadd.s32 %s80, 1
      %p84 = scmp.eq.s32.totalorder %s25, 1
      %p85 = scmp.ne.s32.totalorder %s80, %s82
      %p86 = scmp.eq.s32.totalorder %s25, 0
      %p87 = por %p85, %p86
      %p88 = scmp.ne.s32.totalorder %s80, %s82
      %p89 = scmp.eq.s32.totalorder %s30, 1
      %p90 = por %p88, %p89
      %p91 = scmp.ne.s32.totalorder %s82, %s83
      %p92 = scmp.eq.s32.totalorder %s30, 0
      %p93 = por %p91, %p92
      %p94 = scmp.ne.s32.totalorder %s82, %s83
      %p95 = scmp.eq.s32.totalorder %s31, 1
      %p96 = por %p94, %p95
      %p98 = scmp.ne.s32.totalorder %s83, %s97
      %p99 = scmp.eq.s32.totalorder %s31, 0
      %p100 = por %p98, %p99
      %s102 = sadd.s32 %s101, 1
      %p105 = scmp.eq.s32.totalorder %s25, 1
      %p106 = scmp.ne.s32.totalorder %s101, %s103
      %p107 = scmp.eq.s32.totalorder %s25, 0
      %p108 = por %p106, %p107
      %p109 = scmp.ne.s32.totalorder %s101, %s103
      %p110 = scmp.eq.s32.totalorder %s30, 1
      %p111 = por %p109, %p110
      %p112 = scmp.ne.s32.totalorder %s103, %s104
      %p113 = scmp.eq.s32.totalorder %s30, 0
      %p114 = por %p112, %p113
      %p115 = scmp.ne.s32.totalorder %s103, %s104
      %p116 = scmp.eq.s32.totalorder %s31, 1
      %p117 = por %p115, %p116
      %p119 = scmp.ne.s32.totalorder %s104, %s118
      %p120 = scmp.eq.s32.totalorder %s31, 0
      %p121 = por %p119, %p120
      %s123 = sadd.s32 %s122, 1
      %p126 = scmp.eq.s32.totalorder %s25, 1
      %p127 = scmp.ne.s32.totalorder %s122, %s124
      %p128 = scmp.eq.s32.totalorder %s25, 0
      %p129 = por %p127, %p128
      %p130 = scmp.ne.s32.totalorder %s122, %s124
      %p131 = scmp.eq.s32.totalorder %s30, 1
      %p132 = por %p130, %p131
      %p133 = scmp.ne.s32.totalorder %s124, %s125
      %p134 = scmp.eq.s32.totalorder %s30, 0
      %p135 = por %p133, %p134
      %p136 = scmp.ne.s32.totalorder %s124, %s125
      %p137 = scmp.eq.s32.totalorder %s31, 1
      %p138 = por %p136, %p137
      %p140 = scmp.ne.s32.totalorder %s125, %s139
      %p141 = scmp.eq.s32.totalorder %s31, 0
      %p142 = por %p140, %p141
      %s144 = sadd.s32 %s143, 1
      %p147 = scmp.eq.s32.totalorder %s25, 1
      %p148 = scmp.ne.s32.totalorder %s143, %s145
      %p149 = scmp.eq.s32.totalorder %s25, 0
      %p150 = por %p148, %p149
      %p151 = scmp.ne.s32.totalorder %s143, %s145
      %p152 = scmp.eq.s32.totalorder %s30, 1
      %p153 = por %p151, %p152
      %p154 = scmp.ne.s32.totalorder %s145, %s146
      %p155 = scmp.eq.s32.totalorder %s30, 0
      %p156 = por %p154, %p155
      %p157 = scmp.ne.s32.totalorder %s145, %s146
      %p158 = scmp.eq.s32.totalorder %s31, 1
      %p159 = por %p157, %p158
      %p161 = scmp.ne.s32.totalorder %s146, %s160
      %p162 = scmp.eq.s32.totalorder %s31, 0
      %p163 = por %p161, %p162
      %s165 = sadd.s32 %s164, 1
      %p168 = scmp.eq.s32.totalorder %s25, 1
      %p169 = scmp.ne.s32.totalorder %s164, %s166
      %p170 = scmp.eq.s32.totalorder %s25, 0
      %p171 = por %p169, %p170
      %p172 = scmp.ne.s32.totalorder %s164, %s166
      %p173 = scmp.eq.s32.totalorder %s30, 1
      %p174 = por %p172, %p173
      %p175 = scmp.ne.s32.totalorder %s166, %s167
      %p176 = scmp.eq.s32.totalorder %s30, 0
      %p177 = por %p175, %p176
      %p178 = scmp.ne.s32.totalorder %s166, %s167
      %p179 = scmp.eq.s32.totalorder %s31, 1
      %p180 = por %p178, %p179
      %p182 = scmp.ne.s32.totalorder %s167, %s181
      %p183 = scmp.eq.s32.totalorder %s31, 0
      %p184 = por %p182, %p183
      %s186 = sadd.s32 %s185, 1
      %p189 = scmp.eq.s32.totalorder %s25, 1
      %p190 = scmp.ne.s32.totalorder %s185, %s187
      %p191 = scmp.eq.s32.totalorder %s25, 0
      %p192 = por %p190, %p191
      %p193 = scmp.ne.s32.totalorder %s185, %s187
      %p194 = scmp.eq.s32.totalorder %s30, 1
      %p195 = por %p193, %p194
      %p196 = scmp.ne.s32.totalorder %s187, %s188
      %p197 = scmp.eq.s32.totalorder %s30, 0
      %p198 = por %p196, %p197
      %p199 = scmp.ne.s32.totalorder %s187, %s188
      %p200 = scmp.eq.s32.totalorder %s31, 1
      %p201 = por %p199, %p200
      %p203 = scmp.ne.s32.totalorder %s188, %s202
      %p204 = scmp.eq.s32.totalorder %s31, 0
      %p205 = por %p203, %p204
      %s207 = sadd.s32 %s206, 1
      %p210 = scmp.eq.s32.totalorder %s25, 1
      %p211 = scmp.ne.s32.totalorder %s206, %s208
      %p212 = scmp.eq.s32.totalorder %s25, 0
      %p213 = por %p211, %p212
      %p214 = scmp.ne.s32.totalorder %s206, %s208
      %p215 = scmp.eq.s32.totalorder %s30, 1
      %p216 = por %p214, %p215
      %p217 = scmp.ne.s32.totalorder %s208, %s209
      %p218 = scmp.eq.s32.totalorder %s30, 0
      %p219 = por %p217, %p218
      %p220 = scmp.ne.s32.totalorder %s208, %s209
      %p221 = scmp.eq.s32.totalorder %s31, 1
      %p222 = por %p220, %p221
      %p224 = scmp.ne.s32.totalorder %s209, %s223
      %p225 = scmp.eq.s32.totalorder %s31, 0
      %p226 = por %p224, %p225
      %s227 = ssub.s32 %s25, %s32
      %p228 = scmp.eq.s32.totalorder %s227, 0
      %s230 = sadd.s32 %s229, 1
      %s231 = scalar_select %p228, %s229, %s230
      %p234 = pneg %p228
      %p235 = scmp.eq.s32.totalorder %s25, 1
      %p236 = por %p234, %p235
      %p237 = scmp.ne.s32.totalorder %s229, %s232
      %p238 = scmp.eq.s32.totalorder %s25, 0
      %p239 = por %p237, %p238
      %p240 = scmp.ne.s32.totalorder %s229, %s232
      %p241 = scmp.eq.s32.totalorder %s30, 1
      %p242 = por %p240, %p241
      %p243 = scmp.ne.s32.totalorder %s232, %s233
      %p244 = scmp.eq.s32.totalorder %s30, 0
      %p245 = por %p243, %p244
      %p246 = scmp.ne.s32.totalorder %s232, %s233
      %p247 = scmp.eq.s32.totalorder %s31, 1
      %p248 = por %p246, %p247
      %p250 = scmp.ne.s32.totalorder %s233, %s249
      %p251 = scmp.eq.s32.totalorder %s31, 0
      %p252 = por %p250, %p251
      %p253 = scmp.le.s32.totalorder 1, %s25
      %p254 = scmp.lt.s32.totalorder %s25, 3
      %p255 = pnand %p253, %p254
      %p256 = pneg %p255
      // Predicated region
      $region9: #{ptsapt_forward.5} parent=5 // pred_check
        _
      $region10: #{ptsapt_forward.5} parent=5 // pred_check_branch
        %258 = sbr.rel (%p255) target = $region12
      $region11: #{ptsapt_forward.5} parent=5 // pred_region
        %s259 = ssub.s32 %s25, 1
        // Predicated region
        $region13: #{ptsapt_forward.5} parent=11 // pred_check
          %p260 = pneg %p72
        $region14: #{ptsapt_forward.5} parent=11 // pred_check_branch
          %262 = sbr.rel (%p260) target = $region16
        $region15: #{ptsapt_forward.5} parent=11 // pred_region
          %s264 = ssub.s32 16, 16
          %265 = vsyncadd [#allocation6], %s264
          %s267 = sshll.u32 [#allocation5], 4
          %s268 = int_to_ptr.vmem [resolvable:$true] %s267
          %270 = dma.hbm_to_vmem [thread:$0]  %s1, 16, %s268, [#allocation6]
        $region16: #{ptsapt_forward.5} parent=11 // pred_fallthru
          _
        // Predicated region
        $region17: #{ptsapt_forward.5} parent=11 // pred_check
          %p271 = pneg %p93
        $region18: #{ptsapt_forward.5} parent=11 // pred_check_branch
          %273 = sbr.rel (%p271) target = $region20
        $region19: #{ptsapt_forward.5} parent=11 // pred_region
          %s275 = ssub.s32 16, 16
          %276 = vsyncadd [#allocation6], %s275
          %s278 = sshll.u32 [#allocation7], 4
          %s279 = int_to_ptr.vmem [resolvable:$true] %s278
          %281 = dma.hbm_to_vmem [thread:$0]  %s2, 16, %s279, [#allocation6]
        $region20: #{ptsapt_forward.5} parent=11 // pred_fallthru
          _
        // Predicated region
        $region21: #{ptsapt_forward.5} parent=11 // pred_check
          %p282 = pneg %p114
        $region22: #{ptsapt_forward.5} parent=11 // pred_check_branch
          %284 = sbr.rel (%p282) target = $region24
        $region23: #{ptsapt_forward.5} parent=11 // pred_region
          %s286 = ssub.s32 512, 512
          %287 = vsyncadd [#allocation9], %s286
          %s288 = sshll.u32 [#allocation8], 4
          %s289 = int_to_ptr.vmem [resolvable:$true] %s288
          %294 = dma.hbm_to_vmem [thread:$0]  %s3, 512, %s289, [#allocation9], 128, 128, 8
        $region24: #{ptsapt_forward.5} parent=11 // pred_fallthru
          _
        // Predicated region
        $region25: #{ptsapt_forward.5} parent=11 // pred_check
          %p295 = pneg %p135
        $region26: #{ptsapt_forward.5} parent=11 // pred_check_branch
          %297 = sbr.rel (%p295) target = $region28
        $region27: #{ptsapt_forward.5} parent=11 // pred_region
          %s299 = ssub.s32 32, 32
          %300 = vsyncadd [#allocation9], %s299
          %s302 = sshll.u32 [#allocation10], 4
          %s303 = int_to_ptr.vmem [resolvable:$true] %s302
          %305 = dma.hbm_to_vmem [thread:$0]  %s4, 32, %s303, [#allocation9]
        $region28: #{ptsapt_forward.5} parent=11 // pred_fallthru
          _
        // Predicated region
        $region29: #{ptsapt_forward.5} parent=11 // pred_check
          %p306 = pneg %p156
        $region30: #{ptsapt_forward.5} parent=11 // pred_check_branch
          %308 = sbr.rel (%p306) target = $region32
        $region31: #{ptsapt_forward.5} parent=11 // pred_region
          %s310 = ssub.s32 1024, 1024
          %311 = vsyncadd [#allocation12], %s310
          %s312 = sshll.u32 [#allocation11], 4
          %s313 = int_to_ptr.vmem [resolvable:$true] %s312
          %318 = dma.hbm_to_vmem [thread:$0]  %s5, 1024, %s313, [#allocation12], 64, 64, 4
        $region32: #{ptsapt_forward.5} parent=11 // pred_fallthru
          _
        // Predicated region
        $region33: #{ptsapt_forward.5} parent=11 // pred_check
          %p319 = pneg %p177
        $region34: #{ptsapt_forward.5} parent=11 // pred_check_branch
          %321 = sbr.rel (%p319) target = $region36
        $region35: #{ptsapt_forward.5} parent=11 // pred_region
          %s323 = ssub.s32 16, 16
          %324 = vsyncadd [#allocation12], %s323
          %s326 = sshll.u32 [#allocation13], 4
          %s327 = int_to_ptr.vmem [resolvable:$true] %s326
          %329 = dma.hbm_to_vmem [thread:$0]  %s6, 16, %s327, [#allocation12]
        $region36: #{ptsapt_forward.5} parent=11 // pred_fallthru
          _
        // Predicated region
        $region37: #{ptsapt_forward.5} parent=11 // pred_check
          %p330 = pneg %p198
        $region38: #{ptsapt_forward.5} parent=11 // pred_check_branch
          %332 = sbr.rel (%p330) target = $region40
        $region39: #{ptsapt_forward.5} parent=11 // pred_region
          %s334 = ssub.s32 16, 16
          %335 = vsyncadd [#allocation15], %s334
          %s337 = sshll.u32 [#allocation14], 4
          %s338 = int_to_ptr.vmem [resolvable:$true] %s337
          %340 = dma.hbm_to_vmem [thread:$0]  %s7, 16, %s338, [#allocation15]
        $region40: #{ptsapt_forward.5} parent=11 // pred_fallthru
          _
        // Predicated region
        $region41: #{ptsapt_forward.5} parent=11 // pred_check
          %p341 = pneg %p219
        $region42: #{ptsapt_forward.5} parent=11 // pred_check_branch
          %343 = sbr.rel (%p341) target = $region44
        $region43: #{ptsapt_forward.5} parent=11 // pred_region
          %s345 = ssub.s32 16, 16
          %346 = vsyncadd [#allocation15], %s345
          %s348 = sshll.u32 [#allocation16], 4
          %s349 = int_to_ptr.vmem [resolvable:$true] %s348
          %351 = dma.hbm_to_vmem [thread:$0]  %s8, 16, %s349, [#allocation15]
        $region44: #{ptsapt_forward.5} parent=11 // pred_fallthru
          _
      $region12: #{ptsapt_forward.5} parent=5 // pred_fallthru
        _
      %p352 = scmp.lt.s32.totalorder %s25, 2
      // Predicated region
      $region45: #{ptsapt_forward.5} parent=5 // pred_check
        %p353 = pneg %p352
      $region46: #{ptsapt_forward.5} parent=5 // pred_check_branch
        %355 = sbr.rel (%p353) target = $region48
      $region47: #{ptsapt_forward.5} parent=5 // pred_region
        // Predicated region
        $region49: #{ptsapt_forward.5} parent=47 // pred_check
          %p356 = pneg %p45
        $region50: #{ptsapt_forward.5} parent=47 // pred_check_branch
          %358 = sbr.rel (%p356) target = $region52
        $region51: #{ptsapt_forward.5} parent=47 // pred_region
          %s359 = sand.u32 %s35, 1
          %s360 = scalar_lea.sflag [#allocation3], %s359
          %s361 = sand.u32 %s35, 1
          %s362 = smul.addr %s361, 64
          %s363 = scalar_lea.vmem [#allocation2], %s362
          %s364 = smul.u32 8, %s25
          %s366 = ssub.s32 1024, 1024
          %367 = vsyncadd %s360, %s366
          %s368 = smul.addr %s364, 128
          %s369 = scalar_lea.hbm %s0, %s368
          %s370 = sshll.u32 %s363, 4
          %s371 = int_to_ptr.vmem [resolvable:$true] %s370
          %376 = dma.hbm_to_vmem [thread:$0]  %s369, 1024, %s371, %s360, 128, 128, 8
        $region52: #{ptsapt_forward.5} parent=47 // pred_fallthru
          _
      $region48: #{ptsapt_forward.5} parent=5 // pred_fallthru
        _
      %p377 = scmp.le.s32.totalorder 1, %s25
      %p378 = scmp.lt.s32.totalorder %s25, 3
      %p379 = pnand %p377, %p378
      %p380 = pneg %p379
      // Predicated region
      $region53: #{ptsapt_forward.5} parent=5 // pred_check
        _
      $region54: #{ptsapt_forward.5} parent=5 // pred_check_branch
        %382 = sbr.rel (%p379) target = $region56
      $region55: #{ptsapt_forward.5} parent=5 // pred_region
        %s383 = ssub.s32 %s25, 1
        %s384 = sand.u32 %s38, 1
        %s385 = scalar_lea.sflag [#allocation3], %s384
        %s386 = sand.u32 %s38, 1
        %s387 = smul.addr %s386, 64
        %s388 = scalar_lea.vmem [#allocation2], %s387
        // Predicated region
        $region57: #{ptsapt_forward.5} parent=55 // pred_check
          %p389 = pneg %p51
        $region58: #{ptsapt_forward.5} parent=55 // pred_check_branch
          %391 = sbr.rel (%p389) target = $region60
        $region59: #{ptsapt_forward.5} parent=55 // pred_region
          %392 = dma.done %s385, 1024
        $region60: #{ptsapt_forward.5} parent=55 // pred_fallthru
          _
        // Predicated region
        $region61: #{ptsapt_forward.5} parent=55 // pred_check
          %p393 = pneg %p72
        $region62: #{ptsapt_forward.5} parent=55 // pred_check_branch
          %395 = sbr.rel (%p393) target = $region64
        $region63: #{ptsapt_forward.5} parent=55 // pred_region
          %396 = dma.done [#allocation6], 16
        $region64: #{ptsapt_forward.5} parent=55 // pred_fallthru
          _
        // Predicated region
        $region65: #{ptsapt_forward.5} parent=55 // pred_check
          %p397 = pneg %p93
        $region66: #{ptsapt_forward.5} parent=55 // pred_check_branch
          %399 = sbr.rel (%p397) target = $region68
        $region67: #{ptsapt_forward.5} parent=55 // pred_region
          %400 = dma.done [#allocation6], 16
        $region68: #{ptsapt_forward.5} parent=55 // pred_fallthru
          _
        // Predicated region
        $region69: #{ptsapt_forward.5} parent=55 // pred_check
          %p401 = pneg %p114
        $region70: #{ptsapt_forward.5} parent=55 // pred_check_branch
          %403 = sbr.rel (%p401) target = $region72
        $region71: #{ptsapt_forward.5} parent=55 // pred_region
          %404 = dma.done [#allocation9], 512
        $region72: #{ptsapt_forward.5} parent=55 // pred_fallthru
          _
        // Predicated region
        $region73: #{ptsapt_forward.5} parent=55 // pred_check
          %p405 = pneg %p135
        $region74: #{ptsapt_forward.5} parent=55 // pred_check_branch
          %407 = sbr.rel (%p405) target = $region76
        $region75: #{ptsapt_forward.5} parent=55 // pred_region
          %408 = dma.done [#allocation9], 32
        $region76: #{ptsapt_forward.5} parent=55 // pred_fallthru
          _
        // Predicated region
        $region77: #{ptsapt_forward.5} parent=55 // pred_check
          %p409 = pneg %p156
        $region78: #{ptsapt_forward.5} parent=55 // pred_check_branch
          %411 = sbr.rel (%p409) target = $region80
        $region79: #{ptsapt_forward.5} parent=55 // pred_region
          %412 = dma.done [#allocation12], 1024
        $region80: #{ptsapt_forward.5} parent=55 // pred_fallthru
          _
        // Predicated region
        $region81: #{ptsapt_forward.5} parent=55 // pred_check
          %p413 = pneg %p177
        $region82: #{ptsapt_forward.5} parent=55 // pred_check_branch
          %415 = sbr.rel (%p413) target = $region84
        $region83: #{ptsapt_forward.5} parent=55 // pred_region
          %416 = dma.done [#allocation12], 16
        $region84: #{ptsapt_forward.5} parent=55 // pred_fallthru
          _
        // Predicated region
        $region85: #{ptsapt_forward.5} parent=55 // pred_check
          %p417 = pneg %p198
        $region86: #{ptsapt_forward.5} parent=55 // pred_check_branch
          %419 = sbr.rel (%p417) target = $region88
        $region87: #{ptsapt_forward.5} parent=55 // pred_region
          %420 = dma.done [#allocation15], 16
        $region88: #{ptsapt_forward.5} parent=55 // pred_fallthru
          _
        // Predicated region
        $region89: #{ptsapt_forward.5} parent=55 // pred_check
          %p421 = pneg %p219
        $region90: #{ptsapt_forward.5} parent=55 // pred_check_branch
          %423 = sbr.rel (%p421) target = $region92
        $region91: #{ptsapt_forward.5} parent=55 // pred_region
          %424 = dma.done [#allocation15], 16
        $region92: #{ptsapt_forward.5} parent=55 // pred_fallthru
          _
        %s425 = sand.u32 %s38, 1
        %s426 = scalar_lea.sflag [#allocation3], %s425
        %s427 = sand.u32 %s38, 1
        %s428 = smul.addr %s427, 64
        %s429 = scalar_lea.vmem [#allocation2], %s428
        %p430 = pneg %p51
        %p431 = pneg %p48
        %p432 = pneg %p72
        %p433 = pneg %p69
        %p434 = pneg %p93
        %p435 = pneg %p90
        %p436 = pneg %p114
        %p437 = pneg %p111
        %p438 = pneg %p135
        %p439 = pneg %p132
        %p440 = pneg %p156
        %p441 = pneg %p153
        %p442 = pneg %p177
        %p443 = pneg %p174
        %p444 = pneg %p198
        %p445 = pneg %p195
        %p446 = pneg %p219
        %p447 = pneg %p216
        %p448 = pneg %p245
        %p449 = pneg %p242
        %s450 = sand.u32 %s232, 1
        %s451 = scalar_lea.sflag [#allocation4], %s450
        %s452 = sand.u32 %s232, 1
        %s453 = smul.addr %s452, 64
        %s454 = scalar_lea.vmem [#allocation17], %s453
        %s455 = smul.u32 8, %s30
        %s456 = smul.u32 8, %s30
        %v458 = vld [vmem:[%s388] sm:$0xff]
        %v459 = vld [vmem:[%s388 + $0x8] sm:$0xff]
        %v460 = vld [vmem:[%s388 + $0x10] sm:$0xff]
        %v461 = vld [vmem:[%s388 + $0x18] sm:$0xff]
        %v462 = vld [vmem:[%s388 + $0x20] sm:$0xff]
        %v463 = vld [vmem:[%s388 + $0x28] sm:$0xff]
        %v464 = vld [vmem:[%s388 + $0x30] sm:$0xff]
        %v465 = vld [vmem:[%s388 + $0x38] sm:$0xff]
        %v466 = vld [vmem:[#allocation5] sm:$0x1]
        %v467 = vld [vmem:[#allocation7] sm:$0x1]
        %vm468 = vcmask 261120
        %v469 = vsel %vm468, %v458, 0.0
        %470 = vadd.xlane.f32.xlu0 %v469
        %v471 = vpop.xlane.xlu0 %470
        %v472 = vsel %vm468, %v459, 0.0
        %473 = vadd.xlane.f32.xlu0 %v472
        %v474 = vpop.xlane.xlu0 %473
        %v475 = vsel %vm468, %v460, 0.0
        %476 = vadd.xlane.f32.xlu0 %v475
        %v477 = vpop.xlane.xlu0 %476
        %v478 = vsel %vm468, %v461, 0.0
        %479 = vadd.xlane.f32.xlu0 %v478
        %v480 = vpop.xlane.xlu0 %479
        %v481 = vsel %vm468, %v462, 0.0
        %482 = vadd.xlane.f32.xlu0 %v481
        %v483 = vpop.xlane.xlu0 %482
        %v484 = vsel %vm468, %v463, 0.0
        %485 = vadd.xlane.f32.xlu0 %v484
        %v486 = vpop.xlane.xlu0 %485
        %v487 = vsel %vm468, %v464, 0.0
        %488 = vadd.xlane.f32.xlu0 %v487
        %v489 = vpop.xlane.xlu0 %488
        %v490 = vsel %vm468, %v465, 0.0
        %491 = vadd.xlane.f32.xlu0 %v490
        %v492 = vpop.xlane.xlu0 %491
        %v493 = vrcp.pop 32.0
        %v494 = vmul.f32 %v471, %v493
        %v495 = vmul.f32 %v474, %v493
        %v496 = vmul.f32 %v477, %v493
        %v497 = vmul.f32 %v480, %v493
        %v498 = vmul.f32 %v483, %v493
        %v499 = vmul.f32 %v486, %v493
        %v500 = vmul.f32 %v489, %v493
        %v501 = vmul.f32 %v492, %v493
        %v502 = vsub.f32 %v458, %v494
        %v503 = vsub.f32 %v459, %v495
        %v504 = vsub.f32 %v460, %v496
        %v505 = vsub.f32 %v461, %v497
        %v506 = vsub.f32 %v462, %v498
        %v507 = vsub.f32 %v463, %v499
        %v508 = vsub.f32 %v464, %v500
        %v509 = vsub.f32 %v465, %v501
        %v510 = vmul.f32 %v502, %v502
        %v511 = vmul.f32 %v503, %v503
        %v512 = vmul.f32 %v504, %v504
        %v513 = vmul.f32 %v505, %v505
        %v514 = vmul.f32 %v506, %v506
        %v515 = vmul.f32 %v507, %v507
        %v516 = vmul.f32 %v508, %v508
        %v517 = vmul.f32 %v509, %v509
        %v518 = vsel %vm468, %v510, 0.0
        %519 = vadd.xlane.f32.xlu0 %v518
        %v520 = vpop.xlane.xlu0 %519
        %v521 = vsel %vm468, %v511, 0.0
        %522 = vadd.xlane.f32.xlu0 %v521
        %v523 = vpop.xlane.xlu0 %522
        %v524 = vsel %vm468, %v512, 0.0
        %525 = vadd.xlane.f32.xlu0 %v524
        %v526 = vpop.xlane.xlu0 %525
        %v527 = vsel %vm468, %v513, 0.0
        %528 = vadd.xlane.f32.xlu0 %v527
        %v529 = vpop.xlane.xlu0 %528
        %v530 = vsel %vm468, %v514, 0.0
        %531 = vadd.xlane.f32.xlu0 %v530
        %v532 = vpop.xlane.xlu0 %531
        %v533 = vsel %vm468, %v515, 0.0
        %534 = vadd.xlane.f32.xlu0 %v533
        %v535 = vpop.xlane.xlu0 %534
        %v536 = vsel %vm468, %v516, 0.0
        %537 = vadd.xlane.f32.xlu0 %v536
        %v538 = vpop.xlane.xlu0 %537
        %v539 = vsel %vm468, %v517, 0.0
        %540 = vadd.xlane.f32.xlu0 %v539
        %v541 = vpop.xlane.xlu0 %540
        %v542 = vmul.f32 %v520, %v493
        %v543 = vmul.f32 %v523, %v493
        %v544 = vmul.f32 %v526, %v493
        %v545 = vmul.f32 %v529, %v493
        %v546 = vmul.f32 %v532, %v493
        %v547 = vmul.f32 %v535, %v493
        %v548 = vmul.f32 %v538, %v493
        %v549 = vmul.f32 %v541, %v493
        %v550 = vadd.f32 %v542, 1e-05
        %v551 = vadd.f32 %v543, 1e-05
        %v552 = vadd.f32 %v544, 1e-05
        %v553 = vadd.f32 %v545, 1e-05
        %v554 = vadd.f32 %v546, 1e-05
        %v555 = vadd.f32 %v547, 1e-05
        %v556 = vadd.f32 %v548, 1e-05
        %v557 = vadd.f32 %v549, 1e-05
        %v558 = vrsqrt.pop %v550
        %v559 = vrsqrt.pop %v551
        %v560 = vrsqrt.pop %v552
        %v561 = vrsqrt.pop %v553
        %v562 = vrsqrt.pop %v554
        %v563 = vrsqrt.pop %v555
        %v564 = vrsqrt.pop %v556
        %v565 = vrsqrt.pop %v557
        %v566 = vmul.f32 %v502, %v558
        %v567 = vmul.f32 %v503, %v559
        %v568 = vmul.f32 %v504, %v560
        %v569 = vmul.f32 %v505, %v561
        %v570 = vmul.f32 %v506, %v562
        %v571 = vmul.f32 %v507, %v563
        %v572 = vmul.f32 %v508, %v564
        %v573 = vmul.f32 %v509, %v565
        %v575 = vlaneseq
        %v576 = vshrl.u32 %v575, 7
        %v577 = vsub.s32 0, %v576
        %v578 = vrot.slane %v466, %v577
        %v580 = vmul.f32 %v566, %v578
        %v581 = vmul.f32 %v567, %v578
        %v582 = vmul.f32 %v568, %v578
        %v583 = vmul.f32 %v569, %v578
        %v584 = vmul.f32 %v570, %v578
        %v585 = vmul.f32 %v571, %v578
        %v586 = vmul.f32 %v572, %v578
        %v587 = vmul.f32 %v573, %v578
        %v589 = vlaneseq
        %v590 = vshrl.u32 %v589, 7
        %v591 = vsub.s32 0, %v590
        %v592 = vrot.slane %v467, %v591
        %v594 = vadd.f32 %v580, %v592
        %v595 = vadd.f32 %v581, %v592
        %v596 = vadd.f32 %v582, %v592
        %v597 = vadd.f32 %v583, %v592
        %v598 = vadd.f32 %v584, %v592
        %v599 = vadd.f32 %v585, %v592
        %v600 = vadd.f32 %v586, %v592
        %v601 = vadd.f32 %v587, %v592
        %v602 = vpack.c.bf16 %v595, %v594
        %v603 = vpack.c.bf16 %v597, %v596
        %v604 = vpack.c.bf16 %v599, %v598
        %v605 = vpack.c.bf16 %v601, %v600
        %v606 = vld [vmem:[#allocation8] sm:$0xff]
        %v607 = vld [vmem:[#allocation8 + $0x8] sm:$0xff]
        %v608 = vld [vmem:[#allocation8 + $0x10] sm:$0xff]
        %v609 = vld [vmem:[#allocation8 + $0x18] sm:$0xff]
        %v610 = vld [vmem:[#allocation10] sm:$0x3]
        %v612 = vlaneseq
        %v613 = vshrl.u32 %v612, 7
        %v614 = vsub.s32 0, %v613
        %v615 = vrot.slane %v610, %v614
        %v616 = vlaneseq
        %v617 = vshrl.u32 %v616, 7
        %v618 = vsub.s32 1, %v617
        %v619 = vrot.slane %v610, %v618
        %v626 = vunpack.c.l.b16 %v606
        %v627 = vunpack.c.h.b16 %v606
        %v628 = vunpack.c.l.b16 %v607
        %v629 = vunpack.c.h.b16 %v607
        %v630 = vunpack.c.l.b16 %v608
        %v631 = vunpack.c.h.b16 %v608
        %v632 = vunpack.c.l.b16 %v609
        %v633 = vunpack.c.h.b16 %v609
        %v634 = vpack.c.b16 %v628, %v626
        %v635 = vpack.c.b16 %v629, %v627
        %v636 = vpack.c.b16 %v632, %v630
        %v637 = vpack.c.b16 %v633, %v631
        %v643 = vsel %vm468, %v602, 0
        %v646 = vsel %vm468, %v603, 0
        %v649 = vsel %vm468, %v604, 0
        %v652 = vsel %vm468, %v605, 0
        %654 = vmatprep.subr.bf16.mxu0 %v635
        %655 = vmatpush1.bf16.msra.mxu0 %v634
        %656 = vmatprep.subr.bf16.mxu0 %v637
        %657 = vmatpush1.bf16.msra.mxu0 %v636
        %658 = vmatprep.subr.bf16.mxu0 0
        %659 = vmatpush1.bf16.msra.mxu0 0
        %660 = vmatprep.subr.bf16.mxu0 0
        %661 = vmatpush1.bf16.msra.mxu0 0
        %662 = vmatprep.subr.bf16.mxu0 0
        %663 = vmatpush1.bf16.msra.mxu0 0
        %664 = vmatprep.subr.bf16.mxu0 0
        %665 = vmatpush1.bf16.msra.mxu0 0
        %666 = vmatprep.subr.bf16.mxu0 0
        %667 = vmatpush1.bf16.msra.mxu0 0
        %668 = vmatprep.subr.bf16.mxu0 0
        %669 = vmatpush1.bf16.msra.mxu0 0
        %670 = vmatprep.subr.bf16.mxu0 0
        %671 = vmatpush1.bf16.msra.mxu0 0
        %672 = vmatprep.subr.bf16.mxu0 0
        %673 = vmatpush1.bf16.msra.mxu0 0
        %674 = vmatprep.subr.bf16.mxu0 0
        %675 = vmatpush1.bf16.msra.mxu0 0
        %676 = vmatprep.subr.bf16.mxu0 0
        %677 = vmatpush1.bf16.msra.mxu0 0
        %678 = vmatprep.subr.bf16.mxu0 0
        %679 = vmatpush1.bf16.msra.mxu0 0
        %680 = vmatprep.subr.bf16.mxu0 0
        %681 = vmatpush1.bf16.msra.mxu0 0
        %682 = vmatprep.subr.bf16.mxu0 0
        %683 = vmatpush1.bf16.msra.mxu0 0
        %684 = vmatprep.subr.bf16.mxu0 0
        %685 = vmatpush1.bf16.msra.mxu0 0
        %686 = vmatprep.mubr.bf16.mxu0 0
        %687 = vmatmul.mubr.bf16.gmra.mrb[0].mxu0 %v643
        %v688 = vpop.f32.mrb[0].mxu0
        %v689 = vadd.f32 %v615, %v688
        %v690 = vpop.f32.mrb[0].mxu0
        %v691 = vadd.f32 %v619, %v690
        %v692 = vpop.f32.mrb[0].mxu0
        %v693 = vadd.f32 %v615, %v692
        %v694 = vpop.f32.mrb[0].mxu0
        %v695 = vadd.f32 %v619, %v694
        %696 = vmatprep.mubr.bf16.mxu0 0
        %697 = vmatmul.mubr.bf16.gmra.mrb[0].mxu0 %v646
        %v698 = vpop.f32.mrb[0].mxu0
        %v699 = vadd.f32 %v615, %v698
        %v700 = vpop.f32.mrb[0].mxu0
        %v701 = vadd.f32 %v619, %v700
        %v702 = vpop.f32.mrb[0].mxu0
        %v703 = vadd.f32 %v615, %v702
        %v704 = vpop.f32.mrb[0].mxu0
        %v705 = vadd.f32 %v619, %v704
        %706 = vmatprep.mubr.bf16.mxu0 0
        %707 = vmatmul.mubr.bf16.gmra.mrb[0].mxu0 %v649
        %v708 = vpop.f32.mrb[0].mxu0
        %v709 = vadd.f32 %v615, %v708
        %v710 = vpop.f32.mrb[0].mxu0
        %v711 = vadd.f32 %v619, %v710
        %v712 = vpop.f32.mrb[0].mxu0
        %v713 = vadd.f32 %v615, %v712
        %v714 = vpop.f32.mrb[0].mxu0
        %v715 = vadd.f32 %v619, %v714
        %716 = vmatprep.mubr.bf16.mxu0 0
        %717 = vmatmul.mubr.bf16.gmra.mrb[0].mxu0 %v652
        %v718 = vpop.f32.mrb[0].mxu0
        %v719 = vadd.f32 %v615, %v718
        %v720 = vpop.f32.mrb[0].mxu0
        %v721 = vadd.f32 %v619, %v720
        %v722 = vpop.f32.mrb[0].mxu0
        %v723 = vadd.f32 %v615, %v722
        %v724 = vpop.f32.mrb[0].mxu0
        %v725 = vadd.f32 %v619, %v724
        %726 = vdwg.mxu0
        %v727 = vadd.f32 %v689, %v693
        %v728 = vrot.slane %v727, 4
        %v729 = vadd.f32 %v727, %v728
        %v730 = vrot.slane %v729, 2
        %v731 = vadd.f32 %v729, %v730
        %v732 = vrot.slane %v731, 1
        %v733 = vadd.f32 %v731, %v732
        %v734 = vadd.f32 %v699, %v703
        %v735 = vrot.slane %v734, 4
        %v736 = vadd.f32 %v734, %v735
        %v737 = vrot.slane %v736, 2
        %v738 = vadd.f32 %v736, %v737
        %v739 = vrot.slane %v738, 1
        %v740 = vadd.f32 %v738, %v739
        %v741 = vadd.f32 %v709, %v713
        %v742 = vrot.slane %v741, 4
        %v743 = vadd.f32 %v741, %v742
        %v744 = vrot.slane %v743, 2
        %v745 = vadd.f32 %v743, %v744
        %v746 = vrot.slane %v745, 1
        %v747 = vadd.f32 %v745, %v746
        %v748 = vadd.f32 %v719, %v723
        %v749 = vrot.slane %v748, 4
        %v750 = vadd.f32 %v748, %v749
        %v751 = vrot.slane %v750, 2
        %v752 = vadd.f32 %v750, %v751
        %v753 = vrot.slane %v752, 1
        %v754 = vadd.f32 %v752, %v753
        %v755 = vrcp.pop 16.0
        %v756 = vmul.f32 %v733, %v755
        %v757 = vmul.f32 %v740, %v755
        %v758 = vmul.f32 %v747, %v755
        %v759 = vmul.f32 %v754, %v755
        %v760 = vxor.u32 %v691, 2147483648
        %v761 = vxor.u32 %v695, 2147483648
        %v762 = vxor.u32 %v701, 2147483648
        %v763 = vxor.u32 %v705, 2147483648
        %v764 = vxor.u32 %v711, 2147483648
        %v765 = vxor.u32 %v715, 2147483648
        %v766 = vxor.u32 %v721, 2147483648
        %v767 = vxor.u32 %v725, 2147483648
        %v768 = vmul.f32 %v760, 1.442695
        %v769 = vpow.pop %v768
        %v770 = vmul.f32 %v761, 1.442695
        %v771 = vpow.pop %v770
        %v772 = vmul.f32 %v762, 1.442695
        %v773 = vpow.pop %v772
        %v774 = vmul.f32 %v763, 1.442695
        %v775 = vpow.pop %v774
        %v776 = vmul.f32 %v764, 1.442695
        %v777 = vpow.pop %v776
        %v778 = vmul.f32 %v765, 1.442695
        %v779 = vpow.pop %v778
        %v780 = vmul.f32 %v766, 1.442695
        %v781 = vpow.pop %v780
        %v782 = vmul.f32 %v767, 1.442695
        %v783 = vpow.pop %v782
        %v784 = vadd.f32 %v769, 1.0
        %v785 = vadd.f32 %v771, 1.0
        %v786 = vadd.f32 %v773, 1.0
        %v787 = vadd.f32 %v775, 1.0
        %v788 = vadd.f32 %v777, 1.0
        %v789 = vadd.f32 %v779, 1.0
        %v790 = vadd.f32 %v781, 1.0
        %v791 = vadd.f32 %v783, 1.0
        %v792 = vrcp.pop %v784
        %v793 = vmul.f32 1.0, %v792
        %v794 = vrcp.pop %v785
        %v795 = vmul.f32 1.0, %v794
        %v796 = vrcp.pop %v786
        %v797 = vmul.f32 1.0, %v796
        %v798 = vrcp.pop %v787
        %v799 = vmul.f32 1.0, %v798
        %v800 = vrcp.pop %v788
        %v801 = vmul.f32 1.0, %v800
        %v802 = vrcp.pop %v789
        %v803 = vmul.f32 1.0, %v802
        %v804 = vrcp.pop %v790
        %v805 = vmul.f32 1.0, %v804
        %v806 = vrcp.pop %v791
        %v807 = vmul.f32 1.0, %v806
        %v808 = vmul.f32 %v756, %v793
        %v809 = vmul.f32 %v756, %v795
        %v810 = vmul.f32 %v757, %v797
        %v811 = vmul.f32 %v757, %v799
        %v812 = vmul.f32 %v758, %v801
        %v813 = vmul.f32 %v758, %v803
        %v814 = vmul.f32 %v759, %v805
        %v815 = vmul.f32 %v759, %v807
        %v816 = vpack.c.bf16 %v809, %v808
        %v817 = vpack.c.bf16 %v811, %v810
        %v818 = vpack.c.bf16 %v813, %v812
        %v819 = vpack.c.bf16 %v815, %v814
        %v820 = vld [vmem:[#allocation11] sm:$0xf]
        %v821 = vld [vmem:[#allocation11 + $0x4] sm:$0xf]
        %v822 = vld [vmem:[#allocation11 + $0x8] sm:$0xf]
        %v823 = vld [vmem:[#allocation11 + $0xc] sm:$0xf]
        %v824 = vld [vmem:[#allocation11 + $0x10] sm:$0xf]
        %v825 = vld [vmem:[#allocation11 + $0x14] sm:$0xf]
        %v826 = vld [vmem:[#allocation11 + $0x18] sm:$0xf]
        %v827 = vld [vmem:[#allocation11 + $0x1c] sm:$0xf]
        %v828 = vld [vmem:[#allocation11 + $0x20] sm:$0xf]
        %v829 = vld [vmem:[#allocation11 + $0x24] sm:$0xf]
        %v830 = vld [vmem:[#allocation11 + $0x28] sm:$0xf]
        %v831 = vld [vmem:[#allocation11 + $0x2c] sm:$0xf]
        %v832 = vld [vmem:[#allocation11 + $0x30] sm:$0xf]
        %v833 = vld [vmem:[#allocation11 + $0x34] sm:$0xf]
        %v834 = vld [vmem:[#allocation11 + $0x38] sm:$0xf]
        %v835 = vld [vmem:[#allocation11 + $0x3c] sm:$0xf]
        %v836 = vld [vmem:[#allocation13] sm:$0x1]
        %v838 = vlaneseq
        %v839 = vshrl.u32 %v838, 7
        %v840 = vsub.s32 0, %v839
        %v841 = vrot.slane %v836, %v840
        %v859 = vunpack.c.l.b16 %v820
        %v860 = vunpack.c.l.b16 %v821
        %v861 = vunpack.c.l.b16 %v822
        %v862 = vunpack.c.l.b16 %v823
        %v863 = vunpack.c.l.b16 %v824
        %v864 = vunpack.c.l.b16 %v825
        %v865 = vunpack.c.l.b16 %v826
        %v866 = vunpack.c.l.b16 %v827
        %v867 = vunpack.c.l.b16 %v828
        %v868 = vunpack.c.l.b16 %v829
        %v869 = vunpack.c.l.b16 %v830
        %v870 = vunpack.c.l.b16 %v831
        %v871 = vunpack.c.l.b16 %v832
        %v872 = vunpack.c.l.b16 %v833
        %v873 = vunpack.c.l.b16 %v834
        %v874 = vunpack.c.l.b16 %v835
        %v875 = vpack.c.b16 %v860, %v859
        %v876 = vpack.c.b16 %v862, %v861
        %v877 = vpack.c.b16 %v864, %v863
        %v878 = vpack.c.b16 %v866, %v865
        %v879 = vpack.c.b16 %v868, %v867
        %v880 = vpack.c.b16 %v870, %v869
        %v881 = vpack.c.b16 %v872, %v871
        %v882 = vpack.c.b16 %v874, %v873
        %891 = vmatprep.subr.bf16.mxu0 0
        %892 = vmatpush1.bf16.msra.mxu0 %v875
        %893 = vmatprep.subr.bf16.mxu0 0
        %894 = vmatpush1.bf16.msra.mxu0 %v876
        %895 = vmatprep.subr.bf16.mxu0 0
        %896 = vmatpush1.bf16.msra.mxu0 %v877
        %897 = vmatprep.subr.bf16.mxu0 0
        %898 = vmatpush1.bf16.msra.mxu0 %v878
        %899 = vmatprep.subr.bf16.mxu0 0
        %900 = vmatpush1.bf16.msra.mxu0 %v879
        %901 = vmatprep.subr.bf16.mxu0 0
        %902 = vmatpush1.bf16.msra.mxu0 %v880
        %903 = vmatprep.subr.bf16.mxu0 0
        %904 = vmatpush1.bf16.msra.mxu0 %v881
        %905 = vmatprep.subr.bf16.mxu0 0
        %906 = vmatpush1.bf16.msra.mxu0 %v882
        %907 = vmatprep.subr.bf16.mxu0 0
        %908 = vmatpush1.bf16.msra.mxu0 0
        %909 = vmatprep.subr.bf16.mxu0 0
        %910 = vmatpush1.bf16.msra.mxu0 0
        %911 = vmatprep.subr.bf16.mxu0 0
        %912 = vmatpush1.bf16.msra.mxu0 0
        %913 = vmatprep.subr.bf16.mxu0 0
        %914 = vmatpush1.bf16.msra.mxu0 0
        %915 = vmatprep.subr.bf16.mxu0 0
        %916 = vmatpush1.bf16.msra.mxu0 0
        %917 = vmatprep.subr.bf16.mxu0 0
        %918 = vmatpush1.bf16.msra.mxu0 0
        %919 = vmatprep.subr.bf16.mxu0 0
        %920 = vmatpush1.bf16.msra.mxu0 0
        %921 = vmatprep.subr.bf16.mxu0 0
        %922 = vmatpush1.bf16.msra.mxu0 0
        %923 = vmatprep.mubr.bf16.mxu0 0
        %924 = vmatmul.mubr.bf16.gmra.mrb[0].mxu0 %v816
        %v925 = vpop.f32.mrb[0].mxu0
        %v926 = vadd.f32 %v841, %v925
        %v927 = vpop.f32.mrb[0].mxu0
        %v928 = vpop.f32.mrb[0].mxu0
        %v929 = vadd.f32 %v841, %v928
        %v930 = vpop.f32.mrb[0].mxu0
        %931 = vmatprep.mubr.bf16.mxu0 0
        %932 = vmatmul.mubr.bf16.gmra.mrb[0].mxu0 %v817
        %v933 = vpop.f32.mrb[0].mxu0
        %v934 = vadd.f32 %v841, %v933
        %v935 = vpop.f32.mrb[0].mxu0
        %v936 = vpop.f32.mrb[0].mxu0
        %v937 = vadd.f32 %v841, %v936
        %v938 = vpop.f32.mrb[0].mxu0
        %939 = vmatprep.mubr.bf16.mxu0 0
        %940 = vmatmul.mubr.bf16.gmra.mrb[0].mxu0 %v818
        %v941 = vpop.f32.mrb[0].mxu0
        %v942 = vadd.f32 %v841, %v941
        %v943 = vpop.f32.mrb[0].mxu0
        %v944 = vpop.f32.mrb[0].mxu0
        %v945 = vadd.f32 %v841, %v944
        %v946 = vpop.f32.mrb[0].mxu0
        %947 = vmatprep.mubr.bf16.mxu0 0
        %948 = vmatmul.mubr.bf16.gmra.mrb[0].mxu0 %v819
        %v949 = vpop.f32.mrb[0].mxu0
        %v950 = vadd.f32 %v841, %v949
        %v951 = vpop.f32.mrb[0].mxu0
        %v952 = vpop.f32.mrb[0].mxu0
        %v953 = vadd.f32 %v841, %v952
        %v954 = vpop.f32.mrb[0].mxu0
        %955 = vdwg.mxu0
        %v956 = vadd.f32 %v594, %v926
        %v957 = vadd.f32 %v595, %v929
        %v958 = vadd.f32 %v596, %v934
        %v959 = vadd.f32 %v597, %v937
        %v960 = vadd.f32 %v598, %v942
        %v961 = vadd.f32 %v599, %v945
        %v962 = vadd.f32 %v600, %v950
        %v963 = vadd.f32 %v601, %v953
        %v964 = vld [vmem:[#allocation14] sm:$0x1]
        %v965 = vld [vmem:[#allocation16] sm:$0x1]
        %v966 = vsel %vm468, %v956, 0.0
        %967 = vadd.xlane.f32.xlu0 %v966
        %v968 = vpop.xlane.xlu0 %967
        %v969 = vsel %vm468, %v957, 0.0
        %970 = vadd.xlane.f32.xlu0 %v969
        %v971 = vpop.xlane.xlu0 %970
        %v972 = vsel %vm468, %v958, 0.0
        %973 = vadd.xlane.f32.xlu0 %v972
        %v974 = vpop.xlane.xlu0 %973
        %v975 = vsel %vm468, %v959, 0.0
        %976 = vadd.xlane.f32.xlu0 %v975
        %v977 = vpop.xlane.xlu0 %976
        %v978 = vsel %vm468, %v960, 0.0
        %979 = vadd.xlane.f32.xlu0 %v978
        %v980 = vpop.xlane.xlu0 %979
        %v981 = vsel %vm468, %v961, 0.0
        %982 = vadd.xlane.f32.xlu0 %v981
        %v983 = vpop.xlane.xlu0 %982
        %v984 = vsel %vm468, %v962, 0.0
        %985 = vadd.xlane.f32.xlu0 %v984
        %v986 = vpop.xlane.xlu0 %985
        %v987 = vsel %vm468, %v963, 0.0
        %988 = vadd.xlane.f32.xlu0 %v987
        %v989 = vpop.xlane.xlu0 %988
        %v990 = vmul.f32 %v968, %v493
        %v991 = vmul.f32 %v971, %v493
        %v992 = vmul.f32 %v974, %v493
        %v993 = vmul.f32 %v977, %v493
        %v994 = vmul.f32 %v980, %v493
        %v995 = vmul.f32 %v983, %v493
        %v996 = vmul.f32 %v986, %v493
        %v997 = vmul.f32 %v989, %v493
        %v998 = vsub.f32 %v956, %v990
        %v999 = vsub.f32 %v957, %v991
        %v1000 = vsub.f32 %v958, %v992
        %v1001 = vsub.f32 %v959, %v993
        %v1002 = vsub.f32 %v960, %v994
        %v1003 = vsub.f32 %v961, %v995
        %v1004 = vsub.f32 %v962, %v996
        %v1005 = vsub.f32 %v963, %v997
        %v1006 = vmul.f32 %v998, %v998
        %v1007 = vmul.f32 %v999, %v999
        %v1008 = vmul.f32 %v1000, %v1000
        %v1009 = vmul.f32 %v1001, %v1001
        %v1010 = vmul.f32 %v1002, %v1002
        %v1011 = vmul.f32 %v1003, %v1003
        %v1012 = vmul.f32 %v1004, %v1004
        %v1013 = vmul.f32 %v1005, %v1005
        %v1014 = vsel %vm468, %v1006, 0.0
        %1015 = vadd.xlane.f32.xlu0 %v1014
        %v1016 = vpop.xlane.xlu0 %1015
        %v1017 = vsel %vm468, %v1007, 0.0
        %1018 = vadd.xlane.f32.xlu0 %v1017
        %v1019 = vpop.xlane.xlu0 %1018
        %v1020 = vsel %vm468, %v1008, 0.0
        %1021 = vadd.xlane.f32.xlu0 %v1020
        %v1022 = vpop.xlane.xlu0 %1021
        %v1023 = vsel %vm468, %v1009, 0.0
        %1024 = vadd.xlane.f32.xlu0 %v1023
        %v1025 = vpop.xlane.xlu0 %1024
        %v1026 = vsel %vm468, %v1010, 0.0
        %1027 = vadd.xlane.f32.xlu0 %v1026
        %v1028 = vpop.xlane.xlu0 %1027
        %v1029 = vsel %vm468, %v1011, 0.0
        %1030 = vadd.xlane.f32.xlu0 %v1029
        %v1031 = vpop.xlane.xlu0 %1030
        %v1032 = vsel %vm468, %v1012, 0.0
        %1033 = vadd.xlane.f32.xlu0 %v1032
        %v1034 = vpop.xlane.xlu0 %1033
        %v1035 = vsel %vm468, %v1013, 0.0
        %1036 = vadd.xlane.f32.xlu0 %v1035
        %v1037 = vpop.xlane.xlu0 %1036
        %v1038 = vmul.f32 %v1016, %v493
        %v1039 = vmul.f32 %v1019, %v493
        %v1040 = vmul.f32 %v1022, %v493
        %v1041 = vmul.f32 %v1025, %v493
        %v1042 = vmul.f32 %v1028, %v493
        %v1043 = vmul.f32 %v1031, %v493
        %v1044 = vmul.f32 %v1034, %v493
        %v1045 = vmul.f32 %v1037, %v493
        %v1046 = vadd.f32 %v1038, 1e-05
        %v1047 = vadd.f32 %v1039, 1e-05
        %v1048 = vadd.f32 %v1040, 1e-05
        %v1049 = vadd.f32 %v1041, 1e-05
        %v1050 = vadd.f32 %v1042, 1e-05
        %v1051 = vadd.f32 %v1043, 1e-05
        %v1052 = vadd.f32 %v1044, 1e-05
        %v1053 = vadd.f32 %v1045, 1e-05
        %v1054 = vrsqrt.pop %v1046
        %v1055 = vrsqrt.pop %v1047
        %v1056 = vrsqrt.pop %v1048
        %v1057 = vrsqrt.pop %v1049
        %v1058 = vrsqrt.pop %v1050
        %v1059 = vrsqrt.pop %v1051
        %v1060 = vrsqrt.pop %v1052
        %v1061 = vrsqrt.pop %v1053
        %v1062 = vmul.f32 %v998, %v1054
        %v1063 = vmul.f32 %v999, %v1055
        %v1064 = vmul.f32 %v1000, %v1056
        %v1065 = vmul.f32 %v1001, %v1057
        %v1066 = vmul.f32 %v1002, %v1058
        %v1067 = vmul.f32 %v1003, %v1059
        %v1068 = vmul.f32 %v1004, %v1060
        %v1069 = vmul.f32 %v1005, %v1061
        %v1071 = vlaneseq
        %v1072 = vshrl.u32 %v1071, 7
        %v1073 = vsub.s32 0, %v1072
        %v1074 = vrot.slane %v964, %v1073
        %v1076 = vmul.f32 %v1062, %v1074
        %v1077 = vmul.f32 %v1063, %v1074
        %v1078 = vmul.f32 %v1064, %v1074
        %v1079 = vmul.f32 %v1065, %v1074
        %v1080 = vmul.f32 %v1066, %v1074
        %v1081 = vmul.f32 %v1067, %v1074
        %v1082 = vmul.f32 %v1068, %v1074
        %v1083 = vmul.f32 %v1069, %v1074
        %v1085 = vlaneseq
        %v1086 = vshrl.u32 %v1085, 7
        %v1087 = vsub.s32 0, %v1086
        %v1088 = vrot.slane %v965, %v1087
        %v1090 = vadd.f32 %v1076, %v1088
        %v1091 = vadd.f32 %v1077, %v1088
        %v1092 = vadd.f32 %v1078, %v1088
        %v1093 = vadd.f32 %v1079, %v1088
        %v1094 = vadd.f32 %v1080, %v1088
        %v1095 = vadd.f32 %v1081, %v1088
        %v1096 = vadd.f32 %v1082, %v1088
        %v1097 = vadd.f32 %v1083, %v1088
        %v1098 = vadd.f32 %v458, %v1090
        %v1099 = vadd.f32 %v459, %v1091
        %v1100 = vadd.f32 %v460, %v1092
        %v1101 = vadd.f32 %v461, %v1093
        %v1102 = vadd.f32 %v462, %v1094
        %v1103 = vadd.f32 %v463, %v1095
        %v1104 = vadd.f32 %v464, %v1096
        %v1105 = vadd.f32 %v465, %v1097
        %1106 = vst.msk [vmem:[%s454] sm:$0xff] %vm468, %v1098
        %1107 = vst.msk [vmem:[%s454 + $0x8] sm:$0xff] %vm468, %v1099
        %1108 = vst.msk [vmem:[%s454 + $0x10] sm:$0xff] %vm468, %v1100
        %1109 = vst.msk [vmem:[%s454 + $0x18] sm:$0xff] %vm468, %v1101
        %1110 = vst.msk [vmem:[%s454 + $0x20] sm:$0xff] %vm468, %v1102
        %1111 = vst.msk [vmem:[%s454 + $0x28] sm:$0xff] %vm468, %v1103
        %1112 = vst.msk [vmem:[%s454 + $0x30] sm:$0xff] %vm468, %v1104
        %1113 = vst.msk [vmem:[%s454 + $0x38] sm:$0xff] %vm468, %v1105
        %s1114 = sand.u32 %s232, 1
        %s1115 = scalar_lea.sflag [#allocation4], %s1114
        %s1116 = sand.u32 %s232, 1
        %s1117 = smul.addr %s1116, 64
        %s1118 = scalar_lea.vmem [#allocation17], %s1117
        // Predicated region
        $region93: #{ptsapt_forward.5} parent=55 // pred_check
          %p1119 = pneg %p242
        $region94: #{ptsapt_forward.5} parent=55 // pred_check_branch
          %1121 = sbr.rel (%p1119) target = $region96
        $region95: #{ptsapt_forward.5} parent=55 // pred_region
          %s1122 = smul.u32 8, %s30
          %s1124 = ssub.s32 1024, 1024
          %1125 = vsyncadd %s1115, %s1124
          %s1126 = smul.addr %s1122, 128
          %s1127 = scalar_lea.hbm %s9, %s1126
          %s1128 = sshll.u32 %s1118, 4
          %s1129 = int_to_ptr.vmem [resolvable:$true] %s1128
          %1134 = dma.vmem_to_hbm [thread:$0]  %s1129, 1024, %s1127, %s1115, 128, 128, 8
        $region96: #{ptsapt_forward.5} parent=55 // pred_fallthru
          _
      $region56: #{ptsapt_forward.5} parent=5 // pred_fallthru
        _
      %p1135 = scmp.le.s32.totalorder 2, %s25
      // Predicated region
      $region97: #{ptsapt_forward.5} parent=5 // pred_check
        %p1136 = pneg %p1135
      $region98: #{ptsapt_forward.5} parent=5 // pred_check_branch
        %1138 = sbr.rel (%p1136) target = $region100
      $region99: #{ptsapt_forward.5} parent=5 // pred_region
        %s1139 = ssub.s32 %s25, 2
        // Predicated region
        $region101: #{ptsapt_forward.5} parent=99 // pred_check
          %p1140 = pneg %p248
        $region102: #{ptsapt_forward.5} parent=99 // pred_check_branch
          %1142 = sbr.rel (%p1140) target = $region104
        $region103: #{ptsapt_forward.5} parent=99 // pred_region
          %s1143 = sand.u32 %s233, 1
          %s1144 = scalar_lea.sflag [#allocation4], %s1143
          %s1145 = sand.u32 %s233, 1
          %s1146 = smul.addr %s1145, 64
          %s1147 = scalar_lea.vmem [#allocation17], %s1146
          %1148 = dma.done %s1144, 1024
        $region104: #{ptsapt_forward.5} parent=99 // pred_fallthru
          _
      $region100: #{ptsapt_forward.5} parent=5 // pred_fallthru
        _
    $region6: #{ptsapt_forward.5} parent=1 // loop_footer
      %s29 = sadd.s32 1, %s25
    $region7: #{ptsapt_forward.5} parent=1 // loop_footer_branch
      %24 = sbr.rel target = $region3
    $region8: #{ptsapt_forward.5} parent=1 // loop_exit
      _
    %1149 = vsyncpa [#allocation3], 1
    %s1150 = scalar_lea.sflag [#allocation3], 1
    %1151 = vsyncpa %s1150, 1
    %1152 = vsyncpa [#allocation6], 1
    %1153 = vsyncpa [#allocation9], 1
    %1154 = vsyncpa [#allocation12], 1
    %1155 = vsyncpa [#allocation15], 1
    %1156 = vsyncpa [#allocation4], 1
    %s1157 = scalar_lea.sflag [#allocation4], 1
    %1158 = vsyncpa %s1157, 1

// kernel: ptsapt_forward.6
$region0: #{ptsapt_forward.6}
  #allocation0 [shape = 'u32[]', space=smem, size = 0x4, offset = 0x4, fixed_abs, tag = 'smem constant byte address 0x4 - core index']
  #allocation1 [shape = 'u32[144,128]{1,0:T(1,128)}', space=vmem, size = 0x12000, scoped, tag = 'internal scratch']
  %s0 = inlined_call_operand.hbm [shape: f32[2,4,16,32], index: 0, kind: input, shape index: {}]
  %s1 = inlined_call_operand.hbm [shape: f32[1,32], index: 1, kind: input, shape index: {}]
  %s2 = inlined_call_operand.hbm [shape: f32[1,32], index: 2, kind: input, shape index: {}]
  %s3 = inlined_call_operand.hbm [shape: bf16[32,512], index: 3, kind: input, shape index: {}]
  %s4 = inlined_call_operand.hbm [shape: f32[1,512], index: 4, kind: input, shape index: {}]
  %s5 = inlined_call_operand.hbm [shape: bf16[128,32], index: 5, kind: input, shape index: {}]
  %s6 = inlined_call_operand.hbm [shape: f32[1,32], index: 6, kind: input, shape index: {}]
  %s7 = inlined_call_operand.hbm [shape: f32[1,32], index: 7, kind: input, shape index: {}]
  %s8 = inlined_call_operand.hbm [shape: f32[1,32], index: 8, kind: input, shape index: {}]
  %s9 = inlined_call_operand.hbm [shape: f32[2,4,16,32], index: 9, kind: output, shape index: {}]
  %s10 = sld [smem:[#allocation0]]
  $region105: #{ptsapt_forward.6} parent=0
    _
  %s12 = ssub.s32 1, %s10
  %s13 = scalar_select 0, %s12, %s10
  $region1: #{ptsapt_forward.6} parent=0
    #allocation2 [shape = 'u8[65536]{0}', space=vmem, size = 0x10000, scoped, tag = 'input window, operand 0']
    #allocation3 [shape = 's32[2]{0}', space=sflag, size = 0x8, scoped, tag = 'scoped memory for ptsapt_forward.6']
    #allocation4 [shape = 's32[2]{0}', space=sflag, size = 0x8, scoped, tag = 'scoped memory for ptsapt_forward.6']
    #allocation5 [shape = 'u8[512]{0}', space=vmem, size = 0x400, scoped, tag = 'input window, operand 1, single buffered']
    #allocation6 [shape = 's32[1]{0}', space=sflag, size = 0x4, scoped, tag = 'scoped memory for ptsapt_forward.6']
    #allocation7 [shape = 'u8[512]{0}', space=vmem, size = 0x400, scoped, tag = 'input window, operand 2, single buffered']
    #allocation8 [shape = 'u8[32768]{0}', space=vmem, size = 0x8000, scoped, tag = 'input window, operand 3, single buffered']
    #allocation9 [shape = 's32[1]{0}', space=sflag, size = 0x4, scoped, tag = 'scoped memory for ptsapt_forward.6']
    #allocation10 [shape = 'u8[2048]{0}', space=vmem, size = 0x800, scoped, tag = 'input window, operand 4, single buffered']
    #allocation11 [shape = 'u8[32768]{0}', space=vmem, size = 0x8000, scoped, tag = 'input window, operand 5, single buffered']
    #allocation12 [shape = 's32[1]{0}', space=sflag, size = 0x4, scoped, tag = 'scoped memory for ptsapt_forward.6']
    #allocation13 [shape = 'u8[512]{0}', space=vmem, size = 0x400, scoped, tag = 'input window, operand 6, single buffered']
    #allocation14 [shape = 'u8[512]{0}', space=vmem, size = 0x400, scoped, tag = 'input window, operand 7, single buffered']
    #allocation15 [shape = 's32[1]{0}', space=sflag, size = 0x4, scoped, tag = 'scoped memory for ptsapt_forward.6']
    #allocation16 [shape = 'u8[512]{0}', space=vmem, size = 0x400, scoped, tag = 'input window, operand 8, single buffered']
    #allocation17 [shape = 'u8[65536]{0}', space=vmem, size = 0x10000, scoped, tag = 'output window, operand 0']
    %14 = vsyncpa [#allocation3], 0
    %s15 = scalar_lea.sflag [#allocation3], 1
    %16 = vsyncpa %s15, 0
    %17 = vsyncpa [#allocation6], 0
    %18 = vsyncpa [#allocation9], 0
    %19 = vsyncpa [#allocation12], 0
    %20 = vsyncpa [#allocation15], 0
    %21 = vsyncpa [#allocation4], 0
    %s22 = scalar_lea.sflag [#allocation4], 1
    %23 = vsyncpa %s22, 0
    loop: start=0, step=1, limit=4
    $region2: #{ptsapt_forward.6} parent=1 // loop_pre_header
      _
    $region3: #{ptsapt_forward.6} parent=1 // loop_header
      %s25 = sphi 0, %s29
      %p26 = scmp.ge.s32.totalorder %s25, 4
      %s32 = sphi 0, %s44
      %s33 = sphi 0, %s40
      %s34 = sphi 0, %s32
      %s35 = sphi 0, %s33
      %s36 = sphi 0, %s34
      %s37 = sphi 0, %s35
      %s49 = sphi 0, %s51
      %s52 = sphi 0, %s49
      %s53 = sphi 0, %s52
      %s69 = sphi 0, %s53
      %s73 = sphi 0, %s73
      %s75 = sphi 0, %s73
      %s76 = sphi 0, %s75
      %s90 = sphi 0, %s76
      %s94 = sphi 0, %s94
      %s96 = sphi 0, %s94
      %s97 = sphi 0, %s96
      %s111 = sphi 0, %s97
      %s115 = sphi 0, %s115
      %s117 = sphi 0, %s115
      %s118 = sphi 0, %s117
      %s132 = sphi 0, %s118
      %s136 = sphi 0, %s136
      %s138 = sphi 0, %s136
      %s139 = sphi 0, %s138
      %s153 = sphi 0, %s139
      %s157 = sphi 0, %s157
      %s159 = sphi 0, %s157
      %s160 = sphi 0, %s159
      %s174 = sphi 0, %s160
      %s178 = sphi 0, %s178
      %s180 = sphi 0, %s178
      %s181 = sphi 0, %s180
      %s195 = sphi 0, %s181
      %s199 = sphi 0, %s199
      %s201 = sphi 0, %s199
      %s202 = sphi 0, %s201
      %s216 = sphi 0, %s202
      %s220 = sphi 0, %s220
      %s222 = sphi 0, %s220
      %s223 = sphi 0, %s222
      %s237 = sphi 0, %s223
      %s245 = sphi 0, %s247
      %s248 = sphi 0, %s245
      %s249 = sphi 0, %s248
      %s265 = sphi 0, %s249
    $region4: #{ptsapt_forward.6} parent=1 // loop_header_branch
      %28 = sbr.rel (%p26) target = $region8
    $region5: #{ptsapt_forward.6} parent=1 // loop_body
      %s30 = ssub.s32 %s25, 1
      %s31 = ssub.s32 %s25, 2
      %s38 = sadd.s32 1, %s33
      %p39 = scmp.ge.s32.totalorder %s38, 1
      %s40 = scalar_select %p39, 0, %s38
      %s41 = sadd.s32 1, %s32
      %s42 = scalar_select %p39, %s41, %s32
      %p43 = scmp.ge.s32.totalorder %s42, 2
      %s44 = scalar_select %p43, 0, %s42
      %s45 = ssub.s32 %s32, %s44
      %s46 = ssub.s32 %s33, %s40
      %s47 = sor.u32 %s45, %s46
      %p48 = scmp.eq.s32.totalorder %s47, 0
      %s50 = sadd.s32 %s49, 1
      %s51 = scalar_select %p48, %s49, %s50
      %p54 = pneg %p48
      %p55 = scmp.eq.s32.totalorder %s25, 1
      %p56 = por %p54, %p55
      %p57 = scmp.ne.s32.totalorder %s49, %s52
      %p58 = scmp.eq.s32.totalorder %s25, 0
      %p59 = por %p57, %p58
      %p60 = scmp.ne.s32.totalorder %s49, %s52
      %p61 = scmp.eq.s32.totalorder %s30, 1
      %p62 = por %p60, %p61
      %p63 = scmp.ne.s32.totalorder %s52, %s53
      %p64 = scmp.eq.s32.totalorder %s30, 0
      %p65 = por %p63, %p64
      %p66 = scmp.ne.s32.totalorder %s52, %s53
      %p67 = scmp.eq.s32.totalorder %s31, 1
      %p68 = por %p66, %p67
      %p70 = scmp.ne.s32.totalorder %s53, %s69
      %p71 = scmp.eq.s32.totalorder %s31, 0
      %p72 = por %p70, %p71
      %s74 = sadd.s32 %s73, 1
      %p77 = scmp.eq.s32.totalorder %s25, 1
      %p78 = scmp.ne.s32.totalorder %s73, %s75
      %p79 = scmp.eq.s32.totalorder %s25, 0
      %p80 = por %p78, %p79
      %p81 = scmp.ne.s32.totalorder %s73, %s75
      %p82 = scmp.eq.s32.totalorder %s30, 1
      %p83 = por %p81, %p82
      %p84 = scmp.ne.s32.totalorder %s75, %s76
      %p85 = scmp.eq.s32.totalorder %s30, 0
      %p86 = por %p84, %p85
      %p87 = scmp.ne.s32.totalorder %s75, %s76
      %p88 = scmp.eq.s32.totalorder %s31, 1
      %p89 = por %p87, %p88
      %p91 = scmp.ne.s32.totalorder %s76, %s90
      %p92 = scmp.eq.s32.totalorder %s31, 0
      %p93 = por %p91, %p92
      %s95 = sadd.s32 %s94, 1
      %p98 = scmp.eq.s32.totalorder %s25, 1
      %p99 = scmp.ne.s32.totalorder %s94, %s96
      %p100 = scmp.eq.s32.totalorder %s25, 0
      %p101 = por %p99, %p100
      %p102 = scmp.ne.s32.totalorder %s94, %s96
      %p103 = scmp.eq.s32.totalorder %s30, 1
      %p104 = por %p102, %p103
      %p105 = scmp.ne.s32.totalorder %s96, %s97
      %p106 = scmp.eq.s32.totalorder %s30, 0
      %p107 = por %p105, %p106
      %p108 = scmp.ne.s32.totalorder %s96, %s97
      %p109 = scmp.eq.s32.totalorder %s31, 1
      %p110 = por %p108, %p109
      %p112 = scmp.ne.s32.totalorder %s97, %s111
      %p113 = scmp.eq.s32.totalorder %s31, 0
      %p114 = por %p112, %p113
      %s116 = sadd.s32 %s115, 1
      %p119 = scmp.eq.s32.totalorder %s25, 1
      %p120 = scmp.ne.s32.totalorder %s115, %s117
      %p121 = scmp.eq.s32.totalorder %s25, 0
      %p122 = por %p120, %p121
      %p123 = scmp.ne.s32.totalorder %s115, %s117
      %p124 = scmp.eq.s32.totalorder %s30, 1
      %p125 = por %p123, %p124
      %p126 = scmp.ne.s32.totalorder %s117, %s118
      %p127 = scmp.eq.s32.totalorder %s30, 0
      %p128 = por %p126, %p127
      %p129 = scmp.ne.s32.totalorder %s117, %s118
      %p130 = scmp.eq.s32.totalorder %s31, 1
      %p131 = por %p129, %p130
      %p133 = scmp.ne.s32.totalorder %s118, %s132
      %p134 = scmp.eq.s32.totalorder %s31, 0
      %p135 = por %p133, %p134
      %s137 = sadd.s32 %s136, 1
      %p140 = scmp.eq.s32.totalorder %s25, 1
      %p141 = scmp.ne.s32.totalorder %s136, %s138
      %p142 = scmp.eq.s32.totalorder %s25, 0
      %p143 = por %p141, %p142
      %p144 = scmp.ne.s32.totalorder %s136, %s138
      %p145 = scmp.eq.s32.totalorder %s30, 1
      %p146 = por %p144, %p145
      %p147 = scmp.ne.s32.totalorder %s138, %s139
      %p148 = scmp.eq.s32.totalorder %s30, 0
      %p149 = por %p147, %p148
      %p150 = scmp.ne.s32.totalorder %s138, %s139
      %p151 = scmp.eq.s32.totalorder %s31, 1
      %p152 = por %p150, %p151
      %p154 = scmp.ne.s32.totalorder %s139, %s153
      %p155 = scmp.eq.s32.totalorder %s31, 0
      %p156 = por %p154, %p155
      %s158 = sadd.s32 %s157, 1
      %p161 = scmp.eq.s32.totalorder %s25, 1
      %p162 = scmp.ne.s32.totalorder %s157, %s159
      %p163 = scmp.eq.s32.totalorder %s25, 0
      %p164 = por %p162, %p163
      %p165 = scmp.ne.s32.totalorder %s157, %s159
      %p166 = scmp.eq.s32.totalorder %s30, 1
      %p167 = por %p165, %p166
      %p168 = scmp.ne.s32.totalorder %s159, %s160
      %p169 = scmp.eq.s32.totalorder %s30, 0
      %p170 = por %p168, %p169
      %p171 = scmp.ne.s32.totalorder %s159, %s160
      %p172 = scmp.eq.s32.totalorder %s31, 1
      %p173 = por %p171, %p172
      %p175 = scmp.ne.s32.totalorder %s160, %s174
      %p176 = scmp.eq.s32.totalorder %s31, 0
      %p177 = por %p175, %p176
      %s179 = sadd.s32 %s178, 1
      %p182 = scmp.eq.s32.totalorder %s25, 1
      %p183 = scmp.ne.s32.totalorder %s178, %s180
      %p184 = scmp.eq.s32.totalorder %s25, 0
      %p185 = por %p183, %p184
      %p186 = scmp.ne.s32.totalorder %s178, %s180
      %p187 = scmp.eq.s32.totalorder %s30, 1
      %p188 = por %p186, %p187
      %p189 = scmp.ne.s32.totalorder %s180, %s181
      %p190 = scmp.eq.s32.totalorder %s30, 0
      %p191 = por %p189, %p190
      %p192 = scmp.ne.s32.totalorder %s180, %s181
      %p193 = scmp.eq.s32.totalorder %s31, 1
      %p194 = por %p192, %p193
      %p196 = scmp.ne.s32.totalorder %s181, %s195
      %p197 = scmp.eq.s32.totalorder %s31, 0
      %p198 = por %p196, %p197
      %s200 = sadd.s32 %s199, 1
      %p203 = scmp.eq.s32.totalorder %s25, 1
      %p204 = scmp.ne.s32.totalorder %s199, %s201
      %p205 = scmp.eq.s32.totalorder %s25, 0
      %p206 = por %p204, %p205
      %p207 = scmp.ne.s32.totalorder %s199, %s201
      %p208 = scmp.eq.s32.totalorder %s30, 1
      %p209 = por %p207, %p208
      %p210 = scmp.ne.s32.totalorder %s201, %s202
      %p211 = scmp.eq.s32.totalorder %s30, 0
      %p212 = por %p210, %p211
      %p213 = scmp.ne.s32.totalorder %s201, %s202
      %p214 = scmp.eq.s32.totalorder %s31, 1
      %p215 = por %p213, %p214
      %p217 = scmp.ne.s32.totalorder %s202, %s216
      %p218 = scmp.eq.s32.totalorder %s31, 0
      %p219 = por %p217, %p218
      %s221 = sadd.s32 %s220, 1
      %p224 = scmp.eq.s32.totalorder %s25, 1
      %p225 = scmp.ne.s32.totalorder %s220, %s222
      %p226 = scmp.eq.s32.totalorder %s25, 0
      %p227 = por %p225, %p226
      %p228 = scmp.ne.s32.totalorder %s220, %s222
      %p229 = scmp.eq.s32.totalorder %s30, 1
      %p230 = por %p228, %p229
      %p231 = scmp.ne.s32.totalorder %s222, %s223
      %p232 = scmp.eq.s32.totalorder %s30, 0
      %p233 = por %p231, %p232
      %p234 = scmp.ne.s32.totalorder %s222, %s223
      %p235 = scmp.eq.s32.totalorder %s31, 1
      %p236 = por %p234, %p235
      %p238 = scmp.ne.s32.totalorder %s223, %s237
      %p239 = scmp.eq.s32.totalorder %s31, 0
      %p240 = por %p238, %p239
      %s241 = ssub.s32 %s32, %s44
      %s242 = ssub.s32 %s33, %s40
      %s243 = sor.u32 %s241, %s242
      %p244 = scmp.eq.s32.totalorder %s243, 0
      %s246 = sadd.s32 %s245, 1
      %s247 = scalar_select %p244, %s245, %s246
      %p250 = pneg %p244
      %p251 = scmp.eq.s32.totalorder %s25, 1
      %p252 = por %p250, %p251
      %p253 = scmp.ne.s32.totalorder %s245, %s248
      %p254 = scmp.eq.s32.totalorder %s25, 0
      %p255 = por %p253, %p254
      %p256 = scmp.ne.s32.totalorder %s245, %s248
      %p257 = scmp.eq.s32.totalorder %s30, 1
      %p258 = por %p256, %p257
      %p259 = scmp.ne.s32.totalorder %s248, %s249
      %p260 = scmp.eq.s32.totalorder %s30, 0
      %p261 = por %p259, %p260
      %p262 = scmp.ne.s32.totalorder %s248, %s249
      %p263 = scmp.eq.s32.totalorder %s31, 1
      %p264 = por %p262, %p263
      %p266 = scmp.ne.s32.totalorder %s249, %s265
      %p267 = scmp.eq.s32.totalorder %s31, 0
      %p268 = por %p266, %p267
      %p269 = scmp.le.s32.totalorder 1, %s25
      %p270 = scmp.lt.s32.totalorder %s25, 3
      %p271 = pnand %p269, %p270
      %p272 = pneg %p271
      // Predicated region
      $region9: #{ptsapt_forward.6} parent=5 // pred_check
        _
      $region10: #{ptsapt_forward.6} parent=5 // pred_check_branch
        %274 = sbr.rel (%p271) target = $region12
      $region11: #{ptsapt_forward.6} parent=5 // pred_region
        %s275 = ssub.s32 %s25, 1
        // Predicated region
        $region13: #{ptsapt_forward.6} parent=11 // pred_check
          %p276 = pneg %p86
        $region14: #{ptsapt_forward.6} parent=11 // pred_check_branch
          %278 = sbr.rel (%p276) target = $region16
        $region15: #{ptsapt_forward.6} parent=11 // pred_region
          %s280 = ssub.s32 16, 16
          %281 = vsyncadd [#allocation6], %s280
          %s283 = sshll.u32 [#allocation5], 4
          %s284 = int_to_ptr.vmem [resolvable:$true] %s283
          %286 = dma.hbm_to_vmem [thread:$0]  %s1, 16, %s284, [#allocation6]
        $region16: #{ptsapt_forward.6} parent=11 // pred_fallthru
          _
        // Predicated region
        $region17: #{ptsapt_forward.6} parent=11 // pred_check
          %p287 = pneg %p107
        $region18: #{ptsapt_forward.6} parent=11 // pred_check_branch
          %289 = sbr.rel (%p287) target = $region20
        $region19: #{ptsapt_forward.6} parent=11 // pred_region
          %s291 = ssub.s32 16, 16
          %292 = vsyncadd [#allocation6], %s291
          %s294 = sshll.u32 [#allocation7], 4
          %s295 = int_to_ptr.vmem [resolvable:$true] %s294
          %297 = dma.hbm_to_vmem [thread:$0]  %s2, 16, %s295, [#allocation6]
        $region20: #{ptsapt_forward.6} parent=11 // pred_fallthru
          _
        // Predicated region
        $region21: #{ptsapt_forward.6} parent=11 // pred_check
          %p298 = pneg %p128
        $region22: #{ptsapt_forward.6} parent=11 // pred_check_branch
          %300 = sbr.rel (%p298) target = $region24
        $region23: #{ptsapt_forward.6} parent=11 // pred_region
          %s302 = ssub.s32 1024, 1024
          %303 = vsyncadd [#allocation9], %s302
          %s304 = sshll.u32 [#allocation8], 4
          %s305 = int_to_ptr.vmem [resolvable:$true] %s304
          %310 = dma.hbm_to_vmem [thread:$0]  %s3, 1024, %s305, [#allocation9], 256, 256, 16
        $region24: #{ptsapt_forward.6} parent=11 // pred_fallthru
          _
        // Predicated region
        $region25: #{ptsapt_forward.6} parent=11 // pred_check
          %p311 = pneg %p149
        $region26: #{ptsapt_forward.6} parent=11 // pred_check_branch
          %313 = sbr.rel (%p311) target = $region28
        $region27: #{ptsapt_forward.6} parent=11 // pred_region
          %s315 = ssub.s32 64, 64
          %316 = vsyncadd [#allocation9], %s315
          %s318 = sshll.u32 [#allocation10], 4
          %s319 = int_to_ptr.vmem [resolvable:$true] %s318
          %321 = dma.hbm_to_vmem [thread:$0]  %s4, 64, %s319, [#allocation9]
        $region28: #{ptsapt_forward.6} parent=11 // pred_fallthru
          _
        // Predicated region
        $region29: #{ptsapt_forward.6} parent=11 // pred_check
          %p322 = pneg %p170
        $region30: #{ptsapt_forward.6} parent=11 // pred_check_branch
          %324 = sbr.rel (%p322) target = $region32
        $region31: #{ptsapt_forward.6} parent=11 // pred_region
          %s326 = ssub.s32 1024, 1024
          %327 = vsyncadd [#allocation12], %s326
          %s328 = sshll.u32 [#allocation11], 4
          %s329 = int_to_ptr.vmem [resolvable:$true] %s328
          %334 = dma.hbm_to_vmem [thread:$0]  %s5, 1024, %s329, [#allocation12], 64, 64, 4
        $region32: #{ptsapt_forward.6} parent=11 // pred_fallthru
          _
        // Predicated region
        $region33: #{ptsapt_forward.6} parent=11 // pred_check
          %p335 = pneg %p191
        $region34: #{ptsapt_forward.6} parent=11 // pred_check_branch
          %337 = sbr.rel (%p335) target = $region36
        $region35: #{ptsapt_forward.6} parent=11 // pred_region
          %s339 = ssub.s32 16, 16
          %340 = vsyncadd [#allocation12], %s339
          %s342 = sshll.u32 [#allocation13], 4
          %s343 = int_to_ptr.vmem [resolvable:$true] %s342
          %345 = dma.hbm_to_vmem [thread:$0]  %s6, 16, %s343, [#allocation12]
        $region36: #{ptsapt_forward.6} parent=11 // pred_fallthru
          _
        // Predicated region
        $region37: #{ptsapt_forward.6} parent=11 // pred_check
          %p346 = pneg %p212
        $region38: #{ptsapt_forward.6} parent=11 // pred_check_branch
          %348 = sbr.rel (%p346) target = $region40
        $region39: #{ptsapt_forward.6} parent=11 // pred_region
          %s350 = ssub.s32 16, 16
          %351 = vsyncadd [#allocation15], %s350
          %s353 = sshll.u32 [#allocation14], 4
          %s354 = int_to_ptr.vmem [resolvable:$true] %s353
          %356 = dma.hbm_to_vmem [thread:$0]  %s7, 16, %s354, [#allocation15]
        $region40: #{ptsapt_forward.6} parent=11 // pred_fallthru
          _
        // Predicated region
        $region41: #{ptsapt_forward.6} parent=11 // pred_check
          %p357 = pneg %p233
        $region42: #{ptsapt_forward.6} parent=11 // pred_check_branch
          %359 = sbr.rel (%p357) target = $region44
        $region43: #{ptsapt_forward.6} parent=11 // pred_region
          %s361 = ssub.s32 16, 16
          %362 = vsyncadd [#allocation15], %s361
          %s364 = sshll.u32 [#allocation16], 4
          %s365 = int_to_ptr.vmem [resolvable:$true] %s364
          %367 = dma.hbm_to_vmem [thread:$0]  %s8, 16, %s365, [#allocation15]
        $region44: #{ptsapt_forward.6} parent=11 // pred_fallthru
          _
      $region12: #{ptsapt_forward.6} parent=5 // pred_fallthru
        _
      %p368 = scmp.lt.s32.totalorder %s25, 2
      // Predicated region
      $region45: #{ptsapt_forward.6} parent=5 // pred_check
        %p369 = pneg %p368
      $region46: #{ptsapt_forward.6} parent=5 // pred_check_branch
        %371 = sbr.rel (%p369) target = $region48
      $region47: #{ptsapt_forward.6} parent=5 // pred_region
        // Predicated region
        $region49: #{ptsapt_forward.6} parent=47 // pred_check
          %p372 = pneg %p59
        $region50: #{ptsapt_forward.6} parent=47 // pred_check_branch
          %374 = sbr.rel (%p372) target = $region52
        $region51: #{ptsapt_forward.6} parent=47 // pred_region
          %s375 = sand.u32 %s49, 1
          %s376 = scalar_lea.sflag [#allocation3], %s375
          %s377 = sand.u32 %s49, 1
          %s378 = smul.addr %s377, 64
          %s379 = scalar_lea.vmem [#allocation2], %s378
          %s380 = smul.u32 2, %s33
          %s382 = ssub.s32 1024, 1024
          %383 = vsyncadd %s376, %s382
          %s384 = smul.addr %s32, 8
          %s385 = sadd.s32 %s380, %s384
          %s386 = smul.addr %s385, 128
          %s387 = scalar_lea.hbm %s0, %s386
          %s388 = sshll.u32 %s379, 4
          %s389 = int_to_ptr.vmem [resolvable:$true] %s388
          %394 = dma.hbm_to_vmem [thread:$0]  %s387, 1024, %s389, %s376, 128, 128, 8
        $region52: #{ptsapt_forward.6} parent=47 // pred_fallthru
          _
      $region48: #{ptsapt_forward.6} parent=5 // pred_fallthru
        _
      %p395 = scmp.le.s32.totalorder 1, %s25
      %p396 = scmp.lt.s32.totalorder %s25, 3
      %p397 = pnand %p395, %p396
      %p398 = pneg %p397
      // Predicated region
      $region53: #{ptsapt_forward.6} parent=5 // pred_check
        _
      $region54: #{ptsapt_forward.6} parent=5 // pred_check_branch
        %400 = sbr.rel (%p397) target = $region56
      $region55: #{ptsapt_forward.6} parent=5 // pred_region
        %s401 = ssub.s32 %s25, 1
        %s402 = sand.u32 %s52, 1
        %s403 = scalar_lea.sflag [#allocation3], %s402
        %s404 = sand.u32 %s52, 1
        %s405 = smul.addr %s404, 64
        %s406 = scalar_lea.vmem [#allocation2], %s405
        // Predicated region
        $region57: #{ptsapt_forward.6} parent=55 // pred_check
          %p407 = pneg %p65
        $region58: #{ptsapt_forward.6} parent=55 // pred_check_branch
          %409 = sbr.rel (%p407) target = $region60
        $region59: #{ptsapt_forward.6} parent=55 // pred_region
          %410 = dma.done %s403, 1024
        $region60: #{ptsapt_forward.6} parent=55 // pred_fallthru
          _
        // Predicated region
        $region61: #{ptsapt_forward.6} parent=55 // pred_check
          %p411 = pneg %p86
        $region62: #{ptsapt_forward.6} parent=55 // pred_check_branch
          %413 = sbr.rel (%p411) target = $region64
        $region63: #{ptsapt_forward.6} parent=55 // pred_region
          %414 = dma.done [#allocation6], 16
        $region64: #{ptsapt_forward.6} parent=55 // pred_fallthru
          _
        // Predicated region
        $region65: #{ptsapt_forward.6} parent=55 // pred_check
          %p415 = pneg %p107
        $region66: #{ptsapt_forward.6} parent=55 // pred_check_branch
          %417 = sbr.rel (%p415) target = $region68
        $region67: #{ptsapt_forward.6} parent=55 // pred_region
          %418 = dma.done [#allocation6], 16
        $region68: #{ptsapt_forward.6} parent=55 // pred_fallthru
          _
        // Predicated region
        $region69: #{ptsapt_forward.6} parent=55 // pred_check
          %p419 = pneg %p128
        $region70: #{ptsapt_forward.6} parent=55 // pred_check_branch
          %421 = sbr.rel (%p419) target = $region72
        $region71: #{ptsapt_forward.6} parent=55 // pred_region
          %422 = dma.done [#allocation9], 1024
        $region72: #{ptsapt_forward.6} parent=55 // pred_fallthru
          _
        // Predicated region
        $region73: #{ptsapt_forward.6} parent=55 // pred_check
          %p423 = pneg %p149
        $region74: #{ptsapt_forward.6} parent=55 // pred_check_branch
          %425 = sbr.rel (%p423) target = $region76
        $region75: #{ptsapt_forward.6} parent=55 // pred_region
          %426 = dma.done [#allocation9], 64
        $region76: #{ptsapt_forward.6} parent=55 // pred_fallthru
          _
        // Predicated region
        $region77: #{ptsapt_forward.6} parent=55 // pred_check
          %p427 = pneg %p170
        $region78: #{ptsapt_forward.6} parent=55 // pred_check_branch
          %429 = sbr.rel (%p427) target = $region80
        $region79: #{ptsapt_forward.6} parent=55 // pred_region
          %430 = dma.done [#allocation12], 1024
        $region80: #{ptsapt_forward.6} parent=55 // pred_fallthru
          _
        // Predicated region
        $region81: #{ptsapt_forward.6} parent=55 // pred_check
          %p431 = pneg %p191
        $region82: #{ptsapt_forward.6} parent=55 // pred_check_branch
          %433 = sbr.rel (%p431) target = $region84
        $region83: #{ptsapt_forward.6} parent=55 // pred_region
          %434 = dma.done [#allocation12], 16
        $region84: #{ptsapt_forward.6} parent=55 // pred_fallthru
          _
        // Predicated region
        $region85: #{ptsapt_forward.6} parent=55 // pred_check
          %p435 = pneg %p212
        $region86: #{ptsapt_forward.6} parent=55 // pred_check_branch
          %437 = sbr.rel (%p435) target = $region88
        $region87: #{ptsapt_forward.6} parent=55 // pred_region
          %438 = dma.done [#allocation15], 16
        $region88: #{ptsapt_forward.6} parent=55 // pred_fallthru
          _
        // Predicated region
        $region89: #{ptsapt_forward.6} parent=55 // pred_check
          %p439 = pneg %p233
        $region90: #{ptsapt_forward.6} parent=55 // pred_check_branch
          %441 = sbr.rel (%p439) target = $region92
        $region91: #{ptsapt_forward.6} parent=55 // pred_region
          %442 = dma.done [#allocation15], 16
        $region92: #{ptsapt_forward.6} parent=55 // pred_fallthru
          _
        %s443 = sand.u32 %s52, 1
        %s444 = scalar_lea.sflag [#allocation3], %s443
        %s445 = sand.u32 %s52, 1
        %s446 = smul.addr %s445, 64
        %s447 = scalar_lea.vmem [#allocation2], %s446
        %p448 = pneg %p65
        %p449 = pneg %p62
        %p450 = pneg %p86
        %p451 = pneg %p83
        %p452 = pneg %p107
        %p453 = pneg %p104
        %p454 = pneg %p128
        %p455 = pneg %p125
        %p456 = pneg %p149
        %p457 = pneg %p146
        %p458 = pneg %p170
        %p459 = pneg %p167
        %p460 = pneg %p191
        %p461 = pneg %p188
        %p462 = pneg %p212
        %p463 = pneg %p209
        %p464 = pneg %p233
        %p465 = pneg %p230
        %p466 = pneg %p261
        %p467 = pneg %p258
        %s468 = sand.u32 %s248, 1
        %s469 = scalar_lea.sflag [#allocation4], %s468
        %s470 = sand.u32 %s248, 1
        %s471 = smul.addr %s470, 64
        %s472 = scalar_lea.vmem [#allocation17], %s471
        %s473 = smul.u32 2, %s35
        %s474 = smul.u32 2, %s35
        %v476 = vld [vmem:[%s406] sm:$0xff]
        %v477 = vld [vmem:[%s406 + $0x8] sm:$0xff]
        %v478 = vld [vmem:[%s406 + $0x10] sm:$0xff]
        %v479 = vld [vmem:[%s406 + $0x18] sm:$0xff]
        %v480 = vld [vmem:[%s406 + $0x20] sm:$0xff]
        %v481 = vld [vmem:[%s406 + $0x28] sm:$0xff]
        %v482 = vld [vmem:[%s406 + $0x30] sm:$0xff]
        %v483 = vld [vmem:[%s406 + $0x38] sm:$0xff]
        %v484 = vld [vmem:[#allocation5] sm:$0x1]
        %v485 = vld [vmem:[#allocation7] sm:$0x1]
        %vm486 = vcmask 261120
        %v487 = vsel %vm486, %v476, 0.0
        %488 = vadd.xlane.f32.xlu0 %v487
        %v489 = vpop.xlane.xlu0 %488
        %v490 = vsel %vm486, %v477, 0.0
        %491 = vadd.xlane.f32.xlu0 %v490
        %v492 = vpop.xlane.xlu0 %491
        %v493 = vsel %vm486, %v478, 0.0
        %494 = vadd.xlane.f32.xlu0 %v493
        %v495 = vpop.xlane.xlu0 %494
        %v496 = vsel %vm486, %v479, 0.0
        %497 = vadd.xlane.f32.xlu0 %v496
        %v498 = vpop.xlane.xlu0 %497
        %v499 = vsel %vm486, %v480, 0.0
        %500 = vadd.xlane.f32.xlu0 %v499
        %v501 = vpop.xlane.xlu0 %500
        %v502 = vsel %vm486, %v481, 0.0
        %503 = vadd.xlane.f32.xlu0 %v502
        %v504 = vpop.xlane.xlu0 %503
        %v505 = vsel %vm486, %v482, 0.0
        %506 = vadd.xlane.f32.xlu0 %v505
        %v507 = vpop.xlane.xlu0 %506
        %v508 = vsel %vm486, %v483, 0.0
        %509 = vadd.xlane.f32.xlu0 %v508
        %v510 = vpop.xlane.xlu0 %509
        %v511 = vrcp.pop 32.0
        %v512 = vmul.f32 %v489, %v511
        %v513 = vmul.f32 %v492, %v511
        %v514 = vmul.f32 %v495, %v511
        %v515 = vmul.f32 %v498, %v511
        %v516 = vmul.f32 %v501, %v511
        %v517 = vmul.f32 %v504, %v511
        %v518 = vmul.f32 %v507, %v511
        %v519 = vmul.f32 %v510, %v511
        %v520 = vsub.f32 %v476, %v512
        %v521 = vsub.f32 %v477, %v513
        %v522 = vsub.f32 %v478, %v514
        %v523 = vsub.f32 %v479, %v515
        %v524 = vsub.f32 %v480, %v516
        %v525 = vsub.f32 %v481, %v517
        %v526 = vsub.f32 %v482, %v518
        %v527 = vsub.f32 %v483, %v519
        %v528 = vmul.f32 %v520, %v520
        %v529 = vmul.f32 %v521, %v521
        %v530 = vmul.f32 %v522, %v522
        %v531 = vmul.f32 %v523, %v523
        %v532 = vmul.f32 %v524, %v524
        %v533 = vmul.f32 %v525, %v525
        %v534 = vmul.f32 %v526, %v526
        %v535 = vmul.f32 %v527, %v527
        %v536 = vsel %vm486, %v528, 0.0
        %537 = vadd.xlane.f32.xlu0 %v536
        %v538 = vpop.xlane.xlu0 %537
        %v539 = vsel %vm486, %v529, 0.0
        %540 = vadd.xlane.f32.xlu0 %v539
        %v541 = vpop.xlane.xlu0 %540
        %v542 = vsel %vm486, %v530, 0.0
        %543 = vadd.xlane.f32.xlu0 %v542
        %v544 = vpop.xlane.xlu0 %543
        %v545 = vsel %vm486, %v531, 0.0
        %546 = vadd.xlane.f32.xlu0 %v545
        %v547 = vpop.xlane.xlu0 %546
        %v548 = vsel %vm486, %v532, 0.0
        %549 = vadd.xlane.f32.xlu0 %v548
        %v550 = vpop.xlane.xlu0 %549
        %v551 = vsel %vm486, %v533, 0.0
        %552 = vadd.xlane.f32.xlu0 %v551
        %v553 = vpop.xlane.xlu0 %552
        %v554 = vsel %vm486, %v534, 0.0
        %555 = vadd.xlane.f32.xlu0 %v554
        %v556 = vpop.xlane.xlu0 %555
        %v557 = vsel %vm486, %v535, 0.0
        %558 = vadd.xlane.f32.xlu0 %v557
        %v559 = vpop.xlane.xlu0 %558
        %v560 = vmul.f32 %v538, %v511
        %v561 = vmul.f32 %v541, %v511
        %v562 = vmul.f32 %v544, %v511
        %v563 = vmul.f32 %v547, %v511
        %v564 = vmul.f32 %v550, %v511
        %v565 = vmul.f32 %v553, %v511
        %v566 = vmul.f32 %v556, %v511
        %v567 = vmul.f32 %v559, %v511
        %v568 = vadd.f32 %v560, 1e-05
        %v569 = vadd.f32 %v561, 1e-05
        %v570 = vadd.f32 %v562, 1e-05
        %v571 = vadd.f32 %v563, 1e-05
        %v572 = vadd.f32 %v564, 1e-05
        %v573 = vadd.f32 %v565, 1e-05
        %v574 = vadd.f32 %v566, 1e-05
        %v575 = vadd.f32 %v567, 1e-05
        %v576 = vrsqrt.pop %v568
        %v577 = vrsqrt.pop %v569
        %v578 = vrsqrt.pop %v570
        %v579 = vrsqrt.pop %v571
        %v580 = vrsqrt.pop %v572
        %v581 = vrsqrt.pop %v573
        %v582 = vrsqrt.pop %v574
        %v583 = vrsqrt.pop %v575
        %v584 = vmul.f32 %v520, %v576
        %v585 = vmul.f32 %v521, %v577
        %v586 = vmul.f32 %v522, %v578
        %v587 = vmul.f32 %v523, %v579
        %v588 = vmul.f32 %v524, %v580
        %v589 = vmul.f32 %v525, %v581
        %v590 = vmul.f32 %v526, %v582
        %v591 = vmul.f32 %v527, %v583
        %v593 = vlaneseq
        %v594 = vshrl.u32 %v593, 7
        %v595 = vsub.s32 0, %v594
        %v596 = vrot.slane %v484, %v595
        %v598 = vmul.f32 %v584, %v596
        %v599 = vmul.f32 %v585, %v596
        %v600 = vmul.f32 %v586, %v596
        %v601 = vmul.f32 %v587, %v596
        %v602 = vmul.f32 %v588, %v596
        %v603 = vmul.f32 %v589, %v596
        %v604 = vmul.f32 %v590, %v596
        %v605 = vmul.f32 %v591, %v596
        %v607 = vlaneseq
        %v608 = vshrl.u32 %v607, 7
        %v609 = vsub.s32 0, %v608
        %v610 = vrot.slane %v485, %v609
        %v612 = vadd.f32 %v598, %v610
        %v613 = vadd.f32 %v599, %v610
        %v614 = vadd.f32 %v600, %v610
        %v615 = vadd.f32 %v601, %v610
        %v616 = vadd.f32 %v602, %v610
        %v617 = vadd.f32 %v603, %v610
        %v618 = vadd.f32 %v604, %v610
        %v619 = vadd.f32 %v605, %v610
        %v620 = vpack.c.bf16 %v613, %v612
        %v621 = vpack.c.bf16 %v615, %v614
        %v622 = vpack.c.bf16 %v617, %v616
        %v623 = vpack.c.bf16 %v619, %v618
        %v624 = vld [vmem:[#allocation8] sm:$0xff]
        %v625 = vld [vmem:[#allocation8 + $0x8] sm:$0xff]
        %v626 = vld [vmem:[#allocation8 + $0x10] sm:$0xff]
        %v627 = vld [vmem:[#allocation8 + $0x18] sm:$0xff]
        %v628 = vld [vmem:[#allocation8 + $0x20] sm:$0xff]
        %v629 = vld [vmem:[#allocation8 + $0x28] sm:$0xff]
        %v630 = vld [vmem:[#allocation8 + $0x30] sm:$0xff]
        %v631 = vld [vmem:[#allocation8 + $0x38] sm:$0xff]
        %v632 = vld [vmem:[#allocation10] sm:$0xf]
        %v634 = vlaneseq
        %v635 = vshrl.u32 %v634, 7
        %v636 = vsub.s32 0, %v635
        %v637 = vrot.slane %v632, %v636
        %v638 = vlaneseq
        %v639 = vshrl.u32 %v638, 7
        %v640 = vsub.s32 1, %v639
        %v641 = vrot.slane %v632, %v640
        %v642 = vlaneseq
        %v643 = vshrl.u32 %v642, 7
        %v644 = vsub.s32 2, %v643
        %v645 = vrot.slane %v632, %v644
        %v646 = vlaneseq
        %v647 = vshrl.u32 %v646, 7
        %v648 = vsub.s32 3, %v647
        %v649 = vrot.slane %v632, %v648
        %v662 = vunpack.c.l.b16 %v624
        %v663 = vunpack.c.h.b16 %v624
        %v664 = vunpack.c.l.b16 %v625
        %v665 = vunpack.c.h.b16 %v625
        %v666 = vunpack.c.l.b16 %v626
        %v667 = vunpack.c.h.b16 %v626
        %v668 = vunpack.c.l.b16 %v627
        %v669 = vunpack.c.h.b16 %v627
        %v670 = vunpack.c.l.b16 %v628
        %v671 = vunpack.c.h.b16 %v628
        %v672 = vunpack.c.l.b16 %v629
        %v673 = vunpack.c.h.b16 %v629
        %v674 = vunpack.c.l.b16 %v630
        %v675 = vunpack.c.h.b16 %v630
        %v676 = vunpack.c.l.b16 %v631
        %v677 = vunpack.c.h.b16 %v631
        %v678 = vpack.c.b16 %v666, %v662
        %v679 = vpack.c.b16 %v667, %v663
        %v680 = vpack.c.b16 %v668, %v664
        %v681 = vpack.c.b16 %v669, %v665
        %v682 = vpack.c.b16 %v674, %v670
        %v683 = vpack.c.b16 %v675, %v671
        %v684 = vpack.c.b16 %v676, %v672
        %v685 = vpack.c.b16 %v677, %v673
        %v695 = vsel %vm486, %v620, 0
        %v698 = vsel %vm486, %v621, 0
        %v701 = vsel %vm486, %v622, 0
        %v704 = vsel %vm486, %v623, 0
        %706 = vmatprep.subr.bf16.mxu0 %v679
        %707 = vmatpush1.bf16.msra.mxu0 %v678
        %708 = vmatprep.subr.bf16.mxu0 %v683
        %709 = vmatpush1.bf16.msra.mxu0 %v682
        %710 = vmatprep.subr.bf16.mxu0 0
        %711 = vmatpush1.bf16.msra.mxu0 0
        %712 = vmatprep.subr.bf16.mxu0 0
        %713 = vmatpush1.bf16.msra.mxu0 0
        %714 = vmatprep.subr.bf16.mxu0 0
        %715 = vmatpush1.bf16.msra.mxu0 0
        %716 = vmatprep.subr.bf16.mxu0 0
        %717 = vmatpush1.bf16.msra.mxu0 0
        %718 = vmatprep.subr.bf16.mxu0 0
        %719 = vmatpush1.bf16.msra.mxu0 0
        %720 = vmatprep.subr.bf16.mxu0 0
        %721 = vmatpush1.bf16.msra.mxu0 0
        %722 = vmatprep.subr.bf16.mxu0 0
        %723 = vmatpush1.bf16.msra.mxu0 0
        %724 = vmatprep.subr.bf16.mxu0 0
        %725 = vmatpush1.bf16.msra.mxu0 0
        %726 = vmatprep.subr.bf16.mxu0 0
        %727 = vmatpush1.bf16.msra.mxu0 0
        %728 = vmatprep.subr.bf16.mxu0 0
        %729 = vmatpush1.bf16.msra.mxu0 0
        %730 = vmatprep.subr.bf16.mxu0 0
        %731 = vmatpush1.bf16.msra.mxu0 0
        %732 = vmatprep.subr.bf16.mxu0 0
        %733 = vmatpush1.bf16.msra.mxu0 0
        %734 = vmatprep.subr.bf16.mxu0 0
        %735 = vmatpush1.bf16.msra.mxu0 0
        %736 = vmatprep.subr.bf16.mxu0 0
        %737 = vmatpush1.bf16.msra.mxu0 0
        %738 = vmatprep.mubr.bf16.mxu0 0
        %739 = vmatmul.mubr.bf16.gmra.mrb[0].mxu0 %v695
        %v740 = vpop.f32.mrb[0].mxu0
        %v741 = vadd.f32 %v637, %v740
        %v742 = vpop.f32.mrb[0].mxu0
        %v743 = vadd.f32 %v641, %v742
        %v744 = vpop.f32.mrb[0].mxu0
        %v745 = vadd.f32 %v637, %v744
        %v746 = vpop.f32.mrb[0].mxu0
        %v747 = vadd.f32 %v641, %v746
        %748 = vmatprep.mubr.bf16.mxu0 0
        %749 = vmatmul.mubr.bf16.gmra.mrb[0].mxu0 %v698
        %v750 = vpop.f32.mrb[0].mxu0
        %v751 = vadd.f32 %v637, %v750
        %v752 = vpop.f32.mrb[0].mxu0
        %v753 = vadd.f32 %v641, %v752
        %v754 = vpop.f32.mrb[0].mxu0
        %v755 = vadd.f32 %v637, %v754
        %v756 = vpop.f32.mrb[0].mxu0
        %v757 = vadd.f32 %v641, %v756
        %758 = vmatprep.mubr.bf16.mxu0 0
        %759 = vmatmul.mubr.bf16.gmra.mrb[0].mxu0 %v701
        %v760 = vpop.f32.mrb[0].mxu0
        %v761 = vadd.f32 %v637, %v760
        %v762 = vpop.f32.mrb[0].mxu0
        %v763 = vadd.f32 %v641, %v762
        %v764 = vpop.f32.mrb[0].mxu0
        %v765 = vadd.f32 %v637, %v764
        %v766 = vpop.f32.mrb[0].mxu0
        %v767 = vadd.f32 %v641, %v766
        %768 = vmatprep.mubr.bf16.mxu0 0
        %769 = vmatmul.mubr.bf16.gmra.mrb[0].mxu0 %v704
        %v770 = vpop.f32.mrb[0].mxu0
        %v771 = vadd.f32 %v637, %v770
        %v772 = vpop.f32.mrb[0].mxu0
        %v773 = vadd.f32 %v641, %v772
        %v774 = vpop.f32.mrb[0].mxu0
        %v775 = vadd.f32 %v637, %v774
        %v776 = vpop.f32.mrb[0].mxu0
        %v777 = vadd.f32 %v641, %v776
        %778 = vdwg.mxu0
        %779 = vmatprep.subr.bf16.mxu0 %v681
        %780 = vmatpush1.bf16.msra.mxu0 %v680
        %781 = vmatprep.subr.bf16.mxu0 %v685
        %782 = vmatpush1.bf16.msra.mxu0 %v684
        %783 = vmatprep.subr.bf16.mxu0 0
        %784 = vmatpush1.bf16.msra.mxu0 0
        %785 = vmatprep.subr.bf16.mxu0 0
        %786 = vmatpush1.bf16.msra.mxu0 0
        %787 = vmatprep.subr.bf16.mxu0 0
        %788 = vmatpush1.bf16.msra.mxu0 0
        %789 = vmatprep.subr.bf16.mxu0 0
        %790 = vmatpush1.bf16.msra.mxu0 0
        %791 = vmatprep.subr.bf16.mxu0 0
        %792 = vmatpush1.bf16.msra.mxu0 0
        %793 = vmatprep.subr.bf16.mxu0 0
        %794 = vmatpush1.bf16.msra.mxu0 0
        %795 = vmatprep.subr.bf16.mxu0 0
        %796 = vmatpush1.bf16.msra.mxu0 0
        %797 = vmatprep.subr.bf16.mxu0 0
        %798 = vmatpush1.bf16.msra.mxu0 0
        %799 = vmatprep.subr.bf16.mxu0 0
        %800 = vmatpush1.bf16.msra.mxu0 0
        %801 = vmatprep.subr.bf16.mxu0 0
        %802 = vmatpush1.bf16.msra.mxu0 0
        %803 = vmatprep.subr.bf16.mxu0 0
        %804 = vmatpush1.bf16.msra.mxu0 0
        %805 = vmatprep.subr.bf16.mxu0 0
        %806 = vmatpush1.bf16.msra.mxu0 0
        %807 = vmatprep.subr.bf16.mxu0 0
        %808 = vmatpush1.bf16.msra.mxu0 0
        %809 = vmatprep.subr.bf16.mxu0 0
        %810 = vmatpush1.bf16.msra.mxu0 0
        %811 = vmatprep.mubr.bf16.mxu0 0
        %812 = vmatmul.mubr.bf16.gmra.mrb[0].mxu0 %v695
        %v813 = vpop.f32.mrb[0].mxu0
        %v814 = vadd.f32 %v645, %v813
        %v815 = vpop.f32.mrb[0].mxu0
        %v816 = vadd.f32 %v649, %v815
        %v817 = vpop.f32.mrb[0].mxu0
        %v818 = vadd.f32 %v645, %v817
        %v819 = vpop.f32.mrb[0].mxu0
        %v820 = vadd.f32 %v649, %v819
        %821 = vmatprep.mubr.bf16.mxu0 0
        %822 = vmatmul.mubr.bf16.gmra.mrb[0].mxu0 %v698
        %v823 = vpop.f32.mrb[0].mxu0
        %v824 = vadd.f32 %v645, %v823
        %v825 = vpop.f32.mrb[0].mxu0
        %v826 = vadd.f32 %v649, %v825
        %v827 = vpop.f32.mrb[0].mxu0
        %v828 = vadd.f32 %v645, %v827
        %v829 = vpop.f32.mrb[0].mxu0
        %v830 = vadd.f32 %v649, %v829
        %831 = vmatprep.mubr.bf16.mxu0 0
        %832 = vmatmul.mubr.bf16.gmra.mrb[0].mxu0 %v701
        %v833 = vpop.f32.mrb[0].mxu0
        %v834 = vadd.f32 %v645, %v833
        %v835 = vpop.f32.mrb[0].mxu0
        %v836 = vadd.f32 %v649, %v835
        %v837 = vpop.f32.mrb[0].mxu0
        %v838 = vadd.f32 %v645, %v837
        %v839 = vpop.f32.mrb[0].mxu0
        %v840 = vadd.f32 %v649, %v839
        %841 = vmatprep.mubr.bf16.mxu0 0
        %842 = vmatmul.mubr.bf16.gmra.mrb[0].mxu0 %v704
        %v843 = vpop.f32.mrb[0].mxu0
        %v844 = vadd.f32 %v645, %v843
        %v845 = vpop.f32.mrb[0].mxu0
        %v846 = vadd.f32 %v649, %v845
        %v847 = vpop.f32.mrb[0].mxu0
        %v848 = vadd.f32 %v645, %v847
        %v849 = vpop.f32.mrb[0].mxu0
        %v850 = vadd.f32 %v649, %v849
        %851 = vdwg.mxu0
        %v852 = vxor.u32 %v816, 2147483648
        %v853 = vxor.u32 %v820, 2147483648
        %v854 = vxor.u32 %v826, 2147483648
        %v855 = vxor.u32 %v830, 2147483648
        %v856 = vxor.u32 %v836, 2147483648
        %v857 = vxor.u32 %v840, 2147483648
        %v858 = vxor.u32 %v846, 2147483648
        %v859 = vxor.u32 %v850, 2147483648
        %v860 = vmul.f32 %v852, 1.442695
        %v861 = vpow.pop %v860
        %v862 = vmul.f32 %v853, 1.442695
        %v863 = vpow.pop %v862
        %v864 = vmul.f32 %v854, 1.442695
        %v865 = vpow.pop %v864
        %v866 = vmul.f32 %v855, 1.442695
        %v867 = vpow.pop %v866
        %v868 = vmul.f32 %v856, 1.442695
        %v869 = vpow.pop %v868
        %v870 = vmul.f32 %v857, 1.442695
        %v871 = vpow.pop %v870
        %v872 = vmul.f32 %v858, 1.442695
        %v873 = vpow.pop %v872
        %v874 = vmul.f32 %v859, 1.442695
        %v875 = vpow.pop %v874
        %v876 = vadd.f32 %v861, 1.0
        %v877 = vadd.f32 %v863, 1.0
        %v878 = vadd.f32 %v865, 1.0
        %v879 = vadd.f32 %v867, 1.0
        %v880 = vadd.f32 %v869, 1.0
        %v881 = vadd.f32 %v871, 1.0
        %v882 = vadd.f32 %v873, 1.0
        %v883 = vadd.f32 %v875, 1.0
        %v884 = vrcp.pop %v876
        %v885 = vmul.f32 1.0, %v884
        %v886 = vrcp.pop %v877
        %v887 = vmul.f32 1.0, %v886
        %v888 = vrcp.pop %v878
        %v889 = vmul.f32 1.0, %v888
        %v890 = vrcp.pop %v879
        %v891 = vmul.f32 1.0, %v890
        %v892 = vrcp.pop %v880
        %v893 = vmul.f32 1.0, %v892
        %v894 = vrcp.pop %v881
        %v895 = vmul.f32 1.0, %v894
        %v896 = vrcp.pop %v882
        %v897 = vmul.f32 1.0, %v896
        %v898 = vrcp.pop %v883
        %v899 = vmul.f32 1.0, %v898
        %v900 = vmul.f32 %v741, %v743
        %v901 = vmul.f32 %v745, %v747
        %vm902 = vcmask 523264
        %v903 = vsel %vm902, %v900, 0.0
        %904 = vadd.xlane.f32.xlu0 %v903
        %v905 = vpop.xlane.xlu0 %904
        %v906 = vsel %vm902, %v901, 0.0
        %907 = vadd.xlane.f32.xlu0 %v906
        %v908 = vpop.xlane.xlu0 %907
        %v909 = vmul.f32 %v741, %v753
        %v910 = vmul.f32 %v745, %v757
        %v911 = vsel %vm902, %v909, 0.0
        %912 = vadd.xlane.f32.xlu0 %v911
        %v913 = vpop.xlane.xlu0 %912
        %v914 = vsel %vm902, %v910, 0.0
        %915 = vadd.xlane.f32.xlu0 %v914
        %v916 = vpop.xlane.xlu0 %915
        %v917 = vmul.f32 %v741, %v763
        %v918 = vmul.f32 %v745, %v767
        %v919 = vsel %vm902, %v917, 0.0
        %920 = vadd.xlane.f32.xlu0 %v919
        %v921 = vpop.xlane.xlu0 %920
        %v922 = vsel %vm902, %v918, 0.0
        %923 = vadd.xlane.f32.xlu0 %v922
        %v924 = vpop.xlane.xlu0 %923
        %v925 = vmul.f32 %v741, %v773
        %v926 = vmul.f32 %v745, %v777
        %v927 = vsel %vm902, %v925, 0.0
        %928 = vadd.xlane.f32.xlu0 %v927
        %v929 = vpop.xlane.xlu0 %928
        %v930 = vsel %vm902, %v926, 0.0
        %931 = vadd.xlane.f32.xlu0 %v930
        %v932 = vpop.xlane.xlu0 %931
        %vm933 = vcmask 7168
        %v934 = vsel %vm933, %v905, %v913
        %v935 = vsel %vm933, %v908, %v916
        %vm936 = vcmask 15360
        %v937 = vsel %vm936, %v934, %v921
        %v938 = vsel %vm936, %v935, %v924
        %vm939 = vcmask 23552
        %v940 = vsel %vm939, %v937, %v929
        %v941 = vsel %vm939, %v938, %v932
        %v942 = vmul.f32 %v940, 0.125
        %v943 = vmul.f32 %v941, 0.125
        %vm944 = vcmask 31744
        %v945 = vsel %vm944, %v942, -inf
        %946 = vmax.xlane.f32.xlu0 %v945
        %v947 = vpop.xlane.xlu0 %946
        %v948 = vsel %vm944, %v943, -inf
        %949 = vmax.xlane.f32.xlu0 %v948
        %v950 = vpop.xlane.xlu0 %949
        %v951 = vsub.f32 %v942, %v947
        %v952 = vsub.f32 %v943, %v950
        %v953 = vmul.f32 %v951, 1.442695
        %v954 = vpow.pop %v953
        %v955 = vmul.f32 %v952, 1.442695
        %v956 = vpow.pop %v955
        %v957 = vsel %vm944, %v954, 0.0
        %958 = vadd.xlane.f32.xlu0 %v957
        %v959 = vpop.xlane.xlu0 %958
        %v960 = vsel %vm944, %v956, 0.0
        %961 = vadd.xlane.f32.xlu0 %v960
        %v962 = vpop.xlane.xlu0 %961
        %v963 = vrcp.pop %v959
        %v964 = vrcp.pop %v962
        %v965 = vmul.f32 %v954, %v963
        %v966 = vmul.f32 %v956, %v964
        %968 = vset.pattern.permute.xlu0 0
        %969 = vperm.xlu0 %968, %v965
        %v970 = vpop.permute.xlu0 %969
        %973 = vset.pattern.permute.xlu0 0
        %974 = vperm.xlu0 %973, %v966
        %v975 = vpop.permute.xlu0 %974
        %v977 = vmul.f32 %v970, %v814
        %v978 = vmul.f32 %v975, %v818
        %979 = vset.pattern.permute.xlu0 1
        %980 = vperm.xlu0 %979, %v965
        %v981 = vpop.permute.xlu0 %980
        %983 = vset.pattern.permute.xlu0 1
        %984 = vperm.xlu0 %983, %v966
        %v985 = vpop.permute.xlu0 %984
        %v987 = vmul.f32 %v981, %v824
        %v988 = vmul.f32 %v985, %v828
        %v989 = vadd.f32 %v977, %v987
        %v990 = vadd.f32 %v978, %v988
        %991 = vset.pattern.permute.xlu0 2
        %992 = vperm.xlu0 %991, %v965
        %v993 = vpop.permute.xlu0 %992
        %995 = vset.pattern.permute.xlu0 2
        %996 = vperm.xlu0 %995, %v966
        %v997 = vpop.permute.xlu0 %996
        %v999 = vmul.f32 %v993, %v834
        %v1000 = vmul.f32 %v997, %v838
        %v1001 = vadd.f32 %v989, %v999
        %v1002 = vadd.f32 %v990, %v1000
        %1003 = vset.pattern.permute.xlu0 3
        %1004 = vperm.xlu0 %1003, %v965
        %v1005 = vpop.permute.xlu0 %1004
        %1007 = vset.pattern.permute.xlu0 3
        %1008 = vperm.xlu0 %1007, %v966
        %v1009 = vpop.permute.xlu0 %1008
        %v1011 = vmul.f32 %v1005, %v844
        %v1012 = vmul.f32 %v1009, %v848
        %v1013 = vadd.f32 %v1001, %v1011
        %v1014 = vadd.f32 %v1002, %v1012
        %v1015 = vmul.f32 %v1013, %v885
        %v1016 = vmul.f32 %v1014, %v887
        %v1017 = vmul.f32 %v751, %v743
        %v1018 = vmul.f32 %v755, %v747
        %v1019 = vsel %vm902, %v1017, 0.0
        %1020 = vadd.xlane.f32.xlu0 %v1019
        %v1021 = vpop.xlane.xlu0 %1020
        %v1022 = vsel %vm902, %v1018, 0.0
        %1023 = vadd.xlane.f32.xlu0 %v1022
        %v1024 = vpop.xlane.xlu0 %1023
        %v1025 = vmul.f32 %v751, %v753
        %v1026 = vmul.f32 %v755, %v757
        %v1027 = vsel %vm902, %v1025, 0.0
        %1028 = vadd.xlane.f32.xlu0 %v1027
        %v1029 = vpop.xlane.xlu0 %1028
        %v1030 = vsel %vm902, %v1026, 0.0
        %1031 = vadd.xlane.f32.xlu0 %v1030
        %v1032 = vpop.xlane.xlu0 %1031
        %v1033 = vmul.f32 %v751, %v763
        %v1034 = vmul.f32 %v755, %v767
        %v1035 = vsel %vm902, %v1033, 0.0
        %1036 = vadd.xlane.f32.xlu0 %v1035
        %v1037 = vpop.xlane.xlu0 %1036
        %v1038 = vsel %vm902, %v1034, 0.0
        %1039 = vadd.xlane.f32.xlu0 %v1038
        %v1040 = vpop.xlane.xlu0 %1039
        %v1041 = vmul.f32 %v751, %v773
        %v1042 = vmul.f32 %v755, %v777
        %v1043 = vsel %vm902, %v1041, 0.0
        %1044 = vadd.xlane.f32.xlu0 %v1043
        %v1045 = vpop.xlane.xlu0 %1044
        %v1046 = vsel %vm902, %v1042, 0.0
        %1047 = vadd.xlane.f32.xlu0 %v1046
        %v1048 = vpop.xlane.xlu0 %1047
        %v1049 = vsel %vm933, %v1021, %v1029
        %v1050 = vsel %vm933, %v1024, %v1032
        %v1051 = vsel %vm936, %v1049, %v1037
        %v1052 = vsel %vm936, %v1050, %v1040
        %v1053 = vsel %vm939, %v1051, %v1045
        %v1054 = vsel %vm939, %v1052, %v1048
        %v1055 = vmul.f32 %v1053, 0.125
        %v1056 = vmul.f32 %v1054, 0.125
        %v1057 = vsel %vm944, %v1055, -inf
        %1058 = vmax.xlane.f32.xlu0 %v1057
        %v1059 = vpop.xlane.xlu0 %1058
        %v1060 = vsel %vm944, %v1056, -inf
        %1061 = vmax.xlane.f32.xlu0 %v1060
        %v1062 = vpop.xlane.xlu0 %1061
        %v1063 = vsub.f32 %v1055, %v1059
        %v1064 = vsub.f32 %v1056, %v1062
        %v1065 = vmul.f32 %v1063, 1.442695
        %v1066 = vpow.pop %v1065
        %v1067 = vmul.f32 %v1064, 1.442695
        %v1068 = vpow.pop %v1067
        %v1069 = vsel %vm944, %v1066, 0.0
        %1070 = vadd.xlane.f32.xlu0 %v1069
        %v1071 = vpop.xlane.xlu0 %1070
        %v1072 = vsel %vm944, %v1068, 0.0
        %1073 = vadd.xlane.f32.xlu0 %v1072
        %v1074 = vpop.xlane.xlu0 %1073
        %v1075 = vrcp.pop %v1071
        %v1076 = vrcp.pop %v1074
        %v1077 = vmul.f32 %v1066, %v1075
        %v1078 = vmul.f32 %v1068, %v1076
        %1080 = vset.pattern.permute.xlu0 0
        %1081 = vperm.xlu0 %1080, %v1077
        %v1082 = vpop.permute.xlu0 %1081
        %1085 = vset.pattern.permute.xlu0 0
        %1086 = vperm.xlu0 %1085, %v1078
        %v1087 = vpop.permute.xlu0 %1086
        %v1089 = vmul.f32 %v1082, %v814
        %v1090 = vmul.f32 %v1087, %v818
        %1091 = vset.pattern.permute.xlu0 1
        %1092 = vperm.xlu0 %1091, %v1077
        %v1093 = vpop.permute.xlu0 %1092
        %1095 = vset.pattern.permute.xlu0 1
        %1096 = vperm.xlu0 %1095, %v1078
        %v1097 = vpop.permute.xlu0 %1096
        %v1099 = vmul.f32 %v1093, %v824
        %v1100 = vmul.f32 %v1097, %v828
        %v1101 = vadd.f32 %v1089, %v1099
        %v1102 = vadd.f32 %v1090, %v1100
        %1103 = vset.pattern.permute.xlu0 2
        %1104 = vperm.xlu0 %1103, %v1077
        %v1105 = vpop.permute.xlu0 %1104
        %1107 = vset.pattern.permute.xlu0 2
        %1108 = vperm.xlu0 %1107, %v1078
        %v1109 = vpop.permute.xlu0 %1108
        %v1111 = vmul.f32 %v1105, %v834
        %v1112 = vmul.f32 %v1109, %v838
        %v1113 = vadd.f32 %v1101, %v1111
        %v1114 = vadd.f32 %v1102, %v1112
        %1115 = vset.pattern.permute.xlu0 3
        %1116 = vperm.xlu0 %1115, %v1077
        %v1117 = vpop.permute.xlu0 %1116
        %1119 = vset.pattern.permute.xlu0 3
        %1120 = vperm.xlu0 %1119, %v1078
        %v1121 = vpop.permute.xlu0 %1120
        %v1123 = vmul.f32 %v1117, %v844
        %v1124 = vmul.f32 %v1121, %v848
        %v1125 = vadd.f32 %v1113, %v1123
        %v1126 = vadd.f32 %v1114, %v1124
        %v1127 = vmul.f32 %v1125, %v889
        %v1128 = vmul.f32 %v1126, %v891
        %v1129 = vmul.f32 %v761, %v743
        %v1130 = vmul.f32 %v765, %v747
        %v1131 = vsel %vm902, %v1129, 0.0
        %1132 = vadd.xlane.f32.xlu0 %v1131
        %v1133 = vpop.xlane.xlu0 %1132
        %v1134 = vsel %vm902, %v1130, 0.0
        %1135 = vadd.xlane.f32.xlu0 %v1134
        %v1136 = vpop.xlane.xlu0 %1135
        %v1137 = vmul.f32 %v761, %v753
        %v1138 = vmul.f32 %v765, %v757
        %v1139 = vsel %vm902, %v1137, 0.0
        %1140 = vadd.xlane.f32.xlu0 %v1139
        %v1141 = vpop.xlane.xlu0 %1140
        %v1142 = vsel %vm902, %v1138, 0.0
        %1143 = vadd.xlane.f32.xlu0 %v1142
        %v1144 = vpop.xlane.xlu0 %1143
        %v1145 = vmul.f32 %v761, %v763
        %v1146 = vmul.f32 %v765, %v767
        %v1147 = vsel %vm902, %v1145, 0.0
        %1148 = vadd.xlane.f32.xlu0 %v1147
        %v1149 = vpop.xlane.xlu0 %1148
        %v1150 = vsel %vm902, %v1146, 0.0
        %1151 = vadd.xlane.f32.xlu0 %v1150
        %v1152 = vpop.xlane.xlu0 %1151
        %v1153 = vmul.f32 %v761, %v773
        %v1154 = vmul.f32 %v765, %v777
        %v1155 = vsel %vm902, %v1153, 0.0
        %1156 = vadd.xlane.f32.xlu0 %v1155
        %v1157 = vpop.xlane.xlu0 %1156
        %v1158 = vsel %vm902, %v1154, 0.0
        %1159 = vadd.xlane.f32.xlu0 %v1158
        %v1160 = vpop.xlane.xlu0 %1159
        %v1161 = vsel %vm933, %v1133, %v1141
        %v1162 = vsel %vm933, %v1136, %v1144
        %v1163 = vsel %vm936, %v1161, %v1149
        %v1164 = vsel %vm936, %v1162, %v1152
        %v1165 = vsel %vm939, %v1163, %v1157
        %v1166 = vsel %vm939, %v1164, %v1160
        %v1167 = vmul.f32 %v1165, 0.125
        %v1168 = vmul.f32 %v1166, 0.125
        %v1169 = vsel %vm944, %v1167, -inf
        %1170 = vmax.xlane.f32.xlu0 %v1169
        %v1171 = vpop.xlane.xlu0 %1170
        %v1172 = vsel %vm944, %v1168, -inf
        %1173 = vmax.xlane.f32.xlu0 %v1172
        %v1174 = vpop.xlane.xlu0 %1173
        %v1175 = vsub.f32 %v1167, %v1171
        %v1176 = vsub.f32 %v1168, %v1174
        %v1177 = vmul.f32 %v1175, 1.442695
        %v1178 = vpow.pop %v1177
        %v1179 = vmul.f32 %v1176, 1.442695
        %v1180 = vpow.pop %v1179
        %v1181 = vsel %vm944, %v1178, 0.0
        %1182 = vadd.xlane.f32.xlu0 %v1181
        %v1183 = vpop.xlane.xlu0 %1182
        %v1184 = vsel %vm944, %v1180, 0.0
        %1185 = vadd.xlane.f32.xlu0 %v1184
        %v1186 = vpop.xlane.xlu0 %1185
        %v1187 = vrcp.pop %v1183
        %v1188 = vrcp.pop %v1186
        %v1189 = vmul.f32 %v1178, %v1187
        %v1190 = vmul.f32 %v1180, %v1188
        %1192 = vset.pattern.permute.xlu0 0
        %1193 = vperm.xlu0 %1192, %v1189
        %v1194 = vpop.permute.xlu0 %1193
        %1197 = vset.pattern.permute.xlu0 0
        %1198 = vperm.xlu0 %1197, %v1190
        %v1199 = vpop.permute.xlu0 %1198
        %v1201 = vmul.f32 %v1194, %v814
        %v1202 = vmul.f32 %v1199, %v818
        %1203 = vset.pattern.permute.xlu0 1
        %1204 = vperm.xlu0 %1203, %v1189
        %v1205 = vpop.permute.xlu0 %1204
        %1207 = vset.pattern.permute.xlu0 1
        %1208 = vperm.xlu0 %1207, %v1190
        %v1209 = vpop.permute.xlu0 %1208
        %v1211 = vmul.f32 %v1205, %v824
        %v1212 = vmul.f32 %v1209, %v828
        %v1213 = vadd.f32 %v1201, %v1211
        %v1214 = vadd.f32 %v1202, %v1212
        %1215 = vset.pattern.permute.xlu0 2
        %1216 = vperm.xlu0 %1215, %v1189
        %v1217 = vpop.permute.xlu0 %1216
        %1219 = vset.pattern.permute.xlu0 2
        %1220 = vperm.xlu0 %1219, %v1190
        %v1221 = vpop.permute.xlu0 %1220
        %v1223 = vmul.f32 %v1217, %v834
        %v1224 = vmul.f32 %v1221, %v838
        %v1225 = vadd.f32 %v1213, %v1223
        %v1226 = vadd.f32 %v1214, %v1224
        %1227 = vset.pattern.permute.xlu0 3
        %1228 = vperm.xlu0 %1227, %v1189
        %v1229 = vpop.permute.xlu0 %1228
        %1231 = vset.pattern.permute.xlu0 3
        %1232 = vperm.xlu0 %1231, %v1190
        %v1233 = vpop.permute.xlu0 %1232
        %v1235 = vmul.f32 %v1229, %v844
        %v1236 = vmul.f32 %v1233, %v848
        %v1237 = vadd.f32 %v1225, %v1235
        %v1238 = vadd.f32 %v1226, %v1236
        %v1239 = vmul.f32 %v1237, %v893
        %v1240 = vmul.f32 %v1238, %v895
        %v1241 = vmul.f32 %v771, %v743
        %v1242 = vmul.f32 %v775, %v747
        %v1243 = vsel %vm902, %v1241, 0.0
        %1244 = vadd.xlane.f32.xlu0 %v1243
        %v1245 = vpop.xlane.xlu0 %1244
        %v1246 = vsel %vm902, %v1242, 0.0
        %1247 = vadd.xlane.f32.xlu0 %v1246
        %v1248 = vpop.xlane.xlu0 %1247
        %v1249 = vmul.f32 %v771, %v753
        %v1250 = vmul.f32 %v775, %v757
        %v1251 = vsel %vm902, %v1249, 0.0
        %1252 = vadd.xlane.f32.xlu0 %v1251
        %v1253 = vpop.xlane.xlu0 %1252
        %v1254 = vsel %vm902, %v1250, 0.0
        %1255 = vadd.xlane.f32.xlu0 %v1254
        %v1256 = vpop.xlane.xlu0 %1255
        %v1257 = vmul.f32 %v771, %v763
        %v1258 = vmul.f32 %v775, %v767
        %v1259 = vsel %vm902, %v1257, 0.0
        %1260 = vadd.xlane.f32.xlu0 %v1259
        %v1261 = vpop.xlane.xlu0 %1260
        %v1262 = vsel %vm902, %v1258, 0.0
        %1263 = vadd.xlane.f32.xlu0 %v1262
        %v1264 = vpop.xlane.xlu0 %1263
        %v1265 = vmul.f32 %v771, %v773
        %v1266 = vmul.f32 %v775, %v777
        %v1267 = vsel %vm902, %v1265, 0.0
        %1268 = vadd.xlane.f32.xlu0 %v1267
        %v1269 = vpop.xlane.xlu0 %1268
        %v1270 = vsel %vm902, %v1266, 0.0
        %1271 = vadd.xlane.f32.xlu0 %v1270
        %v1272 = vpop.xlane.xlu0 %1271
        %v1273 = vsel %vm933, %v1245, %v1253
        %v1274 = vsel %vm933, %v1248, %v1256
        %v1275 = vsel %vm936, %v1273, %v1261
        %v1276 = vsel %vm936, %v1274, %v1264
        %v1277 = vsel %vm939, %v1275, %v1269
        %v1278 = vsel %vm939, %v1276, %v1272
        %v1279 = vmul.f32 %v1277, 0.125
        %v1280 = vmul.f32 %v1278, 0.125
        %v1281 = vsel %vm944, %v1279, -inf
        %1282 = vmax.xlane.f32.xlu0 %v1281
        %v1283 = vpop.xlane.xlu0 %1282
        %v1284 = vsel %vm944, %v1280, -inf
        %1285 = vmax.xlane.f32.xlu0 %v1284
        %v1286 = vpop.xlane.xlu0 %1285
        %v1287 = vsub.f32 %v1279, %v1283
        %v1288 = vsub.f32 %v1280, %v1286
        %v1289 = vmul.f32 %v1287, 1.442695
        %v1290 = vpow.pop %v1289
        %v1291 = vmul.f32 %v1288, 1.442695
        %v1292 = vpow.pop %v1291
        %v1293 = vsel %vm944, %v1290, 0.0
        %1294 = vadd.xlane.f32.xlu0 %v1293
        %v1295 = vpop.xlane.xlu0 %1294
        %v1296 = vsel %vm944, %v1292, 0.0
        %1297 = vadd.xlane.f32.xlu0 %v1296
        %v1298 = vpop.xlane.xlu0 %1297
        %v1299 = vrcp.pop %v1295
        %v1300 = vrcp.pop %v1298
        %v1301 = vmul.f32 %v1290, %v1299
        %v1302 = vmul.f32 %v1292, %v1300
        %1304 = vset.pattern.permute.xlu0 0
        %1305 = vperm.xlu0 %1304, %v1301
        %v1306 = vpop.permute.xlu0 %1305
        %1309 = vset.pattern.permute.xlu0 0
        %1310 = vperm.xlu0 %1309, %v1302
        %v1311 = vpop.permute.xlu0 %1310
        %v1313 = vmul.f32 %v1306, %v814
        %v1314 = vmul.f32 %v1311, %v818
        %1315 = vset.pattern.permute.xlu0 1
        %1316 = vperm.xlu0 %1315, %v1301
        %v1317 = vpop.permute.xlu0 %1316
        %1319 = vset.pattern.permute.xlu0 1
        %1320 = vperm.xlu0 %1319, %v1302
        %v1321 = vpop.permute.xlu0 %1320
        %v1323 = vmul.f32 %v1317, %v824
        %v1324 = vmul.f32 %v1321, %v828
        %v1325 = vadd.f32 %v1313, %v1323
        %v1326 = vadd.f32 %v1314, %v1324
        %1327 = vset.pattern.permute.xlu0 2
        %1328 = vperm.xlu0 %1327, %v1301
        %v1329 = vpop.permute.xlu0 %1328
        %1331 = vset.pattern.permute.xlu0 2
        %1332 = vperm.xlu0 %1331, %v1302
        %v1333 = vpop.permute.xlu0 %1332
        %v1335 = vmul.f32 %v1329, %v834
        %v1336 = vmul.f32 %v1333, %v838
        %v1337 = vadd.f32 %v1325, %v1335
        %v1338 = vadd.f32 %v1326, %v1336
        %1339 = vset.pattern.permute.xlu0 3
        %1340 = vperm.xlu0 %1339, %v1301
        %v1341 = vpop.permute.xlu0 %1340
        %1343 = vset.pattern.permute.xlu0 3
        %1344 = vperm.xlu0 %1343, %v1302
        %v1345 = vpop.permute.xlu0 %1344
        %v1347 = vmul.f32 %v1341, %v844
        %v1348 = vmul.f32 %v1345, %v848
        %v1349 = vadd.f32 %v1337, %v1347
        %v1350 = vadd.f32 %v1338, %v1348
        %v1351 = vmul.f32 %v1349, %v897
        %v1352 = vmul.f32 %v1350, %v899
        %1355 = vrot.lane.b32.xlu0 %v900, 64
        %v1356 = vpop.permute.xlu0 %1355
        %1357 = vrot.lane.b32.xlu0 %v901, 64
        %v1358 = vpop.permute.xlu0 %1357
        %v1361 = vsel %vm902, %v1356, 0.0
        %1362 = vadd.xlane.f32.xlu0 %v1361
        %v1363 = vpop.xlane.xlu0 %1362
        %v1364 = vsel %vm902, %v1358, 0.0
        %1365 = vadd.xlane.f32.xlu0 %v1364
        %v1366 = vpop.xlane.xlu0 %1365
        %1369 = vrot.lane.b32.xlu0 %v909, 64
        %v1370 = vpop.permute.xlu0 %1369
        %1371 = vrot.lane.b32.xlu0 %v910, 64
        %v1372 = vpop.permute.xlu0 %1371
        %v1375 = vsel %vm902, %v1370, 0.0
        %1376 = vadd.xlane.f32.xlu0 %v1375
        %v1377 = vpop.xlane.xlu0 %1376
        %v1378 = vsel %vm902, %v1372, 0.0
        %1379 = vadd.xlane.f32.xlu0 %v1378
        %v1380 = vpop.xlane.xlu0 %1379
        %1383 = vrot.lane.b32.xlu0 %v917, 64
        %v1384 = vpop.permute.xlu0 %1383
        %1385 = vrot.lane.b32.xlu0 %v918, 64
        %v1386 = vpop.permute.xlu0 %1385
        %v1389 = vsel %vm902, %v1384, 0.0
        %1390 = vadd.xlane.f32.xlu0 %v1389
        %v1391 = vpop.xlane.xlu0 %1390
        %v1392 = vsel %vm902, %v1386, 0.0
        %1393 = vadd.xlane.f32.xlu0 %v1392
        %v1394 = vpop.xlane.xlu0 %1393
        %1397 = vrot.lane.b32.xlu0 %v925, 64
        %v1398 = vpop.permute.xlu0 %1397
        %1399 = vrot.lane.b32.xlu0 %v926, 64
        %v1400 = vpop.permute.xlu0 %1399
        %v1403 = vsel %vm902, %v1398, 0.0
        %1404 = vadd.xlane.f32.xlu0 %v1403
        %v1405 = vpop.xlane.xlu0 %1404
        %v1406 = vsel %vm902, %v1400, 0.0
        %1407 = vadd.xlane.f32.xlu0 %v1406
        %v1408 = vpop.xlane.xlu0 %1407
        %v1409 = vsel %vm933, %v1363, %v1377
        %v1410 = vsel %vm933, %v1366, %v1380
        %v1411 = vsel %vm936, %v1409, %v1391
        %v1412 = vsel %vm936, %v1410, %v1394
        %v1413 = vsel %vm939, %v1411, %v1405
        %v1414 = vsel %vm939, %v1412, %v1408
        %v1415 = vmul.f32 %v1413, 0.125
        %v1416 = vmul.f32 %v1414, 0.125
        %v1417 = vsel %vm944, %v1415, -inf
        %1418 = vmax.xlane.f32.xlu0 %v1417
        %v1419 = vpop.xlane.xlu0 %1418
        %v1420 = vsel %vm944, %v1416, -inf
        %1421 = vmax.xlane.f32.xlu0 %v1420
        %v1422 = vpop.xlane.xlu0 %1421
        %v1423 = vsub.f32 %v1415, %v1419
        %v1424 = vsub.f32 %v1416, %v1422
        %v1425 = vmul.f32 %v1423, 1.442695
        %v1426 = vpow.pop %v1425
        %v1427 = vmul.f32 %v1424, 1.442695
        %v1428 = vpow.pop %v1427
        %v1429 = vsel %vm944, %v1426, 0.0
        %1430 = vadd.xlane.f32.xlu0 %v1429
        %v1431 = vpop.xlane.xlu0 %1430
        %v1432 = vsel %vm944, %v1428, 0.0
        %1433 = vadd.xlane.f32.xlu0 %v1432
        %v1434 = vpop.xlane.xlu0 %1433
        %v1435 = vrcp.pop %v1431
        %v1436 = vrcp.pop %v1434
        %v1437 = vmul.f32 %v1426, %v1435
        %v1438 = vmul.f32 %v1428, %v1436
        %1440 = vset.pattern.permute.xlu0 0
        %1441 = vperm.xlu0 %1440, %v1437
        %v1442 = vpop.permute.xlu0 %1441
        %1445 = vset.pattern.permute.xlu0 0
        %1446 = vperm.xlu0 %1445, %v1438
        %v1447 = vpop.permute.xlu0 %1446
        %v1449 = vmul.f32 %v1442, %v814
        %v1450 = vmul.f32 %v1447, %v818
        %1451 = vset.pattern.permute.xlu0 1
        %1452 = vperm.xlu0 %1451, %v1437
        %v1453 = vpop.permute.xlu0 %1452
        %1455 = vset.pattern.permute.xlu0 1
        %1456 = vperm.xlu0 %1455, %v1438
        %v1457 = vpop.permute.xlu0 %1456
        %v1459 = vmul.f32 %v1453, %v824
        %v1460 = vmul.f32 %v1457, %v828
        %v1461 = vadd.f32 %v1449, %v1459
        %v1462 = vadd.f32 %v1450, %v1460
        %1463 = vset.pattern.permute.xlu0 2
        %1464 = vperm.xlu0 %1463, %v1437
        %v1465 = vpop.permute.xlu0 %1464
        %1467 = vset.pattern.permute.xlu0 2
        %1468 = vperm.xlu0 %1467, %v1438
        %v1469 = vpop.permute.xlu0 %1468
        %v1471 = vmul.f32 %v1465, %v834
        %v1472 = vmul.f32 %v1469, %v838
        %v1473 = vadd.f32 %v1461, %v1471
        %v1474 = vadd.f32 %v1462, %v1472
        %1475 = vset.pattern.permute.xlu0 3
        %1476 = vperm.xlu0 %1475, %v1437
        %v1477 = vpop.permute.xlu0 %1476
        %1479 = vset.pattern.permute.xlu0 3
        %1480 = vperm.xlu0 %1479, %v1438
        %v1481 = vpop.permute.xlu0 %1480
        %v1483 = vmul.f32 %v1477, %v844
        %v1484 = vmul.f32 %v1481, %v848
        %v1485 = vadd.f32 %v1473, %v1483
        %v1486 = vadd.f32 %v1474, %v1484
        %v1487 = vmul.f32 %v1485, %v885
        %v1488 = vmul.f32 %v1486, %v887
        %1491 = vrot.lane.b32.xlu0 %v1017, 64
        %v1492 = vpop.permute.xlu0 %1491
        %1493 = vrot.lane.b32.xlu0 %v1018, 64
        %v1494 = vpop.permute.xlu0 %1493
        %v1497 = vsel %vm902, %v1492, 0.0
        %1498 = vadd.xlane.f32.xlu0 %v1497
        %v1499 = vpop.xlane.xlu0 %1498
        %v1500 = vsel %vm902, %v1494, 0.0
        %1501 = vadd.xlane.f32.xlu0 %v1500
        %v1502 = vpop.xlane.xlu0 %1501
        %1505 = vrot.lane.b32.xlu0 %v1025, 64
        %v1506 = vpop.permute.xlu0 %1505
        %1507 = vrot.lane.b32.xlu0 %v1026, 64
        %v1508 = vpop.permute.xlu0 %1507
        %v1511 = vsel %vm902, %v1506, 0.0
        %1512 = vadd.xlane.f32.xlu0 %v1511
        %v1513 = vpop.xlane.xlu0 %1512
        %v1514 = vsel %vm902, %v1508, 0.0
        %1515 = vadd.xlane.f32.xlu0 %v1514
        %v1516 = vpop.xlane.xlu0 %1515
        %1519 = vrot.lane.b32.xlu0 %v1033, 64
        %v1520 = vpop.permute.xlu0 %1519
        %1521 = vrot.lane.b32.xlu0 %v1034, 64
        %v1522 = vpop.permute.xlu0 %1521
        %v1525 = vsel %vm902, %v1520, 0.0
        %1526 = vadd.xlane.f32.xlu0 %v1525
        %v1527 = vpop.xlane.xlu0 %1526
        %v1528 = vsel %vm902, %v1522, 0.0
        %1529 = vadd.xlane.f32.xlu0 %v1528
        %v1530 = vpop.xlane.xlu0 %1529
        %1533 = vrot.lane.b32.xlu0 %v1041, 64
        %v1534 = vpop.permute.xlu0 %1533
        %1535 = vrot.lane.b32.xlu0 %v1042, 64
        %v1536 = vpop.permute.xlu0 %1535
        %v1539 = vsel %vm902, %v1534, 0.0
        %1540 = vadd.xlane.f32.xlu0 %v1539
        %v1541 = vpop.xlane.xlu0 %1540
        %v1542 = vsel %vm902, %v1536, 0.0
        %1543 = vadd.xlane.f32.xlu0 %v1542
        %v1544 = vpop.xlane.xlu0 %1543
        %v1545 = vsel %vm933, %v1499, %v1513
        %v1546 = vsel %vm933, %v1502, %v1516
        %v1547 = vsel %vm936, %v1545, %v1527
        %v1548 = vsel %vm936, %v1546, %v1530
        %v1549 = vsel %vm939, %v1547, %v1541
        %v1550 = vsel %vm939, %v1548, %v1544
        %v1551 = vmul.f32 %v1549, 0.125
        %v1552 = vmul.f32 %v1550, 0.125
        %v1553 = vsel %vm944, %v1551, -inf
        %1554 = vmax.xlane.f32.xlu0 %v1553
        %v1555 = vpop.xlane.xlu0 %1554
        %v1556 = vsel %vm944, %v1552, -inf
        %1557 = vmax.xlane.f32.xlu0 %v1556
        %v1558 = vpop.xlane.xlu0 %1557
        %v1559 = vsub.f32 %v1551, %v1555
        %v1560 = vsub.f32 %v1552, %v1558
        %v1561 = vmul.f32 %v1559, 1.442695
        %v1562 = vpow.pop %v1561
        %v1563 = vmul.f32 %v1560, 1.442695
        %v1564 = vpow.pop %v1563
        %v1565 = vsel %vm944, %v1562, 0.0
        %1566 = vadd.xlane.f32.xlu0 %v1565
        %v1567 = vpop.xlane.xlu0 %1566
        %v1568 = vsel %vm944, %v1564, 0.0
        %1569 = vadd.xlane.f32.xlu0 %v1568
        %v1570 = vpop.xlane.xlu0 %1569
        %v1571 = vrcp.pop %v1567
        %v1572 = vrcp.pop %v1570
        %v1573 = vmul.f32 %v1562, %v1571
        %v1574 = vmul.f32 %v1564, %v1572
        %1576 = vset.pattern.permute.xlu0 0
        %1577 = vperm.xlu0 %1576, %v1573
        %v1578 = vpop.permute.xlu0 %1577
        %1581 = vset.pattern.permute.xlu0 0
        %1582 = vperm.xlu0 %1581, %v1574
        %v1583 = vpop.permute.xlu0 %1582
        %v1585 = vmul.f32 %v1578, %v814
        %v1586 = vmul.f32 %v1583, %v818
        %1587 = vset.pattern.permute.xlu0 1
        %1588 = vperm.xlu0 %1587, %v1573
        %v1589 = vpop.permute.xlu0 %1588
        %1591 = vset.pattern.permute.xlu0 1
        %1592 = vperm.xlu0 %1591, %v1574
        %v1593 = vpop.permute.xlu0 %1592
        %v1595 = vmul.f32 %v1589, %v824
        %v1596 = vmul.f32 %v1593, %v828
        %v1597 = vadd.f32 %v1585, %v1595
        %v1598 = vadd.f32 %v1586, %v1596
        %1599 = vset.pattern.permute.xlu0 2
        %1600 = vperm.xlu0 %1599, %v1573
        %v1601 = vpop.permute.xlu0 %1600
        %1603 = vset.pattern.permute.xlu0 2
        %1604 = vperm.xlu0 %1603, %v1574
        %v1605 = vpop.permute.xlu0 %1604
        %v1607 = vmul.f32 %v1601, %v834
        %v1608 = vmul.f32 %v1605, %v838
        %v1609 = vadd.f32 %v1597, %v1607
        %v1610 = vadd.f32 %v1598, %v1608
        %1611 = vset.pattern.permute.xlu0 3
        %1612 = vperm.xlu0 %1611, %v1573
        %v1613 = vpop.permute.xlu0 %1612
        %1615 = vset.pattern.permute.xlu0 3
        %1616 = vperm.xlu0 %1615, %v1574
        %v1617 = vpop.permute.xlu0 %1616
        %v1619 = vmul.f32 %v1613, %v844
        %v1620 = vmul.f32 %v1617, %v848
        %v1621 = vadd.f32 %v1609, %v1619
        %v1622 = vadd.f32 %v1610, %v1620
        %v1623 = vmul.f32 %v1621, %v889
        %v1624 = vmul.f32 %v1622, %v891
        %1627 = vrot.lane.b32.xlu0 %v1129, 64
        %v1628 = vpop.permute.xlu0 %1627
        %1629 = vrot.lane.b32.xlu0 %v1130, 64
        %v1630 = vpop.permute.xlu0 %1629
        %v1633 = vsel %vm902, %v1628, 0.0
        %1634 = vadd.xlane.f32.xlu0 %v1633
        %v1635 = vpop.xlane.xlu0 %1634
        %v1636 = vsel %vm902, %v1630, 0.0
        %1637 = vadd.xlane.f32.xlu0 %v1636
        %v1638 = vpop.xlane.xlu0 %1637
        %1641 = vrot.lane.b32.xlu0 %v1137, 64
        %v1642 = vpop.permute.xlu0 %1641
        %1643 = vrot.lane.b32.xlu0 %v1138, 64
        %v1644 = vpop.permute.xlu0 %1643
        %v1647 = vsel %vm902, %v1642, 0.0
        %1648 = vadd.xlane.f32.xlu0 %v1647
        %v1649 = vpop.xlane.xlu0 %1648
        %v1650 = vsel %vm902, %v1644, 0.0
        %1651 = vadd.xlane.f32.xlu0 %v1650
        %v1652 = vpop.xlane.xlu0 %1651
        %1655 = vrot.lane.b32.xlu0 %v1145, 64
        %v1656 = vpop.permute.xlu0 %1655
        %1657 = vrot.lane.b32.xlu0 %v1146, 64
        %v1658 = vpop.permute.xlu0 %1657
        %v1661 = vsel %vm902, %v1656, 0.0
        %1662 = vadd.xlane.f32.xlu0 %v1661
        %v1663 = vpop.xlane.xlu0 %1662
        %v1664 = vsel %vm902, %v1658, 0.0
        %1665 = vadd.xlane.f32.xlu0 %v1664
        %v1666 = vpop.xlane.xlu0 %1665
        %1669 = vrot.lane.b32.xlu0 %v1153, 64
        %v1670 = vpop.permute.xlu0 %1669
        %1671 = vrot.lane.b32.xlu0 %v1154, 64
        %v1672 = vpop.permute.xlu0 %1671
        %v1675 = vsel %vm902, %v1670, 0.0
        %1676 = vadd.xlane.f32.xlu0 %v1675
        %v1677 = vpop.xlane.xlu0 %1676
        %v1678 = vsel %vm902, %v1672, 0.0
        %1679 = vadd.xlane.f32.xlu0 %v1678
        %v1680 = vpop.xlane.xlu0 %1679
        %v1681 = vsel %vm933, %v1635, %v1649
        %v1682 = vsel %vm933, %v1638, %v1652
        %v1683 = vsel %vm936, %v1681, %v1663
        %v1684 = vsel %vm936, %v1682, %v1666
        %v1685 = vsel %vm939, %v1683, %v1677
        %v1686 = vsel %vm939, %v1684, %v1680
        %v1687 = vmul.f32 %v1685, 0.125
        %v1688 = vmul.f32 %v1686, 0.125
        %v1689 = vsel %vm944, %v1687, -inf
        %1690 = vmax.xlane.f32.xlu0 %v1689
        %v1691 = vpop.xlane.xlu0 %1690
        %v1692 = vsel %vm944, %v1688, -inf
        %1693 = vmax.xlane.f32.xlu0 %v1692
        %v1694 = vpop.xlane.xlu0 %1693
        %v1695 = vsub.f32 %v1687, %v1691
        %v1696 = vsub.f32 %v1688, %v1694
        %v1697 = vmul.f32 %v1695, 1.442695
        %v1698 = vpow.pop %v1697
        %v1699 = vmul.f32 %v1696, 1.442695
        %v1700 = vpow.pop %v1699
        %v1701 = vsel %vm944, %v1698, 0.0
        %1702 = vadd.xlane.f32.xlu0 %v1701
        %v1703 = vpop.xlane.xlu0 %1702
        %v1704 = vsel %vm944, %v1700, 0.0
        %1705 = vadd.xlane.f32.xlu0 %v1704
        %v1706 = vpop.xlane.xlu0 %1705
        %v1707 = vrcp.pop %v1703
        %v1708 = vrcp.pop %v1706
        %v1709 = vmul.f32 %v1698, %v1707
        %v1710 = vmul.f32 %v1700, %v1708
        %1712 = vset.pattern.permute.xlu0 0
        %1713 = vperm.xlu0 %1712, %v1709
        %v1714 = vpop.permute.xlu0 %1713
        %1717 = vset.pattern.permute.xlu0 0
        %1718 = vperm.xlu0 %1717, %v1710
        %v1719 = vpop.permute.xlu0 %1718
        %v1721 = vmul.f32 %v1714, %v814
        %v1722 = vmul.f32 %v1719, %v818
        %1723 = vset.pattern.permute.xlu0 1
        %1724 = vperm.xlu0 %1723, %v1709
        %v1725 = vpop.permute.xlu0 %1724
        %1727 = vset.pattern.permute.xlu0 1
        %1728 = vperm.xlu0 %1727, %v1710
        %v1729 = vpop.permute.xlu0 %1728
        %v1731 = vmul.f32 %v1725, %v824
        %v1732 = vmul.f32 %v1729, %v828
        %v1733 = vadd.f32 %v1721, %v1731
        %v1734 = vadd.f32 %v1722, %v1732
        %1735 = vset.pattern.permute.xlu0 2
        %1736 = vperm.xlu0 %1735, %v1709
        %v1737 = vpop.permute.xlu0 %1736
        %1739 = vset.pattern.permute.xlu0 2
        %1740 = vperm.xlu0 %1739, %v1710
        %v1741 = vpop.permute.xlu0 %1740
        %v1743 = vmul.f32 %v1737, %v834
        %v1744 = vmul.f32 %v1741, %v838
        %v1745 = vadd.f32 %v1733, %v1743
        %v1746 = vadd.f32 %v1734, %v1744
        %1747 = vset.pattern.permute.xlu0 3
        %1748 = vperm.xlu0 %1747, %v1709
        %v1749 = vpop.permute.xlu0 %1748
        %1751 = vset.pattern.permute.xlu0 3
        %1752 = vperm.xlu0 %1751, %v1710
        %v1753 = vpop.permute.xlu0 %1752
        %v1755 = vmul.f32 %v1749, %v844
        %v1756 = vmul.f32 %v1753, %v848
        %v1757 = vadd.f32 %v1745, %v1755
        %v1758 = vadd.f32 %v1746, %v1756
        %v1759 = vmul.f32 %v1757, %v893
        %v1760 = vmul.f32 %v1758, %v895
        %1763 = vrot.lane.b32.xlu0 %v1241, 64
        %v1764 = vpop.permute.xlu0 %1763
        %1765 = vrot.lane.b32.xlu0 %v1242, 64
        %v1766 = vpop.permute.xlu0 %1765
        %v1769 = vsel %vm902, %v1764, 0.0
        %1770 = vadd.xlane.f32.xlu0 %v1769
        %v1771 = vpop.xlane.xlu0 %1770
        %v1772 = vsel %vm902, %v1766, 0.0
        %1773 = vadd.xlane.f32.xlu0 %v1772
        %v1774 = vpop.xlane.xlu0 %1773
        %1777 = vrot.lane.b32.xlu0 %v1249, 64
        %v1778 = vpop.permute.xlu0 %1777
        %1779 = vrot.lane.b32.xlu0 %v1250, 64
        %v1780 = vpop.permute.xlu0 %1779
        %v1783 = vsel %vm902, %v1778, 0.0
        %1784 = vadd.xlane.f32.xlu0 %v1783
        %v1785 = vpop.xlane.xlu0 %1784
        %v1786 = vsel %vm902, %v1780, 0.0
        %1787 = vadd.xlane.f32.xlu0 %v1786
        %v1788 = vpop.xlane.xlu0 %1787
        %1791 = vrot.lane.b32.xlu0 %v1257, 64
        %v1792 = vpop.permute.xlu0 %1791
        %1793 = vrot.lane.b32.xlu0 %v1258, 64
        %v1794 = vpop.permute.xlu0 %1793
        %v1797 = vsel %vm902, %v1792, 0.0
        %1798 = vadd.xlane.f32.xlu0 %v1797
        %v1799 = vpop.xlane.xlu0 %1798
        %v1800 = vsel %vm902, %v1794, 0.0
        %1801 = vadd.xlane.f32.xlu0 %v1800
        %v1802 = vpop.xlane.xlu0 %1801
        %1805 = vrot.lane.b32.xlu0 %v1265, 64
        %v1806 = vpop.permute.xlu0 %1805
        %1807 = vrot.lane.b32.xlu0 %v1266, 64
        %v1808 = vpop.permute.xlu0 %1807
        %v1811 = vsel %vm902, %v1806, 0.0
        %1812 = vadd.xlane.f32.xlu0 %v1811
        %v1813 = vpop.xlane.xlu0 %1812
        %v1814 = vsel %vm902, %v1808, 0.0
        %1815 = vadd.xlane.f32.xlu0 %v1814
        %v1816 = vpop.xlane.xlu0 %1815
        %v1817 = vsel %vm933, %v1771, %v1785
        %v1818 = vsel %vm933, %v1774, %v1788
        %v1819 = vsel %vm936, %v1817, %v1799
        %v1820 = vsel %vm936, %v1818, %v1802
        %v1821 = vsel %vm939, %v1819, %v1813
        %v1822 = vsel %vm939, %v1820, %v1816
        %v1823 = vmul.f32 %v1821, 0.125
        %v1824 = vmul.f32 %v1822, 0.125
        %v1825 = vsel %vm944, %v1823, -inf
        %1826 = vmax.xlane.f32.xlu0 %v1825
        %v1827 = vpop.xlane.xlu0 %1826
        %v1828 = vsel %vm944, %v1824, -inf
        %1829 = vmax.xlane.f32.xlu0 %v1828
        %v1830 = vpop.xlane.xlu0 %1829
        %v1831 = vsub.f32 %v1823, %v1827
        %v1832 = vsub.f32 %v1824, %v1830
        %v1833 = vmul.f32 %v1831, 1.442695
        %v1834 = vpow.pop %v1833
        %v1835 = vmul.f32 %v1832, 1.442695
        %v1836 = vpow.pop %v1835
        %v1837 = vsel %vm944, %v1834, 0.0
        %1838 = vadd.xlane.f32.xlu0 %v1837
        %v1839 = vpop.xlane.xlu0 %1838
        %v1840 = vsel %vm944, %v1836, 0.0
        %1841 = vadd.xlane.f32.xlu0 %v1840
        %v1842 = vpop.xlane.xlu0 %1841
        %v1843 = vrcp.pop %v1839
        %v1844 = vrcp.pop %v1842
        %v1845 = vmul.f32 %v1834, %v1843
        %v1846 = vmul.f32 %v1836, %v1844
        %1848 = vset.pattern.permute.xlu0 0
        %1849 = vperm.xlu0 %1848, %v1845
        %v1850 = vpop.permute.xlu0 %1849
        %1853 = vset.pattern.permute.xlu0 0
        %1854 = vperm.xlu0 %1853, %v1846
        %v1855 = vpop.permute.xlu0 %1854
        %v1857 = vmul.f32 %v1850, %v814
        %v1858 = vmul.f32 %v1855, %v818
        %1859 = vset.pattern.permute.xlu0 1
        %1860 = vperm.xlu0 %1859, %v1845
        %v1861 = vpop.permute.xlu0 %1860
        %1863 = vset.pattern.permute.xlu0 1
        %1864 = vperm.xlu0 %1863, %v1846
        %v1865 = vpop.permute.xlu0 %1864
        %v1867 = vmul.f32 %v1861, %v824
        %v1868 = vmul.f32 %v1865, %v828
        %v1869 = vadd.f32 %v1857, %v1867
        %v1870 = vadd.f32 %v1858, %v1868
        %1871 = vset.pattern.permute.xlu0 2
        %1872 = vperm.xlu0 %1871, %v1845
        %v1873 = vpop.permute.xlu0 %1872
        %1875 = vset.pattern.permute.xlu0 2
        %1876 = vperm.xlu0 %1875, %v1846
        %v1877 = vpop.permute.xlu0 %1876
        %v1879 = vmul.f32 %v1873, %v834
        %v1880 = vmul.f32 %v1877, %v838
        %v1881 = vadd.f32 %v1869, %v1879
        %v1882 = vadd.f32 %v1870, %v1880
        %1883 = vset.pattern.permute.xlu0 3
        %1884 = vperm.xlu0 %1883, %v1845
        %v1885 = vpop.permute.xlu0 %1884
        %1887 = vset.pattern.permute.xlu0 3
        %1888 = vperm.xlu0 %1887, %v1846
        %v1889 = vpop.permute.xlu0 %1888
        %v1891 = vmul.f32 %v1885, %v844
        %v1892 = vmul.f32 %v1889, %v848
        %v1893 = vadd.f32 %v1881, %v1891
        %v1894 = vadd.f32 %v1882, %v1892
        %v1895 = vmul.f32 %v1893, %v897
        %v1896 = vmul.f32 %v1894, %v899
        %v1897 = vsel %vm902, %v1015, %v1487
        %v1898 = vsel %vm902, %v1016, %v1488
        %v1899 = vsel %vm902, %v1127, %v1623
        %v1900 = vsel %vm902, %v1128, %v1624
        %v1901 = vsel %vm902, %v1239, %v1759
        %v1902 = vsel %vm902, %v1240, %v1760
        %v1903 = vsel %vm902, %v1351, %v1895
        %v1904 = vsel %vm902, %v1352, %v1896
        %v1905 = vpack.c.bf16 %v1898, %v1897
        %v1906 = vpack.c.bf16 %v1900, %v1899
        %v1907 = vpack.c.bf16 %v1902, %v1901
        %v1908 = vpack.c.bf16 %v1904, %v1903
        %v1909 = vld [vmem:[#allocation11] sm:$0xf]
        %v1910 = vld [vmem:[#allocation11 + $0x4] sm:$0xf]
        %v1911 = vld [vmem:[#allocation11 + $0x8] sm:$0xf]
        %v1912 = vld [vmem:[#allocation11 + $0xc] sm:$0xf]
        %v1913 = vld [vmem:[#allocation11 + $0x10] sm:$0xf]
        %v1914 = vld [vmem:[#allocation11 + $0x14] sm:$0xf]
        %v1915 = vld [vmem:[#allocation11 + $0x18] sm:$0xf]
        %v1916 = vld [vmem:[#allocation11 + $0x1c] sm:$0xf]
        %v1917 = vld [vmem:[#allocation11 + $0x20] sm:$0xf]
        %v1918 = vld [vmem:[#allocation11 + $0x24] sm:$0xf]
        %v1919 = vld [vmem:[#allocation11 + $0x28] sm:$0xf]
        %v1920 = vld [vmem:[#allocation11 + $0x2c] sm:$0xf]
        %v1921 = vld [vmem:[#allocation11 + $0x30] sm:$0xf]
        %v1922 = vld [vmem:[#allocation11 + $0x34] sm:$0xf]
        %v1923 = vld [vmem:[#allocation11 + $0x38] sm:$0xf]
        %v1924 = vld [vmem:[#allocation11 + $0x3c] sm:$0xf]
        %v1925 = vld [vmem:[#allocation13] sm:$0x1]
        %v1927 = vlaneseq
        %v1928 = vshrl.u32 %v1927, 7
        %v1929 = vsub.s32 0, %v1928
        %v1930 = vrot.slane %v1925, %v1929
        %v1948 = vunpack.c.l.b16 %v1909
        %v1949 = vunpack.c.l.b16 %v1910
        %v1950 = vunpack.c.l.b16 %v1911
        %v1951 = vunpack.c.l.b16 %v1912
        %v1952 = vunpack.c.l.b16 %v1913
        %v1953 = vunpack.c.l.b16 %v1914
        %v1954 = vunpack.c.l.b16 %v1915
        %v1955 = vunpack.c.l.b16 %v1916
        %v1956 = vunpack.c.l.b16 %v1917
        %v1957 = vunpack.c.l.b16 %v1918
        %v1958 = vunpack.c.l.b16 %v1919
        %v1959 = vunpack.c.l.b16 %v1920
        %v1960 = vunpack.c.l.b16 %v1921
        %v1961 = vunpack.c.l.b16 %v1922
        %v1962 = vunpack.c.l.b16 %v1923
        %v1963 = vunpack.c.l.b16 %v1924
        %v1964 = vpack.c.b16 %v1949, %v1948
        %v1965 = vpack.c.b16 %v1951, %v1950
        %v1966 = vpack.c.b16 %v1953, %v1952
        %v1967 = vpack.c.b16 %v1955, %v1954
        %v1968 = vpack.c.b16 %v1957, %v1956
        %v1969 = vpack.c.b16 %v1959, %v1958
        %v1970 = vpack.c.b16 %v1961, %v1960
        %v1971 = vpack.c.b16 %v1963, %v1962
        %1980 = vmatprep.subr.bf16.mxu0 0
        %1981 = vmatpush1.bf16.msra.mxu0 %v1964
        %1982 = vmatprep.subr.bf16.mxu0 0
        %1983 = vmatpush1.bf16.msra.mxu0 %v1965
        %1984 = vmatprep.subr.bf16.mxu0 0
        %1985 = vmatpush1.bf16.msra.mxu0 %v1966
        %1986 = vmatprep.subr.bf16.mxu0 0
        %1987 = vmatpush1.bf16.msra.mxu0 %v1967
        %1988 = vmatprep.subr.bf16.mxu0 0
        %1989 = vmatpush1.bf16.msra.mxu0 %v1968
        %1990 = vmatprep.subr.bf16.mxu0 0
        %1991 = vmatpush1.bf16.msra.mxu0 %v1969
        %1992 = vmatprep.subr.bf16.mxu0 0
        %1993 = vmatpush1.bf16.msra.mxu0 %v1970
        %1994 = vmatprep.subr.bf16.mxu0 0
        %1995 = vmatpush1.bf16.msra.mxu0 %v1971
        %1996 = vmatprep.subr.bf16.mxu0 0
        %1997 = vmatpush1.bf16.msra.mxu0 0
        %1998 = vmatprep.subr.bf16.mxu0 0
        %1999 = vmatpush1.bf16.msra.mxu0 0
        %2000 = vmatprep.subr.bf16.mxu0 0
        %2001 = vmatpush1.bf16.msra.mxu0 0
        %2002 = vmatprep.subr.bf16.mxu0 0
        %2003 = vmatpush1.bf16.msra.mxu0 0
        %2004 = vmatprep.subr.bf16.mxu0 0
        %2005 = vmatpush1.bf16.msra.mxu0 0
        %2006 = vmatprep.subr.bf16.mxu0 0
        %2007 = vmatpush1.bf16.msra.mxu0 0
        %2008 = vmatprep.subr.bf16.mxu0 0
        %2009 = vmatpush1.bf16.msra.mxu0 0
        %2010 = vmatprep.subr.bf16.mxu0 0
        %2011 = vmatpush1.bf16.msra.mxu0 0
        %2012 = vmatprep.mubr.bf16.mxu0 0
        %2013 = vmatmul.mubr.bf16.gmra.mrb[0].mxu0 %v1905
        %v2014 = vpop.f32.mrb[0].mxu0
        %v2015 = vadd.f32 %v1930, %v2014
        %v2016 = vpop.f32.mrb[0].mxu0
        %v2017 = vpop.f32.mrb[0].mxu0
        %v2018 = vadd.f32 %v1930, %v2017
        %v2019 = vpop.f32.mrb[0].mxu0
        %2020 = vmatprep.mubr.bf16.mxu0 0
        %2021 = vmatmul.mubr.bf16.gmra.mrb[0].mxu0 %v1906
        %v2022 = vpop.f32.mrb[0].mxu0
        %v2023 = vadd.f32 %v1930, %v2022
        %v2024 = vpop.f32.mrb[0].mxu0
        %v2025 = vpop.f32.mrb[0].mxu0
        %v2026 = vadd.f32 %v1930, %v2025
        %v2027 = vpop.f32.mrb[0].mxu0
        %2028 = vmatprep.mubr.bf16.mxu0 0
        %2029 = vmatmul.mubr.bf16.gmra.mrb[0].mxu0 %v1907
        %v2030 = vpop.f32.mrb[0].mxu0
        %v2031 = vadd.f32 %v1930, %v2030
        %v2032 = vpop.f32.mrb[0].mxu0
        %v2033 = vpop.f32.mrb[0].mxu0
        %v2034 = vadd.f32 %v1930, %v2033
        %v2035 = vpop.f32.mrb[0].mxu0
        %2036 = vmatprep.mubr.bf16.mxu0 0
        %2037 = vmatmul.mubr.bf16.gmra.mrb[0].mxu0 %v1908
        %v2038 = vpop.f32.mrb[0].mxu0
        %v2039 = vadd.f32 %v1930, %v2038
        %v2040 = vpop.f32.mrb[0].mxu0
        %v2041 = vpop.f32.mrb[0].mxu0
        %v2042 = vadd.f32 %v1930, %v2041
        %v2043 = vpop.f32.mrb[0].mxu0
        %2044 = vdwg.mxu0
        %v2045 = vadd.f32 %v612, %v2015
        %v2046 = vadd.f32 %v613, %v2018
        %v2047 = vadd.f32 %v614, %v2023
        %v2048 = vadd.f32 %v615, %v2026
        %v2049 = vadd.f32 %v616, %v2031
        %v2050 = vadd.f32 %v617, %v2034
        %v2051 = vadd.f32 %v618, %v2039
        %v2052 = vadd.f32 %v619, %v2042
        %v2053 = vld [vmem:[#allocation14] sm:$0x1]
        %v2054 = vld [vmem:[#allocation16] sm:$0x1]
        %v2055 = vsel %vm486, %v2045, 0.0
        %2056 = vadd.xlane.f32.xlu0 %v2055
        %v2057 = vpop.xlane.xlu0 %2056
        %v2058 = vsel %vm486, %v2046, 0.0
        %2059 = vadd.xlane.f32.xlu0 %v2058
        %v2060 = vpop.xlane.xlu0 %2059
        %v2061 = vsel %vm486, %v2047, 0.0
        %2062 = vadd.xlane.f32.xlu0 %v2061
        %v2063 = vpop.xlane.xlu0 %2062
        %v2064 = vsel %vm486, %v2048, 0.0
        %2065 = vadd.xlane.f32.xlu0 %v2064
        %v2066 = vpop.xlane.xlu0 %2065
        %v2067 = vsel %vm486, %v2049, 0.0
        %2068 = vadd.xlane.f32.xlu0 %v2067
        %v2069 = vpop.xlane.xlu0 %2068
        %v2070 = vsel %vm486, %v2050, 0.0
        %2071 = vadd.xlane.f32.xlu0 %v2070
        %v2072 = vpop.xlane.xlu0 %2071
        %v2073 = vsel %vm486, %v2051, 0.0
        %2074 = vadd.xlane.f32.xlu0 %v2073
        %v2075 = vpop.xlane.xlu0 %2074
        %v2076 = vsel %vm486, %v2052, 0.0
        %2077 = vadd.xlane.f32.xlu0 %v2076
        %v2078 = vpop.xlane.xlu0 %2077
        %v2079 = vmul.f32 %v2057, %v511
        %v2080 = vmul.f32 %v2060, %v511
        %v2081 = vmul.f32 %v2063, %v511
        %v2082 = vmul.f32 %v2066, %v511
        %v2083 = vmul.f32 %v2069, %v511
        %v2084 = vmul.f32 %v2072, %v511
        %v2085 = vmul.f32 %v2075, %v511
        %v2086 = vmul.f32 %v2078, %v511
        %v2087 = vsub.f32 %v2045, %v2079
        %v2088 = vsub.f32 %v2046, %v2080
        %v2089 = vsub.f32 %v2047, %v2081
        %v2090 = vsub.f32 %v2048, %v2082
        %v2091 = vsub.f32 %v2049, %v2083
        %v2092 = vsub.f32 %v2050, %v2084
        %v2093 = vsub.f32 %v2051, %v2085
        %v2094 = vsub.f32 %v2052, %v2086
        %v2095 = vmul.f32 %v2087, %v2087
        %v2096 = vmul.f32 %v2088, %v2088
        %v2097 = vmul.f32 %v2089, %v2089
        %v2098 = vmul.f32 %v2090, %v2090
        %v2099 = vmul.f32 %v2091, %v2091
        %v2100 = vmul.f32 %v2092, %v2092
        %v2101 = vmul.f32 %v2093, %v2093
        %v2102 = vmul.f32 %v2094, %v2094
        %v2103 = vsel %vm486, %v2095, 0.0
        %2104 = vadd.xlane.f32.xlu0 %v2103
        %v2105 = vpop.xlane.xlu0 %2104
        %v2106 = vsel %vm486, %v2096, 0.0
        %2107 = vadd.xlane.f32.xlu0 %v2106
        %v2108 = vpop.xlane.xlu0 %2107
        %v2109 = vsel %vm486, %v2097, 0.0
        %2110 = vadd.xlane.f32.xlu0 %v2109
        %v2111 = vpop.xlane.xlu0 %2110
        %v2112 = vsel %vm486, %v2098, 0.0
        %2113 = vadd.xlane.f32.xlu0 %v2112
        %v2114 = vpop.xlane.xlu0 %2113
        %v2115 = vsel %vm486, %v2099, 0.0
        %2116 = vadd.xlane.f32.xlu0 %v2115
        %v2117 = vpop.xlane.xlu0 %2116
        %v2118 = vsel %vm486, %v2100, 0.0
        %2119 = vadd.xlane.f32.xlu0 %v2118
        %v2120 = vpop.xlane.xlu0 %2119
        %v2121 = vsel %vm486, %v2101, 0.0
        %2122 = vadd.xlane.f32.xlu0 %v2121
        %v2123 = vpop.xlane.xlu0 %2122
        %v2124 = vsel %vm486, %v2102, 0.0
        %2125 = vadd.xlane.f32.xlu0 %v2124
        %v2126 = vpop.xlane.xlu0 %2125
        %v2127 = vmul.f32 %v2105, %v511
        %v2128 = vmul.f32 %v2108, %v511
        %v2129 = vmul.f32 %v2111, %v511
        %v2130 = vmul.f32 %v2114, %v511
        %v2131 = vmul.f32 %v2117, %v511
        %v2132 = vmul.f32 %v2120, %v511
        %v2133 = vmul.f32 %v2123, %v511
        %v2134 = vmul.f32 %v2126, %v511
        %v2135 = vadd.f32 %v2127, 1e-05
        %v2136 = vadd.f32 %v2128, 1e-05
        %v2137 = vadd.f32 %v2129, 1e-05
        %v2138 = vadd.f32 %v2130, 1e-05
        %v2139 = vadd.f32 %v2131, 1e-05
        %v2140 = vadd.f32 %v2132, 1e-05
        %v2141 = vadd.f32 %v2133, 1e-05
        %v2142 = vadd.f32 %v2134, 1e-05
        %v2143 = vrsqrt.pop %v2135
        %v2144 = vrsqrt.pop %v2136
        %v2145 = vrsqrt.pop %v2137
        %v2146 = vrsqrt.pop %v2138
        %v2147 = vrsqrt.pop %v2139
        %v2148 = vrsqrt.pop %v2140
        %v2149 = vrsqrt.pop %v2141
        %v2150 = vrsqrt.pop %v2142
        %v2151 = vmul.f32 %v2087, %v2143
        %v2152 = vmul.f32 %v2088, %v2144
        %v2153 = vmul.f32 %v2089, %v2145
        %v2154 = vmul.f32 %v2090, %v2146
        %v2155 = vmul.f32 %v2091, %v2147
        %v2156 = vmul.f32 %v2092, %v2148
        %v2157 = vmul.f32 %v2093, %v2149
        %v2158 = vmul.f32 %v2094, %v2150
        %v2160 = vlaneseq
        %v2161 = vshrl.u32 %v2160, 7
        %v2162 = vsub.s32 0, %v2161
        %v2163 = vrot.slane %v2053, %v2162
        %v2165 = vmul.f32 %v2151, %v2163
        %v2166 = vmul.f32 %v2152, %v2163
        %v2167 = vmul.f32 %v2153, %v2163
        %v2168 = vmul.f32 %v2154, %v2163
        %v2169 = vmul.f32 %v2155, %v2163
        %v2170 = vmul.f32 %v2156, %v2163
        %v2171 = vmul.f32 %v2157, %v2163
        %v2172 = vmul.f32 %v2158, %v2163
        %v2174 = vlaneseq
        %v2175 = vshrl.u32 %v2174, 7
        %v2176 = vsub.s32 0, %v2175
        %v2177 = vrot.slane %v2054, %v2176
        %v2179 = vadd.f32 %v2165, %v2177
        %v2180 = vadd.f32 %v2166, %v2177
        %v2181 = vadd.f32 %v2167, %v2177
        %v2182 = vadd.f32 %v2168, %v2177
        %v2183 = vadd.f32 %v2169, %v2177
        %v2184 = vadd.f32 %v2170, %v2177
        %v2185 = vadd.f32 %v2171, %v2177
        %v2186 = vadd.f32 %v2172, %v2177
        %v2187 = vadd.f32 %v476, %v2179
        %v2188 = vadd.f32 %v477, %v2180
        %v2189 = vadd.f32 %v478, %v2181
        %v2190 = vadd.f32 %v479, %v2182
        %v2191 = vadd.f32 %v480, %v2183
        %v2192 = vadd.f32 %v481, %v2184
        %v2193 = vadd.f32 %v482, %v2185
        %v2194 = vadd.f32 %v483, %v2186
        %2195 = vst.msk [vmem:[%s472] sm:$0xff] %vm486, %v2187
        %2196 = vst.msk [vmem:[%s472 + $0x8] sm:$0xff] %vm486, %v2188
        %2197 = vst.msk [vmem:[%s472 + $0x10] sm:$0xff] %vm486, %v2189
        %2198 = vst.msk [vmem:[%s472 + $0x18] sm:$0xff] %vm486, %v2190
        %2199 = vst.msk [vmem:[%s472 + $0x20] sm:$0xff] %vm486, %v2191
        %2200 = vst.msk [vmem:[%s472 + $0x28] sm:$0xff] %vm486, %v2192
        %2201 = vst.msk [vmem:[%s472 + $0x30] sm:$0xff] %vm486, %v2193
        %2202 = vst.msk [vmem:[%s472 + $0x38] sm:$0xff] %vm486, %v2194
        %s2203 = sand.u32 %s248, 1
        %s2204 = scalar_lea.sflag [#allocation4], %s2203
        %s2205 = sand.u32 %s248, 1
        %s2206 = smul.addr %s2205, 64
        %s2207 = scalar_lea.vmem [#allocation17], %s2206
        // Predicated region
        $region93: #{ptsapt_forward.6} parent=55 // pred_check
          %p2208 = pneg %p258
        $region94: #{ptsapt_forward.6} parent=55 // pred_check_branch
          %2210 = sbr.rel (%p2208) target = $region96
        $region95: #{ptsapt_forward.6} parent=55 // pred_region
          %s2211 = smul.u32 2, %s35
          %s2213 = ssub.s32 1024, 1024
          %2214 = vsyncadd %s2204, %s2213
          %s2215 = smul.addr %s34, 8
          %s2216 = sadd.s32 %s2211, %s2215
          %s2217 = smul.addr %s2216, 128
          %s2218 = scalar_lea.hbm %s9, %s2217
          %s2219 = sshll.u32 %s2207, 4
          %s2220 = int_to_ptr.vmem [resolvable:$true] %s2219
          %2225 = dma.vmem_to_hbm [thread:$0]  %s2220, 1024, %s2218, %s2204, 128, 128, 8
        $region96: #{ptsapt_forward.6} parent=55 // pred_fallthru
          _
      $region56: #{ptsapt_forward.6} parent=5 // pred_fallthru
        _
      %p2226 = scmp.le.s32.totalorder 2, %s25
      // Predicated region
      $region97: #{ptsapt_forward.6} parent=5 // pred_check
        %p2227 = pneg %p2226
      $region98: #{ptsapt_forward.6} parent=5 // pred_check_branch
        %2229 = sbr.rel (%p2227) target = $region100
      $region99: #{ptsapt_forward.6} parent=5 // pred_region
        %s2230 = ssub.s32 %s25, 2
        // Predicated region
        $region101: #{ptsapt_forward.6} parent=99 // pred_check
          %p2231 = pneg %p264
        $region102: #{ptsapt_forward.6} parent=99 // pred_check_branch
          %2233 = sbr.rel (%p2231) target = $region104
        $region103: #{ptsapt_forward.6} parent=99 // pred_region
          %s2234 = sand.u32 %s249, 1
          %s2235 = scalar_lea.sflag [#allocation4], %s2234
          %s2236 = sand.u32 %s249, 1
          %s2237 = smul.addr %s2236, 64
          %s2238 = scalar_lea.vmem [#allocation17], %s2237
          %2239 = dma.done %s2235, 1024
        $region104: #{ptsapt_forward.6} parent=99 // pred_fallthru
          _
      $region100: #{ptsapt_forward.6} parent=5 // pred_fallthru
        _
    $region6: #{ptsapt_forward.6} parent=1 // loop_footer
      %s29 = sadd.s32 1, %s25
    $region7: #{ptsapt_forward.6} parent=1 // loop_footer_branch
      %24 = sbr.rel target = $region3
    $region8: #{ptsapt_forward.6} parent=1 // loop_exit
      _
    %2240 = vsyncpa [#allocation3], 1
    %s2241 = scalar_lea.sflag [#allocation3], 1
    %2242 = vsyncpa %s2241, 1
    %2243 = vsyncpa [#allocation6], 1
    %2244 = vsyncpa [#allocation9], 1
    %2245 = vsyncpa [#allocation12], 1
    %2246 = vsyncpa [#allocation15], 1
    %2247 = vsyncpa [#allocation4], 1
    %s2248 = scalar_lea.sflag [#allocation4], 1
    %2249 = vsyncpa %s2248, 1

</llo_original>
